<compile_context>
chip_gen: v7x
topology: tpu7x:2x2x1
jax: 0.10.0
libtpu: 0.0.40
codegen_flags: <defaults>
</compile_context>

<pallas_src>
import functools

import jax
import jax.numpy as jnp
from jax.experimental import pallas as pl
from jax.experimental.pallas import tpu as pltpu


def _convnet_kernel(*refs, nb, layer_cfgs, marg, Hp, Wp):
    """All conv+ReLU layers for `nb` images, one grid step, channel-major.

    refs layout:
      refs[0]        x_ref   (1, C0, marg + nb*Hp*Wp + marg)  bf16, zero-padded
      refs[1]        m_ref   (1, nb*Hp*Wp)  f32 interior mask (1 = real output)
      refs[2 + 2i]   w_ref_i (k*k, Cout_i, Cin_i)  bf16, tap-major
      refs[3 + 2i]   b_ref_i (Cout_i, 1)  f32
      refs[2 + 2n]   o_ref   (nb, Cout_last, Ho*Wo)
    layer_cfgs[i] = (k, pad, Cin, Cout) -- static Python ints.  All layers
    share the same (Hp, Wp) padded frame (same-conv, uniform padding;
    asserted by the wrapper).
    """
    n = len(layer_cfgs)
    x_ref, m_ref = refs[0], refs[1]
    w_refs = [refs[2 + 2 * i] for i in range(n)]
    b_refs = [refs[3 + 2 * i] for i in range(n)]
    o_ref = refs[2 + 2 * n]

    nimg = Hp * Wp
    nblk = nb * nimg
    mask = m_ref[...] != 0.0                       # (1, nblk) bool
    h = x_ref[0]                                   # (C0, marg + nblk + marg) bf16

    for li, (k, pad, cin, cout) in enumerate(layer_cfgs):
        last = li == n - 1
        bias = b_refs[li][...]                     # (cout, 1) f32

        # Sum over the k*k taps: (cout, cin) @ (cin, nblk), bf16 operands,
        # f32 accumulation.  A tap is the activation lane-shifted by
        # (kh-pad)*Wp + (kw-pad); interior output columns never read the
        # margins (|shift| <= marg), and halo columns are masked below.
        acc = jnp.zeros((cout, nblk), jnp.float32)
        for kh in range(k):
            for kw in range(k):
                s = (kh - pad) * Wp + (kw - pad)
                tap = h[:, marg + s: marg + s + nblk]          # (cin, nblk)
                acc = acc + jnp.dot(w_refs[li][kh * k + kw], tap,
                                    preferred_element_type=jnp.float32)

        act = jnp.maximum(acc + bias, 0.0)                     # bias + ReLU (f32)

        if not last:
            # Zero the halo columns so they act as the next layer's zero
            # padding, re-attach the lane margins, cast to bf16 (MXU feed).
            act = jnp.where(mask, act, 0.0).astype(h.dtype)
            if marg > 0:
                zm = jnp.zeros((cout, marg), h.dtype)
                h = jnp.concatenate([zm, act, zm], axis=1)
            else:
                h = act
        else:
            # NCHW-native store: for each image / output row, the interior
            # columns of the padded frame form a contiguous (cout, Wo) slab.
            ho_n = Hp - k + 1
            wo_n = Wp - k + 1
            for ib in range(nb):                   # nb is a small static int
                for ho in range(ho_n):
                    c0 = ib * nimg + (ho + pad) * Wp + pad
                    o_ref[ib, :, ho * wo_n:(ho + 1) * wo_n] = (
                        act[:, c0:c0 + wo_n].astype(o_ref.dtype))


def _pick_batch_blocks(batch):
    """grid=(B,) only on v7x (2 TensorCores per chip); one step elsewhere."""
    try:
        kind = jax.devices()[0].device_kind.lower().replace(" ", "")
    except Exception:
        return 1
    return batch if ("v7" in kind or "tpu7" in kind) else 1


def conv2d_model_forward(x_nchw, params, batch_blocks=None):
    """Equivalent of Conv2dModel.forward for the stride-1 / no-maxpool /
    no-dropout configuration: repeated (Conv2d -> ReLU), fused in one kernel.

    params: list of (w_oihw, b, stride, padding) per layer.
    """
    B, C0, H, W = x_nchw.shape
    n = len(params)
    assert n >= 1

    # ---- validate the supported configuration, repack weights (static) ----
    cfgs, ws, bs = [], [], []
    cin = C0
    for (w_oihw, b, stride, pad) in params:
        cout, cin_w, kh_, kw_ = w_oihw.shape
        assert cin_w == cin and kh_ == kw_, "square kernels only"
        # TODO(synk): stride > 1, MaxPool2d and Dropout branches of the module
        #             are not implemented (not exercised by this config).
        assert stride == 1, "stride > 1 not implemented"
        assert kh_ == 2 * pad + 1, "only 'same' convs (k == 2*pad + 1) supported"
        cfgs.append((kh_, pad, cin, cout))
        # tap-major (kh*kw, Cout, Cin), bf16 for the MXU
        ws.append(jnp.transpose(w_oihw, (2, 3, 0, 1))
                  .reshape(kh_ * kw_, cout, cin).astype(jnp.bfloat16))
        bs.append(b.reshape(cout, 1).astype(jnp.float32))
        cin = cout
    assert len({c[0] for c in cfgs}) == 1 and len({c[1] for c in cfgs}) == 1, (
        "all layers must share kernel size / padding (uniform padded frame)")
    k, pad = cfgs[0][0], cfgs[0][1]
    c_f = cfgs[-1][3]
    Hp, Wp = H + 2 * pad, W + 2 * pad
    nimg = Hp * Wp
    marg = pad * (Wp + 1)                          # max |tap shift|

    G = batch_blocks if batch_blocks is not None else _pick_batch_blocks(B)
    assert B % G == 0
    nb = B // G
    nblk = nb * nimg

    # ---- tiny XLA-side layout glue (a few KiB): channel-major padded input --
    xp = jnp.pad(x_nchw, ((0, 0), (0, 0), (pad, pad), (pad, pad)))
    xp = (xp.reshape(G, nb, C0, nimg).transpose(0, 2, 1, 3)
            .reshape(G, C0, nblk))
    xp = jnp.pad(xp, ((0, 0), (0, 0), (marg, marg))).astype(jnp.bfloat16)

    # Interior mask of the padded frame (1 = real conv-output position).
    q = jnp.arange(nimg)
    ri, ci = q // Wp, q % Wp
    m_img = ((ri >= pad) & (ri < pad + H) & (ci >= pad) & (ci < pad + W))
    mask = jnp.tile(m_img.astype(jnp.float32), nb)[None, :]        # (1, nblk)

    operands = [xp, mask]
    in_specs = [pl.BlockSpec((1, C0, marg + nblk + marg), lambda g: (g, 0, 0)),
                pl.BlockSpec((1, nblk), lambda g: (0, 0))]
    for wl, bl in zip(ws, bs):
        operands += [wl, bl]
        in_specs += [pl.BlockSpec(wl.shape, lambda g: (0, 0, 0)),
                     pl.BlockSpec(bl.shape, lambda g: (0, 0))]

    flops = sum(2 * B * H * W * kk * kk * ci * co for (kk, _, ci, co) in cfgs)
    bytes_acc = (4 * B * C0 * H * W + 4 * B * c_f * H * W
                 + sum(int(wl.size) * 2 + int(bl.size) * 4
                       for wl, bl in zip(ws, bs)))

    kernel = functools.partial(_convnet_kernel, nb=nb, layer_cfgs=tuple(cfgs),
                               marg=marg, Hp=Hp, Wp=Wp)

    out = pl.pallas_call(
        kernel,
        out_shape=jax.ShapeDtypeStruct((B, c_f, H * W), x_nchw.dtype),
        grid=(G,),
        in_specs=in_specs,
        out_specs=pl.BlockSpec((nb, c_f, H * W), lambda g: (g, 0, 0)),
        compiler_params=pltpu.CompilerParams(
            dimension_semantics=("parallel",)),
        cost_estimate=pl.CostEstimate(flops=flops, transcendentals=0,
                                      bytes_accessed=bytes_acc),
    )(*operands)

    return out.reshape(B, c_f, H, W)               # free reshape; already NCHW


def _init_conv_params(key, in_channels, channels, kernel_sizes, strides, paddings):
    """Deterministic PyTorch-like init (uniform(-1/sqrt(fan_in), 1/sqrt(fan_in)))."""
    params = []
    ics = [in_channels] + channels[:-1]
    for ic, oc, k, s, pad in zip(ics, channels, kernel_sizes, strides, paddings):
        key, kw_key, kb_key = jax.random.split(key, 3)
        fan_in = ic * k * k
        bound = 1.0 / (float(fan_in) ** 0.5)
        w = jax.random.uniform(kw_key, (oc, ic, k, k), jnp.float32, -bound, bound)
        b = jax.random.uniform(kb_key, (oc,), jnp.float32, -bound, bound)
        params.append((w, b, s, pad))
    return params


def _reference_forward(x_nchw, params):
    """Pure-JAX reference (lax conv) for a sanity check."""
    out = x_nchw
    for (w, b, s, pad) in params:
        out = jax.lax.conv_general_dilated(
            out, w, window_strides=(s, s), padding=[(pad, pad), (pad, pad)],
            dimension_numbers=("NCHW", "OIHW", "NCHW"))
        out = jnp.maximum(out + b[None, :, None, None], 0.0)
    return out


if __name__ == "__main__":
    key = jax.random.PRNGKey(0)
    key, x_key = jax.random.split(key)

    # Small shapes consistent with the module: [B, C, H, W]
    B, C, H, W = 2, 4, 16, 16
    x = jax.random.normal(x_key, (B, C, H, W), dtype=jnp.float32)

    channels = [8, 16]
    kernel_sizes = [3, 3]
    strides = [1, 1]
    paddings = [1, 1]
    params = _init_conv_params(key, C, channels, kernel_sizes, strides, paddings)

    y_ref = jax.block_until_ready(_reference_forward(x, params))

    # Default grid: (1,) on v5e/v6e (single TensorCore), (B,) on v7x.
    fwd = jax.jit(lambda xi: conv2d_model_forward(xi, params))
    y = jax.block_until_ready(fwd(x))
    assert y.shape == (B, channels[-1], H, W), y.shape
    assert jnp.allclose(y, y_ref, rtol=2e-2, atol=2e-2), (
        float(jnp.max(jnp.abs(y - y_ref))))

    # Also validate the batch-parallel grid path (used on v7x) on this chip.
    fwd_bp = jax.jit(lambda xi: conv2d_model_forward(xi, params, batch_blocks=B))
    y_bp = jax.block_until_ready(fwd_bp(x))
    assert jnp.allclose(y_bp, y_ref, rtol=2e-2, atol=2e-2), (
        float(jnp.max(jnp.abs(y_bp - y_ref))))

    print("KERNEL_OK")
</pallas_src>

<mosaic_0001>
module attributes {stable_mosaic.version = 11 : i64} {
  func.func @_convnet_kernel(%arg0: i32, %arg1: memref<1x4x686xbf16, #tpu.memory_space<vmem>>, %arg2: memref<1x648xf32, #tpu.memory_space<vmem>>, %arg3: memref<9x8x4xbf16, #tpu.memory_space<vmem>>, %arg4: memref<8x1xf32, #tpu.memory_space<vmem>>, %arg5: memref<9x16x8xbf16, #tpu.memory_space<vmem>>, %arg6: memref<16x1xf32, #tpu.memory_space<vmem>>, %arg7: memref<2x16x256xf32, #tpu.memory_space<vmem>>) attributes {dimension_semantics = [#tpu.dimension_semantics<parallel>], iteration_bounds = array<i64: 1>, scalar_prefetch = 0 : i64, scratch_operands = 0 : i64, tpu.core_type = #tpu.core_type<tc>, window_params = [{transform_indices = @transform_0, window_bounds = array<i64: 1, 4, 686>}, {pipeline_mode = #tpu.pipeline_mode<synchronous>, transform_indices = @transform_1, window_bounds = array<i64: 1, 648>}, {pipeline_mode = #tpu.pipeline_mode<synchronous>, transform_indices = @transform_2, window_bounds = array<i64: 9, 8, 4>}, {pipeline_mode = #tpu.pipeline_mode<synchronous>, transform_indices = @transform_3, window_bounds = array<i64: 8, 1>}, {pipeline_mode = #tpu.pipeline_mode<synchronous>, transform_indices = @transform_4, window_bounds = array<i64: 9, 16, 8>}, {pipeline_mode = #tpu.pipeline_mode<synchronous>, transform_indices = @transform_5, window_bounds = array<i64: 16, 1>}, {transform_indices = @transform_6, window_bounds = array<i64: 2, 16, 256>}]} {
    %c0 = arith.constant 0 : index
    %c0_0 = arith.constant 0 : index
    %0 = vector.load %arg2[%c0, %c0_0] : memref<1x648xf32, #tpu.memory_space<vmem>>, vector<1x648xf32>
    %cst = arith.constant 0.000000e+00 : f32
    %1 = vector.broadcast %cst : f32 to vector<1x648xf32>
    %2 = arith.cmpf one, %0, %1 : vector<1x648xf32>
    %c0_1 = arith.constant 0 : index
    %c0_2 = arith.constant 0 : index
    %c0_3 = arith.constant 0 : index
    %3 = vector.load %arg1[%c0_1, %c0_2, %c0_3] : memref<1x4x686xbf16, #tpu.memory_space<vmem>>, vector<1x4x686xbf16>
    %4 = vector.shape_cast %3 : vector<1x4x686xbf16> to vector<4x686xbf16>
    %c0_4 = arith.constant 0 : index
    %c0_5 = arith.constant 0 : index
    %5 = vector.load %arg4[%c0_4, %c0_5] : memref<8x1xf32, #tpu.memory_space<vmem>>, vector<8x1xf32>
    %cst_6 = arith.constant 0.000000e+00 : f32
    %6 = vector.broadcast %cst_6 : f32 to vector<8x648xf32>
    %7 = vector.extract_strided_slice %4 {offsets = [0, 0], sizes = [4, 648], strides = [1, 1]} : vector<4x686xbf16> to vector<4x648xbf16>
    %c0_7 = arith.constant 0 : index
    %c0_8 = arith.constant 0 : index
    %c0_9 = arith.constant 0 : index
    %8 = vector.load %arg3[%c0_7, %c0_8, %c0_9] : memref<9x8x4xbf16, #tpu.memory_space<vmem>>, vector<1x8x4xbf16>
    %9 = vector.shape_cast %8 : vector<1x8x4xbf16> to vector<8x4xbf16>
    %cst_10 = arith.constant dense<0.000000e+00> : vector<8x648xf32>
    %10 = tpu.matmul %9, %7, %cst_10 {dimension_numbers = #tpu.dot_dimension_numbers<[1], [0], [0], [1], [0, 0, 1, 1], [], []>} : vector<8x4xbf16>, vector<4x648xbf16>, vector<8x648xf32> -> vector<8x648xf32>
    %11 = arith.addf %6, %10 : vector<8x648xf32>
    %12 = vector.extract_strided_slice %4 {offsets = [0, 1], sizes = [4, 648], strides = [1, 1]} : vector<4x686xbf16> to vector<4x648xbf16>
    %c1 = arith.constant 1 : index
    %c0_11 = arith.constant 0 : index
    %c0_12 = arith.constant 0 : index
    %13 = vector.load %arg3[%c1, %c0_11, %c0_12] : memref<9x8x4xbf16, #tpu.memory_space<vmem>>, vector<1x8x4xbf16>
    %14 = vector.shape_cast %13 : vector<1x8x4xbf16> to vector<8x4xbf16>
    %cst_13 = arith.constant dense<0.000000e+00> : vector<8x648xf32>
    %15 = tpu.matmul %14, %12, %cst_13 {dimension_numbers = #tpu.dot_dimension_numbers<[1], [0], [0], [1], [0, 0, 1, 1], [], []>} : vector<8x4xbf16>, vector<4x648xbf16>, vector<8x648xf32> -> vector<8x648xf32>
    %16 = arith.addf %11, %15 : vector<8x648xf32>
    %17 = vector.extract_strided_slice %4 {offsets = [0, 2], sizes = [4, 648], strides = [1, 1]} : vector<4x686xbf16> to vector<4x648xbf16>
    %c2 = arith.constant 2 : index
    %c0_14 = arith.constant 0 : index
    %c0_15 = arith.constant 0 : index
    %18 = vector.load %arg3[%c2, %c0_14, %c0_15] : memref<9x8x4xbf16, #tpu.memory_space<vmem>>, vector<1x8x4xbf16>
    %19 = vector.shape_cast %18 : vector<1x8x4xbf16> to vector<8x4xbf16>
    %cst_16 = arith.constant dense<0.000000e+00> : vector<8x648xf32>
    %20 = tpu.matmul %19, %17, %cst_16 {dimension_numbers = #tpu.dot_dimension_numbers<[1], [0], [0], [1], [0, 0, 1, 1], [], []>} : vector<8x4xbf16>, vector<4x648xbf16>, vector<8x648xf32> -> vector<8x648xf32>
    %21 = arith.addf %16, %20 : vector<8x648xf32>
    %22 = vector.extract_strided_slice %4 {offsets = [0, 18], sizes = [4, 648], strides = [1, 1]} : vector<4x686xbf16> to vector<4x648xbf16>
    %c3 = arith.constant 3 : index
    %c0_17 = arith.constant 0 : index
    %c0_18 = arith.constant 0 : index
    %23 = vector.load %arg3[%c3, %c0_17, %c0_18] : memref<9x8x4xbf16, #tpu.memory_space<vmem>>, vector<1x8x4xbf16>
    %24 = vector.shape_cast %23 : vector<1x8x4xbf16> to vector<8x4xbf16>
    %cst_19 = arith.constant dense<0.000000e+00> : vector<8x648xf32>
    %25 = tpu.matmul %24, %22, %cst_19 {dimension_numbers = #tpu.dot_dimension_numbers<[1], [0], [0], [1], [0, 0, 1, 1], [], []>} : vector<8x4xbf16>, vector<4x648xbf16>, vector<8x648xf32> -> vector<8x648xf32>
    %26 = arith.addf %21, %25 : vector<8x648xf32>
    %27 = vector.extract_strided_slice %4 {offsets = [0, 19], sizes = [4, 648], strides = [1, 1]} : vector<4x686xbf16> to vector<4x648xbf16>
    %c4 = arith.constant 4 : index
    %c0_20 = arith.constant 0 : index
    %c0_21 = arith.constant 0 : index
    %28 = vector.load %arg3[%c4, %c0_20, %c0_21] : memref<9x8x4xbf16, #tpu.memory_space<vmem>>, vector<1x8x4xbf16>
    %29 = vector.shape_cast %28 : vector<1x8x4xbf16> to vector<8x4xbf16>
    %cst_22 = arith.constant dense<0.000000e+00> : vector<8x648xf32>
    %30 = tpu.matmul %29, %27, %cst_22 {dimension_numbers = #tpu.dot_dimension_numbers<[1], [0], [0], [1], [0, 0, 1, 1], [], []>} : vector<8x4xbf16>, vector<4x648xbf16>, vector<8x648xf32> -> vector<8x648xf32>
    %31 = arith.addf %26, %30 : vector<8x648xf32>
    %32 = vector.extract_strided_slice %4 {offsets = [0, 20], sizes = [4, 648], strides = [1, 1]} : vector<4x686xbf16> to vector<4x648xbf16>
    %c5 = arith.constant 5 : index
    %c0_23 = arith.constant 0 : index
    %c0_24 = arith.constant 0 : index
    %33 = vector.load %arg3[%c5, %c0_23, %c0_24] : memref<9x8x4xbf16, #tpu.memory_space<vmem>>, vector<1x8x4xbf16>
    %34 = vector.shape_cast %33 : vector<1x8x4xbf16> to vector<8x4xbf16>
    %cst_25 = arith.constant dense<0.000000e+00> : vector<8x648xf32>
    %35 = tpu.matmul %34, %32, %cst_25 {dimension_numbers = #tpu.dot_dimension_numbers<[1], [0], [0], [1], [0, 0, 1, 1], [], []>} : vector<8x4xbf16>, vector<4x648xbf16>, vector<8x648xf32> -> vector<8x648xf32>
    %36 = arith.addf %31, %35 : vector<8x648xf32>
    %37 = vector.extract_strided_slice %4 {offsets = [0, 36], sizes = [4, 648], strides = [1, 1]} : vector<4x686xbf16> to vector<4x648xbf16>
    %c6 = arith.constant 6 : index
    %c0_26 = arith.constant 0 : index
    %c0_27 = arith.constant 0 : index
    %38 = vector.load %arg3[%c6, %c0_26, %c0_27] : memref<9x8x4xbf16, #tpu.memory_space<vmem>>, vector<1x8x4xbf16>
    %39 = vector.shape_cast %38 : vector<1x8x4xbf16> to vector<8x4xbf16>
    %cst_28 = arith.constant dense<0.000000e+00> : vector<8x648xf32>
    %40 = tpu.matmul %39, %37, %cst_28 {dimension_numbers = #tpu.dot_dimension_numbers<[1], [0], [0], [1], [0, 0, 1, 1], [], []>} : vector<8x4xbf16>, vector<4x648xbf16>, vector<8x648xf32> -> vector<8x648xf32>
    %41 = arith.addf %36, %40 : vector<8x648xf32>
    %42 = vector.extract_strided_slice %4 {offsets = [0, 37], sizes = [4, 648], strides = [1, 1]} : vector<4x686xbf16> to vector<4x648xbf16>
    %c7 = arith.constant 7 : index
    %c0_29 = arith.constant 0 : index
    %c0_30 = arith.constant 0 : index
    %43 = vector.load %arg3[%c7, %c0_29, %c0_30] : memref<9x8x4xbf16, #tpu.memory_space<vmem>>, vector<1x8x4xbf16>
    %44 = vector.shape_cast %43 : vector<1x8x4xbf16> to vector<8x4xbf16>
    %cst_31 = arith.constant dense<0.000000e+00> : vector<8x648xf32>
    %45 = tpu.matmul %44, %42, %cst_31 {dimension_numbers = #tpu.dot_dimension_numbers<[1], [0], [0], [1], [0, 0, 1, 1], [], []>} : vector<8x4xbf16>, vector<4x648xbf16>, vector<8x648xf32> -> vector<8x648xf32>
    %46 = arith.addf %41, %45 : vector<8x648xf32>
    %47 = vector.extract_strided_slice %4 {offsets = [0, 38], sizes = [4, 648], strides = [1, 1]} : vector<4x686xbf16> to vector<4x648xbf16>
    %c8 = arith.constant 8 : index
    %c0_32 = arith.constant 0 : index
    %c0_33 = arith.constant 0 : index
    %48 = vector.load %arg3[%c8, %c0_32, %c0_33] : memref<9x8x4xbf16, #tpu.memory_space<vmem>>, vector<1x8x4xbf16>
    %49 = vector.shape_cast %48 : vector<1x8x4xbf16> to vector<8x4xbf16>
    %cst_34 = arith.constant dense<0.000000e+00> : vector<8x648xf32>
    %50 = tpu.matmul %49, %47, %cst_34 {dimension_numbers = #tpu.dot_dimension_numbers<[1], [0], [0], [1], [0, 0, 1, 1], [], []>} : vector<8x4xbf16>, vector<4x648xbf16>, vector<8x648xf32> -> vector<8x648xf32>
    %51 = arith.addf %46, %50 : vector<8x648xf32>
    %52 = vector.broadcast %5 : vector<8x1xf32> to vector<8x648xf32>
    %53 = arith.addf %51, %52 : vector<8x648xf32>
    %cst_35 = arith.constant 0.000000e+00 : f32
    %54 = vector.broadcast %cst_35 : f32 to vector<8x648xf32>
    %55 = arith.maximumf %53, %54 : vector<8x648xf32>
    %cst_36 = arith.constant 0.000000e+00 : f32
    %56 = vector.shape_cast %2 : vector<1x648xi1> to vector<1x648xi1>
    %57 = vector.broadcast %56 : vector<1x648xi1> to vector<8x648xi1>
    %58 = vector.broadcast %cst_36 : f32 to vector<8x648xf32>
    %59 = arith.select %57, %55, %58 : vector<8x648xi1>, vector<8x648xf32>
    %60 = arith.truncf %59 : vector<8x648xf32> to vector<8x648xbf16>
    %cst_37 = arith.constant 0.000000e+00 : bf16
    %61 = vector.broadcast %cst_37 : bf16 to vector<8x19xbf16>
    %62 = tpu.concatenate %61, %60, %61 in 1 : vector<8x19xbf16>, vector<8x648xbf16>, vector<8x19xbf16> -> vector<8x686xbf16>
    %c0_38 = arith.constant 0 : index
    %c0_39 = arith.constant 0 : index
    %63 = vector.load %arg6[%c0_38, %c0_39] : memref<16x1xf32, #tpu.memory_space<vmem>>, vector<16x1xf32>
    %cst_40 = arith.constant 0.000000e+00 : f32
    %64 = vector.broadcast %cst_40 : f32 to vector<16x648xf32>
    %65 = vector.extract_strided_slice %62 {offsets = [0, 0], sizes = [8, 648], strides = [1, 1]} : vector<8x686xbf16> to vector<8x648xbf16>
    %c0_41 = arith.constant 0 : index
    %c0_42 = arith.constant 0 : index
    %c0_43 = arith.constant 0 : index
    %66 = vector.load %arg5[%c0_41, %c0_42, %c0_43] : memref<9x16x8xbf16, #tpu.memory_space<vmem>>, vector<1x16x8xbf16>
    %67 = vector.shape_cast %66 : vector<1x16x8xbf16> to vector<16x8xbf16>
    %cst_44 = arith.constant dense<0.000000e+00> : vector<16x648xf32>
    %68 = tpu.matmul %67, %65, %cst_44 {dimension_numbers = #tpu.dot_dimension_numbers<[1], [0], [0], [1], [0, 0, 1, 1], [], []>} : vector<16x8xbf16>, vector<8x648xbf16>, vector<16x648xf32> -> vector<16x648xf32>
    %69 = arith.addf %64, %68 : vector<16x648xf32>
    %70 = vector.extract_strided_slice %62 {offsets = [0, 1], sizes = [8, 648], strides = [1, 1]} : vector<8x686xbf16> to vector<8x648xbf16>
    %c1_45 = arith.constant 1 : index
    %c0_46 = arith.constant 0 : index
    %c0_47 = arith.constant 0 : index
    %71 = vector.load %arg5[%c1_45, %c0_46, %c0_47] : memref<9x16x8xbf16, #tpu.memory_space<vmem>>, vector<1x16x8xbf16>
    %72 = vector.shape_cast %71 : vector<1x16x8xbf16> to vector<16x8xbf16>
    %cst_48 = arith.constant dense<0.000000e+00> : vector<16x648xf32>
    %73 = tpu.matmul %72, %70, %cst_48 {dimension_numbers = #tpu.dot_dimension_numbers<[1], [0], [0], [1], [0, 0, 1, 1], [], []>} : vector<16x8xbf16>, vector<8x648xbf16>, vector<16x648xf32> -> vector<16x648xf32>
    %74 = arith.addf %69, %73 : vector<16x648xf32>
    %75 = vector.extract_strided_slice %62 {offsets = [0, 2], sizes = [8, 648], strides = [1, 1]} : vector<8x686xbf16> to vector<8x648xbf16>
    %c2_49 = arith.constant 2 : index
    %c0_50 = arith.constant 0 : index
    %c0_51 = arith.constant 0 : index
    %76 = vector.load %arg5[%c2_49, %c0_50, %c0_51] : memref<9x16x8xbf16, #tpu.memory_space<vmem>>, vector<1x16x8xbf16>
    %77 = vector.shape_cast %76 : vector<1x16x8xbf16> to vector<16x8xbf16>
    %cst_52 = arith.constant dense<0.000000e+00> : vector<16x648xf32>
    %78 = tpu.matmul %77, %75, %cst_52 {dimension_numbers = #tpu.dot_dimension_numbers<[1], [0], [0], [1], [0, 0, 1, 1], [], []>} : vector<16x8xbf16>, vector<8x648xbf16>, vector<16x648xf32> -> vector<16x648xf32>
    %79 = arith.addf %74, %78 : vector<16x648xf32>
    %80 = vector.extract_strided_slice %62 {offsets = [0, 18], sizes = [8, 648], strides = [1, 1]} : vector<8x686xbf16> to vector<8x648xbf16>
    %c3_53 = arith.constant 3 : index
    %c0_54 = arith.constant 0 : index
    %c0_55 = arith.constant 0 : index
    %81 = vector.load %arg5[%c3_53, %c0_54, %c0_55] : memref<9x16x8xbf16, #tpu.memory_space<vmem>>, vector<1x16x8xbf16>
    %82 = vector.shape_cast %81 : vector<1x16x8xbf16> to vector<16x8xbf16>
    %cst_56 = arith.constant dense<0.000000e+00> : vector<16x648xf32>
    %83 = tpu.matmul %82, %80, %cst_56 {dimension_numbers = #tpu.dot_dimension_numbers<[1], [0], [0], [1], [0, 0, 1, 1], [], []>} : vector<16x8xbf16>, vector<8x648xbf16>, vector<16x648xf32> -> vector<16x648xf32>
    %84 = arith.addf %79, %83 : vector<16x648xf32>
    %85 = vector.extract_strided_slice %62 {offsets = [0, 19], sizes = [8, 648], strides = [1, 1]} : vector<8x686xbf16> to vector<8x648xbf16>
    %c4_57 = arith.constant 4 : index
    %c0_58 = arith.constant 0 : index
    %c0_59 = arith.constant 0 : index
    %86 = vector.load %arg5[%c4_57, %c0_58, %c0_59] : memref<9x16x8xbf16, #tpu.memory_space<vmem>>, vector<1x16x8xbf16>
    %87 = vector.shape_cast %86 : vector<1x16x8xbf16> to vector<16x8xbf16>
    %cst_60 = arith.constant dense<0.000000e+00> : vector<16x648xf32>
    %88 = tpu.matmul %87, %85, %cst_60 {dimension_numbers = #tpu.dot_dimension_numbers<[1], [0], [0], [1], [0, 0, 1, 1], [], []>} : vector<16x8xbf16>, vector<8x648xbf16>, vector<16x648xf32> -> vector<16x648xf32>
    %89 = arith.addf %84, %88 : vector<16x648xf32>
    %90 = vector.extract_strided_slice %62 {offsets = [0, 20], sizes = [8, 648], strides = [1, 1]} : vector<8x686xbf16> to vector<8x648xbf16>
    %c5_61 = arith.constant 5 : index
    %c0_62 = arith.constant 0 : index
    %c0_63 = arith.constant 0 : index
    %91 = vector.load %arg5[%c5_61, %c0_62, %c0_63] : memref<9x16x8xbf16, #tpu.memory_space<vmem>>, vector<1x16x8xbf16>
    %92 = vector.shape_cast %91 : vector<1x16x8xbf16> to vector<16x8xbf16>
    %cst_64 = arith.constant dense<0.000000e+00> : vector<16x648xf32>
    %93 = tpu.matmul %92, %90, %cst_64 {dimension_numbers = #tpu.dot_dimension_numbers<[1], [0], [0], [1], [0, 0, 1, 1], [], []>} : vector<16x8xbf16>, vector<8x648xbf16>, vector<16x648xf32> -> vector<16x648xf32>
    %94 = arith.addf %89, %93 : vector<16x648xf32>
    %95 = vector.extract_strided_slice %62 {offsets = [0, 36], sizes = [8, 648], strides = [1, 1]} : vector<8x686xbf16> to vector<8x648xbf16>
    %c6_65 = arith.constant 6 : index
    %c0_66 = arith.constant 0 : index
    %c0_67 = arith.constant 0 : index
    %96 = vector.load %arg5[%c6_65, %c0_66, %c0_67] : memref<9x16x8xbf16, #tpu.memory_space<vmem>>, vector<1x16x8xbf16>
    %97 = vector.shape_cast %96 : vector<1x16x8xbf16> to vector<16x8xbf16>
    %cst_68 = arith.constant dense<0.000000e+00> : vector<16x648xf32>
    %98 = tpu.matmul %97, %95, %cst_68 {dimension_numbers = #tpu.dot_dimension_numbers<[1], [0], [0], [1], [0, 0, 1, 1], [], []>} : vector<16x8xbf16>, vector<8x648xbf16>, vector<16x648xf32> -> vector<16x648xf32>
    %99 = arith.addf %94, %98 : vector<16x648xf32>
    %100 = vector.extract_strided_slice %62 {offsets = [0, 37], sizes = [8, 648], strides = [1, 1]} : vector<8x686xbf16> to vector<8x648xbf16>
    %c7_69 = arith.constant 7 : index
    %c0_70 = arith.constant 0 : index
    %c0_71 = arith.constant 0 : index
    %101 = vector.load %arg5[%c7_69, %c0_70, %c0_71] : memref<9x16x8xbf16, #tpu.memory_space<vmem>>, vector<1x16x8xbf16>
    %102 = vector.shape_cast %101 : vector<1x16x8xbf16> to vector<16x8xbf16>
    %cst_72 = arith.constant dense<0.000000e+00> : vector<16x648xf32>
    %103 = tpu.matmul %102, %100, %cst_72 {dimension_numbers = #tpu.dot_dimension_numbers<[1], [0], [0], [1], [0, 0, 1, 1], [], []>} : vector<16x8xbf16>, vector<8x648xbf16>, vector<16x648xf32> -> vector<16x648xf32>
    %104 = arith.addf %99, %103 : vector<16x648xf32>
    %105 = vector.extract_strided_slice %62 {offsets = [0, 38], sizes = [8, 648], strides = [1, 1]} : vector<8x686xbf16> to vector<8x648xbf16>
    %c8_73 = arith.constant 8 : index
    %c0_74 = arith.constant 0 : index
    %c0_75 = arith.constant 0 : index
    %106 = vector.load %arg5[%c8_73, %c0_74, %c0_75] : memref<9x16x8xbf16, #tpu.memory_space<vmem>>, vector<1x16x8xbf16>
    %107 = vector.shape_cast %106 : vector<1x16x8xbf16> to vector<16x8xbf16>
    %cst_76 = arith.constant dense<0.000000e+00> : vector<16x648xf32>
    %108 = tpu.matmul %107, %105, %cst_76 {dimension_numbers = #tpu.dot_dimension_numbers<[1], [0], [0], [1], [0, 0, 1, 1], [], []>} : vector<16x8xbf16>, vector<8x648xbf16>, vector<16x648xf32> -> vector<16x648xf32>
    %109 = arith.addf %104, %108 : vector<16x648xf32>
    %110 = vector.broadcast %63 : vector<16x1xf32> to vector<16x648xf32>
    %111 = arith.addf %109, %110 : vector<16x648xf32>
    %cst_77 = arith.constant 0.000000e+00 : f32
    %112 = vector.broadcast %cst_77 : f32 to vector<16x648xf32>
    %113 = arith.maximumf %111, %112 : vector<16x648xf32>
    %114 = vector.extract_strided_slice %113 {offsets = [0, 19], sizes = [16, 16], strides = [1, 1]} : vector<16x648xf32> to vector<16x16xf32>
    %c0_78 = arith.constant 0 : index
    %c0_79 = arith.constant 0 : index
    %c0_80 = arith.constant 0 : index
    %115 = vector.load %arg7[%c0_78, %c0_79, %c0_80] : memref<2x16x256xf32, #tpu.memory_space<vmem>>, vector<1x16x16xf32>
    %116 = vector.shape_cast %115 : vector<1x16x16xf32> to vector<16x16xf32>
    %117 = vector.shape_cast %114 : vector<16x16xf32> to vector<1x16x16xf32>
    tpu.vector_store %arg7[%c0_78, %c0_79, %c0_80], %117 {strides = array<i32>} : memref<2x16x256xf32, #tpu.memory_space<vmem>>, vector<1x16x16xf32>,
    %118 = vector.extract_strided_slice %113 {offsets = [0, 37], sizes = [16, 16], strides = [1, 1]} : vector<16x648xf32> to vector<16x16xf32>
    %c0_81 = arith.constant 0 : index
    %c0_82 = arith.constant 0 : index
    %c16 = arith.constant 16 : index
    %119 = vector.load %arg7[%c0_81, %c0_82, %c16] : memref<2x16x256xf32, #tpu.memory_space<vmem>>, vector<1x16x16xf32>
    %120 = vector.shape_cast %119 : vector<1x16x16xf32> to vector<16x16xf32>
    %121 = vector.shape_cast %118 : vector<16x16xf32> to vector<1x16x16xf32>
    tpu.vector_store %arg7[%c0_81, %c0_82, %c16], %121 {strides = array<i32>} : memref<2x16x256xf32, #tpu.memory_space<vmem>>, vector<1x16x16xf32>,
    %122 = vector.extract_strided_slice %113 {offsets = [0, 55], sizes = [16, 16], strides = [1, 1]} : vector<16x648xf32> to vector<16x16xf32>
    %c0_83 = arith.constant 0 : index
    %c0_84 = arith.constant 0 : index
    %c32 = arith.constant 32 : index
    %123 = vector.load %arg7[%c0_83, %c0_84, %c32] : memref<2x16x256xf32, #tpu.memory_space<vmem>>, vector<1x16x16xf32>
    %124 = vector.shape_cast %123 : vector<1x16x16xf32> to vector<16x16xf32>
    %125 = vector.shape_cast %122 : vector<16x16xf32> to vector<1x16x16xf32>
    tpu.vector_store %arg7[%c0_83, %c0_84, %c32], %125 {strides = array<i32>} : memref<2x16x256xf32, #tpu.memory_space<vmem>>, vector<1x16x16xf32>,
    %126 = vector.extract_strided_slice %113 {offsets = [0, 73], sizes = [16, 16], strides = [1, 1]} : vector<16x648xf32> to vector<16x16xf32>
    %c0_85 = arith.constant 0 : index
    %c0_86 = arith.constant 0 : index
    %c48 = arith.constant 48 : index
    %127 = vector.load %arg7[%c0_85, %c0_86, %c48] : memref<2x16x256xf32, #tpu.memory_space<vmem>>, vector<1x16x16xf32>
    %128 = vector.shape_cast %127 : vector<1x16x16xf32> to vector<16x16xf32>
    %129 = vector.shape_cast %126 : vector<16x16xf32> to vector<1x16x16xf32>
    tpu.vector_store %arg7[%c0_85, %c0_86, %c48], %129 {strides = array<i32>} : memref<2x16x256xf32, #tpu.memory_space<vmem>>, vector<1x16x16xf32>,
    %130 = vector.extract_strided_slice %113 {offsets = [0, 91], sizes = [16, 16], strides = [1, 1]} : vector<16x648xf32> to vector<16x16xf32>
    %c0_87 = arith.constant 0 : index
    %c0_88 = arith.constant 0 : index
    %c64 = arith.constant 64 : index
    %131 = vector.load %arg7[%c0_87, %c0_88, %c64] : memref<2x16x256xf32, #tpu.memory_space<vmem>>, vector<1x16x16xf32>
    %132 = vector.shape_cast %131 : vector<1x16x16xf32> to vector<16x16xf32>
    %133 = vector.shape_cast %130 : vector<16x16xf32> to vector<1x16x16xf32>
    tpu.vector_store %arg7[%c0_87, %c0_88, %c64], %133 {strides = array<i32>} : memref<2x16x256xf32, #tpu.memory_space<vmem>>, vector<1x16x16xf32>,
    %134 = vector.extract_strided_slice %113 {offsets = [0, 109], sizes = [16, 16], strides = [1, 1]} : vector<16x648xf32> to vector<16x16xf32>
    %c0_89 = arith.constant 0 : index
    %c0_90 = arith.constant 0 : index
    %c80 = arith.constant 80 : index
    %135 = vector.load %arg7[%c0_89, %c0_90, %c80] : memref<2x16x256xf32, #tpu.memory_space<vmem>>, vector<1x16x16xf32>
    %136 = vector.shape_cast %135 : vector<1x16x16xf32> to vector<16x16xf32>
    %137 = vector.shape_cast %134 : vector<16x16xf32> to vector<1x16x16xf32>
    tpu.vector_store %arg7[%c0_89, %c0_90, %c80], %137 {strides = array<i32>} : memref<2x16x256xf32, #tpu.memory_space<vmem>>, vector<1x16x16xf32>,
    %138 = vector.extract_strided_slice %113 {offsets = [0, 127], sizes = [16, 16], strides = [1, 1]} : vector<16x648xf32> to vector<16x16xf32>
    %c0_91 = arith.constant 0 : index
    %c0_92 = arith.constant 0 : index
    %c96 = arith.constant 96 : index
    %139 = vector.load %arg7[%c0_91, %c0_92, %c96] : memref<2x16x256xf32, #tpu.memory_space<vmem>>, vector<1x16x16xf32>
    %140 = vector.shape_cast %139 : vector<1x16x16xf32> to vector<16x16xf32>
    %141 = vector.shape_cast %138 : vector<16x16xf32> to vector<1x16x16xf32>
    tpu.vector_store %arg7[%c0_91, %c0_92, %c96], %141 {strides = array<i32>} : memref<2x16x256xf32, #tpu.memory_space<vmem>>, vector<1x16x16xf32>,
    %142 = vector.extract_strided_slice %113 {offsets = [0, 145], sizes = [16, 16], strides = [1, 1]} : vector<16x648xf32> to vector<16x16xf32>
    %c0_93 = arith.constant 0 : index
    %c0_94 = arith.constant 0 : index
    %c112 = arith.constant 112 : index
    %143 = vector.load %arg7[%c0_93, %c0_94, %c112] : memref<2x16x256xf32, #tpu.memory_space<vmem>>, vector<1x16x16xf32>
    %144 = vector.shape_cast %143 : vector<1x16x16xf32> to vector<16x16xf32>
    %145 = vector.shape_cast %142 : vector<16x16xf32> to vector<1x16x16xf32>
    tpu.vector_store %arg7[%c0_93, %c0_94, %c112], %145 {strides = array<i32>} : memref<2x16x256xf32, #tpu.memory_space<vmem>>, vector<1x16x16xf32>,
    %146 = vector.extract_strided_slice %113 {offsets = [0, 163], sizes = [16, 16], strides = [1, 1]} : vector<16x648xf32> to vector<16x16xf32>
    %c0_95 = arith.constant 0 : index
    %c0_96 = arith.constant 0 : index
    %c128 = arith.constant 128 : index
    %147 = vector.load %arg7[%c0_95, %c0_96, %c128] : memref<2x16x256xf32, #tpu.memory_space<vmem>>, vector<1x16x16xf32>
    %148 = vector.shape_cast %147 : vector<1x16x16xf32> to vector<16x16xf32>
    %149 = vector.shape_cast %146 : vector<16x16xf32> to vector<1x16x16xf32>
    tpu.vector_store %arg7[%c0_95, %c0_96, %c128], %149 {strides = array<i32>} : memref<2x16x256xf32, #tpu.memory_space<vmem>>, vector<1x16x16xf32>,
    %150 = vector.extract_strided_slice %113 {offsets = [0, 181], sizes = [16, 16], strides = [1, 1]} : vector<16x648xf32> to vector<16x16xf32>
    %c0_97 = arith.constant 0 : index
    %c0_98 = arith.constant 0 : index
    %c144 = arith.constant 144 : index
    %151 = vector.load %arg7[%c0_97, %c0_98, %c144] : memref<2x16x256xf32, #tpu.memory_space<vmem>>, vector<1x16x16xf32>
    %152 = vector.shape_cast %151 : vector<1x16x16xf32> to vector<16x16xf32>
    %153 = vector.shape_cast %150 : vector<16x16xf32> to vector<1x16x16xf32>
    tpu.vector_store %arg7[%c0_97, %c0_98, %c144], %153 {strides = array<i32>} : memref<2x16x256xf32, #tpu.memory_space<vmem>>, vector<1x16x16xf32>,
    %154 = vector.extract_strided_slice %113 {offsets = [0, 199], sizes = [16, 16], strides = [1, 1]} : vector<16x648xf32> to vector<16x16xf32>
    %c0_99 = arith.constant 0 : index
    %c0_100 = arith.constant 0 : index
    %c160 = arith.constant 160 : index
    %155 = vector.load %arg7[%c0_99, %c0_100, %c160] : memref<2x16x256xf32, #tpu.memory_space<vmem>>, vector<1x16x16xf32>
    %156 = vector.shape_cast %155 : vector<1x16x16xf32> to vector<16x16xf32>
    %157 = vector.shape_cast %154 : vector<16x16xf32> to vector<1x16x16xf32>
    tpu.vector_store %arg7[%c0_99, %c0_100, %c160], %157 {strides = array<i32>} : memref<2x16x256xf32, #tpu.memory_space<vmem>>, vector<1x16x16xf32>,
    %158 = vector.extract_strided_slice %113 {offsets = [0, 217], sizes = [16, 16], strides = [1, 1]} : vector<16x648xf32> to vector<16x16xf32>
    %c0_101 = arith.constant 0 : index
    %c0_102 = arith.constant 0 : index
    %c176 = arith.constant 176 : index
    %159 = vector.load %arg7[%c0_101, %c0_102, %c176] : memref<2x16x256xf32, #tpu.memory_space<vmem>>, vector<1x16x16xf32>
    %160 = vector.shape_cast %159 : vector<1x16x16xf32> to vector<16x16xf32>
    %161 = vector.shape_cast %158 : vector<16x16xf32> to vector<1x16x16xf32>
    tpu.vector_store %arg7[%c0_101, %c0_102, %c176], %161 {strides = array<i32>} : memref<2x16x256xf32, #tpu.memory_space<vmem>>, vector<1x16x16xf32>,
    %162 = vector.extract_strided_slice %113 {offsets = [0, 235], sizes = [16, 16], strides = [1, 1]} : vector<16x648xf32> to vector<16x16xf32>
    %c0_103 = arith.constant 0 : index
    %c0_104 = arith.constant 0 : index
    %c192 = arith.constant 192 : index
    %163 = vector.load %arg7[%c0_103, %c0_104, %c192] : memref<2x16x256xf32, #tpu.memory_space<vmem>>, vector<1x16x16xf32>
    %164 = vector.shape_cast %163 : vector<1x16x16xf32> to vector<16x16xf32>
    %165 = vector.shape_cast %162 : vector<16x16xf32> to vector<1x16x16xf32>
    tpu.vector_store %arg7[%c0_103, %c0_104, %c192], %165 {strides = array<i32>} : memref<2x16x256xf32, #tpu.memory_space<vmem>>, vector<1x16x16xf32>,
    %166 = vector.extract_strided_slice %113 {offsets = [0, 253], sizes = [16, 16], strides = [1, 1]} : vector<16x648xf32> to vector<16x16xf32>
    %c0_105 = arith.constant 0 : index
    %c0_106 = arith.constant 0 : index
    %c208 = arith.constant 208 : index
    %167 = vector.load %arg7[%c0_105, %c0_106, %c208] : memref<2x16x256xf32, #tpu.memory_space<vmem>>, vector<1x16x16xf32>
    %168 = vector.shape_cast %167 : vector<1x16x16xf32> to vector<16x16xf32>
    %169 = vector.shape_cast %166 : vector<16x16xf32> to vector<1x16x16xf32>
    tpu.vector_store %arg7[%c0_105, %c0_106, %c208], %169 {strides = array<i32>} : memref<2x16x256xf32, #tpu.memory_space<vmem>>, vector<1x16x16xf32>,
    %170 = vector.extract_strided_slice %113 {offsets = [0, 271], sizes = [16, 16], strides = [1, 1]} : vector<16x648xf32> to vector<16x16xf32>
    %c0_107 = arith.constant 0 : index
    %c0_108 = arith.constant 0 : index
    %c224 = arith.constant 224 : index
    %171 = vector.load %arg7[%c0_107, %c0_108, %c224] : memref<2x16x256xf32, #tpu.memory_space<vmem>>, vector<1x16x16xf32>
    %172 = vector.shape_cast %171 : vector<1x16x16xf32> to vector<16x16xf32>
    %173 = vector.shape_cast %170 : vector<16x16xf32> to vector<1x16x16xf32>
    tpu.vector_store %arg7[%c0_107, %c0_108, %c224], %173 {strides = array<i32>} : memref<2x16x256xf32, #tpu.memory_space<vmem>>, vector<1x16x16xf32>,
    %174 = vector.extract_strided_slice %113 {offsets = [0, 289], sizes = [16, 16], strides = [1, 1]} : vector<16x648xf32> to vector<16x16xf32>
    %c0_109 = arith.constant 0 : index
    %c0_110 = arith.constant 0 : index
    %c240 = arith.constant 240 : index
    %175 = vector.load %arg7[%c0_109, %c0_110, %c240] : memref<2x16x256xf32, #tpu.memory_space<vmem>>, vector<1x16x16xf32>
    %176 = vector.shape_cast %175 : vector<1x16x16xf32> to vector<16x16xf32>
    %177 = vector.shape_cast %174 : vector<16x16xf32> to vector<1x16x16xf32>
    tpu.vector_store %arg7[%c0_109, %c0_110, %c240], %177 {strides = array<i32>} : memref<2x16x256xf32, #tpu.memory_space<vmem>>, vector<1x16x16xf32>,
    %178 = vector.extract_strided_slice %113 {offsets = [0, 343], sizes = [16, 16], strides = [1, 1]} : vector<16x648xf32> to vector<16x16xf32>
    %c1_111 = arith.constant 1 : index
    %c0_112 = arith.constant 0 : index
    %c0_113 = arith.constant 0 : index
    %179 = vector.load %arg7[%c1_111, %c0_112, %c0_113] : memref<2x16x256xf32, #tpu.memory_space<vmem>>, vector<1x16x16xf32>
    %180 = vector.shape_cast %179 : vector<1x16x16xf32> to vector<16x16xf32>
    %181 = vector.shape_cast %178 : vector<16x16xf32> to vector<1x16x16xf32>
    tpu.vector_store %arg7[%c1_111, %c0_112, %c0_113], %181 {strides = array<i32>} : memref<2x16x256xf32, #tpu.memory_space<vmem>>, vector<1x16x16xf32>,
    %182 = vector.extract_strided_slice %113 {offsets = [0, 361], sizes = [16, 16], strides = [1, 1]} : vector<16x648xf32> to vector<16x16xf32>
    %c1_114 = arith.constant 1 : index
    %c0_115 = arith.constant 0 : index
    %c16_116 = arith.constant 16 : index
    %183 = vector.load %arg7[%c1_114, %c0_115, %c16_116] : memref<2x16x256xf32, #tpu.memory_space<vmem>>, vector<1x16x16xf32>
    %184 = vector.shape_cast %183 : vector<1x16x16xf32> to vector<16x16xf32>
    %185 = vector.shape_cast %182 : vector<16x16xf32> to vector<1x16x16xf32>
    tpu.vector_store %arg7[%c1_114, %c0_115, %c16_116], %185 {strides = array<i32>} : memref<2x16x256xf32, #tpu.memory_space<vmem>>, vector<1x16x16xf32>,
    %186 = vector.extract_strided_slice %113 {offsets = [0, 379], sizes = [16, 16], strides = [1, 1]} : vector<16x648xf32> to vector<16x16xf32>
    %c1_117 = arith.constant 1 : index
    %c0_118 = arith.constant 0 : index
    %c32_119 = arith.constant 32 : index
    %187 = vector.load %arg7[%c1_117, %c0_118, %c32_119] : memref<2x16x256xf32, #tpu.memory_space<vmem>>, vector<1x16x16xf32>
    %188 = vector.shape_cast %187 : vector<1x16x16xf32> to vector<16x16xf32>
    %189 = vector.shape_cast %186 : vector<16x16xf32> to vector<1x16x16xf32>
    tpu.vector_store %arg7[%c1_117, %c0_118, %c32_119], %189 {strides = array<i32>} : memref<2x16x256xf32, #tpu.memory_space<vmem>>, vector<1x16x16xf32>,
    %190 = vector.extract_strided_slice %113 {offsets = [0, 397], sizes = [16, 16], strides = [1, 1]} : vector<16x648xf32> to vector<16x16xf32>
    %c1_120 = arith.constant 1 : index
    %c0_121 = arith.constant 0 : index
    %c48_122 = arith.constant 48 : index
    %191 = vector.load %arg7[%c1_120, %c0_121, %c48_122] : memref<2x16x256xf32, #tpu.memory_space<vmem>>, vector<1x16x16xf32>
    %192 = vector.shape_cast %191 : vector<1x16x16xf32> to vector<16x16xf32>
    %193 = vector.shape_cast %190 : vector<16x16xf32> to vector<1x16x16xf32>
    tpu.vector_store %arg7[%c1_120, %c0_121, %c48_122], %193 {strides = array<i32>} : memref<2x16x256xf32, #tpu.memory_space<vmem>>, vector<1x16x16xf32>,
    %194 = vector.extract_strided_slice %113 {offsets = [0, 415], sizes = [16, 16], strides = [1, 1]} : vector<16x648xf32> to vector<16x16xf32>
    %c1_123 = arith.constant 1 : index
    %c0_124 = arith.constant 0 : index
    %c64_125 = arith.constant 64 : index
    %195 = vector.load %arg7[%c1_123, %c0_124, %c64_125] : memref<2x16x256xf32, #tpu.memory_space<vmem>>, vector<1x16x16xf32>
    %196 = vector.shape_cast %195 : vector<1x16x16xf32> to vector<16x16xf32>
    %197 = vector.shape_cast %194 : vector<16x16xf32> to vector<1x16x16xf32>
    tpu.vector_store %arg7[%c1_123, %c0_124, %c64_125], %197 {strides = array<i32>} : memref<2x16x256xf32, #tpu.memory_space<vmem>>, vector<1x16x16xf32>,
    %198 = vector.extract_strided_slice %113 {offsets = [0, 433], sizes = [16, 16], strides = [1, 1]} : vector<16x648xf32> to vector<16x16xf32>
    %c1_126 = arith.constant 1 : index
    %c0_127 = arith.constant 0 : index
    %c80_128 = arith.constant 80 : index
    %199 = vector.load %arg7[%c1_126, %c0_127, %c80_128] : memref<2x16x256xf32, #tpu.memory_space<vmem>>, vector<1x16x16xf32>
    %200 = vector.shape_cast %199 : vector<1x16x16xf32> to vector<16x16xf32>
    %201 = vector.shape_cast %198 : vector<16x16xf32> to vector<1x16x16xf32>
    tpu.vector_store %arg7[%c1_126, %c0_127, %c80_128], %201 {strides = array<i32>} : memref<2x16x256xf32, #tpu.memory_space<vmem>>, vector<1x16x16xf32>,
    %202 = vector.extract_strided_slice %113 {offsets = [0, 451], sizes = [16, 16], strides = [1, 1]} : vector<16x648xf32> to vector<16x16xf32>
    %c1_129 = arith.constant 1 : index
    %c0_130 = arith.constant 0 : index
    %c96_131 = arith.constant 96 : index
    %203 = vector.load %arg7[%c1_129, %c0_130, %c96_131] : memref<2x16x256xf32, #tpu.memory_space<vmem>>, vector<1x16x16xf32>
    %204 = vector.shape_cast %203 : vector<1x16x16xf32> to vector<16x16xf32>
    %205 = vector.shape_cast %202 : vector<16x16xf32> to vector<1x16x16xf32>
    tpu.vector_store %arg7[%c1_129, %c0_130, %c96_131], %205 {strides = array<i32>} : memref<2x16x256xf32, #tpu.memory_space<vmem>>, vector<1x16x16xf32>,
    %206 = vector.extract_strided_slice %113 {offsets = [0, 469], sizes = [16, 16], strides = [1, 1]} : vector<16x648xf32> to vector<16x16xf32>
    %c1_132 = arith.constant 1 : index
    %c0_133 = arith.constant 0 : index
    %c112_134 = arith.constant 112 : index
    %207 = vector.load %arg7[%c1_132, %c0_133, %c112_134] : memref<2x16x256xf32, #tpu.memory_space<vmem>>, vector<1x16x16xf32>
    %208 = vector.shape_cast %207 : vector<1x16x16xf32> to vector<16x16xf32>
    %209 = vector.shape_cast %206 : vector<16x16xf32> to vector<1x16x16xf32>
    tpu.vector_store %arg7[%c1_132, %c0_133, %c112_134], %209 {strides = array<i32>} : memref<2x16x256xf32, #tpu.memory_space<vmem>>, vector<1x16x16xf32>,
    %210 = vector.extract_strided_slice %113 {offsets = [0, 487], sizes = [16, 16], strides = [1, 1]} : vector<16x648xf32> to vector<16x16xf32>
    %c1_135 = arith.constant 1 : index
    %c0_136 = arith.constant 0 : index
    %c128_137 = arith.constant 128 : index
    %211 = vector.load %arg7[%c1_135, %c0_136, %c128_137] : memref<2x16x256xf32, #tpu.memory_space<vmem>>, vector<1x16x16xf32>
    %212 = vector.shape_cast %211 : vector<1x16x16xf32> to vector<16x16xf32>
    %213 = vector.shape_cast %210 : vector<16x16xf32> to vector<1x16x16xf32>
    tpu.vector_store %arg7[%c1_135, %c0_136, %c128_137], %213 {strides = array<i32>} : memref<2x16x256xf32, #tpu.memory_space<vmem>>, vector<1x16x16xf32>,
    %214 = vector.extract_strided_slice %113 {offsets = [0, 505], sizes = [16, 16], strides = [1, 1]} : vector<16x648xf32> to vector<16x16xf32>
    %c1_138 = arith.constant 1 : index
    %c0_139 = arith.constant 0 : index
    %c144_140 = arith.constant 144 : index
    %215 = vector.load %arg7[%c1_138, %c0_139, %c144_140] : memref<2x16x256xf32, #tpu.memory_space<vmem>>, vector<1x16x16xf32>
    %216 = vector.shape_cast %215 : vector<1x16x16xf32> to vector<16x16xf32>
    %217 = vector.shape_cast %214 : vector<16x16xf32> to vector<1x16x16xf32>
    tpu.vector_store %arg7[%c1_138, %c0_139, %c144_140], %217 {strides = array<i32>} : memref<2x16x256xf32, #tpu.memory_space<vmem>>, vector<1x16x16xf32>,
    %218 = vector.extract_strided_slice %113 {offsets = [0, 523], sizes = [16, 16], strides = [1, 1]} : vector<16x648xf32> to vector<16x16xf32>
    %c1_141 = arith.constant 1 : index
    %c0_142 = arith.constant 0 : index
    %c160_143 = arith.constant 160 : index
    %219 = vector.load %arg7[%c1_141, %c0_142, %c160_143] : memref<2x16x256xf32, #tpu.memory_space<vmem>>, vector<1x16x16xf32>
    %220 = vector.shape_cast %219 : vector<1x16x16xf32> to vector<16x16xf32>
    %221 = vector.shape_cast %218 : vector<16x16xf32> to vector<1x16x16xf32>
    tpu.vector_store %arg7[%c1_141, %c0_142, %c160_143], %221 {strides = array<i32>} : memref<2x16x256xf32, #tpu.memory_space<vmem>>, vector<1x16x16xf32>,
    %222 = vector.extract_strided_slice %113 {offsets = [0, 541], sizes = [16, 16], strides = [1, 1]} : vector<16x648xf32> to vector<16x16xf32>
    %c1_144 = arith.constant 1 : index
    %c0_145 = arith.constant 0 : index
    %c176_146 = arith.constant 176 : index
    %223 = vector.load %arg7[%c1_144, %c0_145, %c176_146] : memref<2x16x256xf32, #tpu.memory_space<vmem>>, vector<1x16x16xf32>
    %224 = vector.shape_cast %223 : vector<1x16x16xf32> to vector<16x16xf32>
    %225 = vector.shape_cast %222 : vector<16x16xf32> to vector<1x16x16xf32>
    tpu.vector_store %arg7[%c1_144, %c0_145, %c176_146], %225 {strides = array<i32>} : memref<2x16x256xf32, #tpu.memory_space<vmem>>, vector<1x16x16xf32>,
    %226 = vector.extract_strided_slice %113 {offsets = [0, 559], sizes = [16, 16], strides = [1, 1]} : vector<16x648xf32> to vector<16x16xf32>
    %c1_147 = arith.constant 1 : index
    %c0_148 = arith.constant 0 : index
    %c192_149 = arith.constant 192 : index
    %227 = vector.load %arg7[%c1_147, %c0_148, %c192_149] : memref<2x16x256xf32, #tpu.memory_space<vmem>>, vector<1x16x16xf32>
    %228 = vector.shape_cast %227 : vector<1x16x16xf32> to vector<16x16xf32>
    %229 = vector.shape_cast %226 : vector<16x16xf32> to vector<1x16x16xf32>
    tpu.vector_store %arg7[%c1_147, %c0_148, %c192_149], %229 {strides = array<i32>} : memref<2x16x256xf32, #tpu.memory_space<vmem>>, vector<1x16x16xf32>,
    %230 = vector.extract_strided_slice %113 {offsets = [0, 577], sizes = [16, 16], strides = [1, 1]} : vector<16x648xf32> to vector<16x16xf32>
    %c1_150 = arith.constant 1 : index
    %c0_151 = arith.constant 0 : index
    %c208_152 = arith.constant 208 : index
    %231 = vector.load %arg7[%c1_150, %c0_151, %c208_152] : memref<2x16x256xf32, #tpu.memory_space<vmem>>, vector<1x16x16xf32>
    %232 = vector.shape_cast %231 : vector<1x16x16xf32> to vector<16x16xf32>
    %233 = vector.shape_cast %230 : vector<16x16xf32> to vector<1x16x16xf32>
    tpu.vector_store %arg7[%c1_150, %c0_151, %c208_152], %233 {strides = array<i32>} : memref<2x16x256xf32, #tpu.memory_space<vmem>>, vector<1x16x16xf32>,
    %234 = vector.extract_strided_slice %113 {offsets = [0, 595], sizes = [16, 16], strides = [1, 1]} : vector<16x648xf32> to vector<16x16xf32>
    %c1_153 = arith.constant 1 : index
    %c0_154 = arith.constant 0 : index
    %c224_155 = arith.constant 224 : index
    %235 = vector.load %arg7[%c1_153, %c0_154, %c224_155] : memref<2x16x256xf32, #tpu.memory_space<vmem>>, vector<1x16x16xf32>
    %236 = vector.shape_cast %235 : vector<1x16x16xf32> to vector<16x16xf32>
    %237 = vector.shape_cast %234 : vector<16x16xf32> to vector<1x16x16xf32>
    tpu.vector_store %arg7[%c1_153, %c0_154, %c224_155], %237 {strides = array<i32>} : memref<2x16x256xf32, #tpu.memory_space<vmem>>, vector<1x16x16xf32>,
    %238 = vector.extract_strided_slice %113 {offsets = [0, 613], sizes = [16, 16], strides = [1, 1]} : vector<16x648xf32> to vector<16x16xf32>
    %c1_156 = arith.constant 1 : index
    %c0_157 = arith.constant 0 : index
    %c240_158 = arith.constant 240 : index
    %239 = vector.load %arg7[%c1_156, %c0_157, %c240_158] : memref<2x16x256xf32, #tpu.memory_space<vmem>>, vector<1x16x16xf32>
    %240 = vector.shape_cast %239 : vector<1x16x16xf32> to vector<16x16xf32>
    %241 = vector.shape_cast %238 : vector<16x16xf32> to vector<1x16x16xf32>
    tpu.vector_store %arg7[%c1_156, %c0_157, %c240_158], %241 {strides = array<i32>} : memref<2x16x256xf32, #tpu.memory_space<vmem>>, vector<1x16x16xf32>,
    return
  }
  func.func @transform_0(%arg0: i32) -> (i32, i32, i32) {
    %c0_i32 = arith.constant 0 : i32
    %c0_i32_0 = arith.constant 0 : i32
    %c0_i32_1 = arith.constant 0 : i32
    return %arg0, %c0_i32, %c0_i32_0 : i32, i32, i32
  }
  func.func @transform_1(%arg0: i32) -> (i32, i32) {
    %c0_i32 = arith.constant 0 : i32
    %c0_i32_0 = arith.constant 0 : i32
    %c0_i32_1 = arith.constant 0 : i32
    return %c0_i32, %c0_i32_0 : i32, i32
  }
  func.func @transform_2(%arg0: i32) -> (i32, i32, i32) {
    %c0_i32 = arith.constant 0 : i32
    %c0_i32_0 = arith.constant 0 : i32
    %c0_i32_1 = arith.constant 0 : i32
    %c0_i32_2 = arith.constant 0 : i32
    return %c0_i32, %c0_i32_0, %c0_i32_1 : i32, i32, i32
  }
  func.func @transform_3(%arg0: i32) -> (i32, i32) {
    %c0_i32 = arith.constant 0 : i32
    %c0_i32_0 = arith.constant 0 : i32
    %c0_i32_1 = arith.constant 0 : i32
    return %c0_i32, %c0_i32_0 : i32, i32
  }
  func.func @transform_4(%arg0: i32) -> (i32, i32, i32) {
    %c0_i32 = arith.constant 0 : i32
    %c0_i32_0 = arith.constant 0 : i32
    %c0_i32_1 = arith.constant 0 : i32
    %c0_i32_2 = arith.constant 0 : i32
    return %c0_i32, %c0_i32_0, %c0_i32_1 : i32, i32, i32
  }
  func.func @transform_5(%arg0: i32) -> (i32, i32) {
    %c0_i32 = arith.constant 0 : i32
    %c0_i32_0 = arith.constant 0 : i32
    %c0_i32_1 = arith.constant 0 : i32
    return %c0_i32, %c0_i32_0 : i32, i32
  }
  func.func @transform_6(%arg0: i32) -> (i32, i32, i32) {
    %c0_i32 = arith.constant 0 : i32
    %c0_i32_0 = arith.constant 0 : i32
    %c0_i32_1 = arith.constant 0 : i32
    return %arg0, %c0_i32, %c0_i32_0 : i32, i32, i32
  }
}

</mosaic_0001>

<llo_original>
// kernel: tile.9
$region0: #{tile.9}
  %s0 = inlined_call_operand.vmem [shape: f32[2,324], index: 0, kind: input, shape index: {}]
  %s1 = inlined_call_operand.vmem [shape: f32[1,648], index: 1, kind: output, shape index: {}]
  $region1: #{tile.9} parent=0
    #allocation0 [shape = 'u8[24576]{0}', space=vmem, size = 0x6000, scoped, tag = 'scoped mem for output reshape']
    #allocation1 [shape = 'u8[12288]{0}', space=vmem, size = 0x3000, scoped, tag = 'scoped mem for input reshape']
    %s3 = sshllo.u32 0, 2
    %s4 = smul.addr 2, 2
    %s5 = scalar_lea.vmem %s0, %s4
    %v6 = vld [vmem:[%s5] sm:%s3]
    %s7 = scalar_lea.vmem [#allocation1], 16
    %8 = vst [vmem:[%s7] sm:%s3] %v6
    %s9 = scalar_lea.vmem %s0, 2
    %v10 = vld [vmem:[%s9] sm:%s3]
    %s11 = scalar_lea.vmem [#allocation1], 8
    %12 = vst [vmem:[%s11] sm:%s3] %v10
    %v13 = vld [vmem:[%s0] sm:%s3]
    %14 = vst [vmem:[#allocation1] sm:%s3] %v13
    %s15 = scalar_lea.vmem [#allocation1], 16
    %v16 = vld [vmem:[%s15] sm:$0x1]
    %vm17 = vcmask 556032
    %s18 = scalar_lea.vmem [#allocation0], 16
    %19 = vst.msk [vmem:[%s18] sm:$0x1] %vm17, %v16
    %s20 = smov 3
    %v21 = vld [vmem:[#allocation1] ss:$8 sm:%s20]
    %22 = vst [vmem:[#allocation0] ss:$8 sm:$0x3] %v21
    %s23 = scalar_lea.vmem [#allocation1], 17
    %v24 = vld [vmem:[%s23] sm:$0x1]
    %s25 = scalar_lea.vmem [#allocation1], 17
    %s26 = smov 3
    %v27 = vld [vmem:[%s25] ss:$-16 sm:%s26]
    %s28 = scalar_lea.vmem [#allocation1], 7
    %v29 = vld [vmem:[%s28] sm:$0x4]
    %vm30 = vcmask 1042434
    %v31 = vsel %vm30, %v29, %v27
    %vm32 = vcmask 490496
    %v33 = vsel %vm32, %v31, %v24
    %34 = vrot.lane.b32.xlu0 %v33, 68
    %v35 = vpop.permute.xlu0 %34
    %vm36 = vcmask 64512
    %s37 = scalar_lea.vmem [#allocation0], 40
    %38 = vst.msk [vmem:[%s37] sm:$0x1] %vm36, %v35
    %vm39 = vcmask 1048096
    %s40 = scalar_lea.vmem [#allocation0], 32
    %41 = vst.msk [vmem:[%s40] ss:$-16 sm:$0x3] %vm39, %v35
    %s42 = scalar_lea.vmem [#allocation0], 22
    %43 = vst.msk [vmem:[%s42] sm:$0x4] %vm39, %v35
    %s44 = scalar_lea.vmem [#allocation1], 9
    %s45 = smov 3
    %v46 = vld [vmem:[%s44] ss:$-8 sm:%s45]
    %47 = vrot.lane.b32.xlu0 %v46, 68
    %v48 = vpop.permute.xlu0 %47
    %vm49 = vcmask 556032
    %s50 = scalar_lea.vmem [#allocation0], 32
    %51 = vst.msk [vmem:[%s50] ss:$-8 sm:$0x3] %vm49, %v48
    %s53 = sshllo.u32 0, 1
    %v55 = vld [vmem:[#allocation0] sm:%s53]
    %s56 = sshllo.u32 0, 1
    %57 = vst [vmem:[%s1] sm:%s56] %v55
    %s58 = scalar_lea.vmem [#allocation0], 8
    %v59 = vld [vmem:[%s58] sm:%s53]
    %s60 = sshllo.u32 0, 1
    %s61 = scalar_lea.vmem %s1, 1
    %62 = vst [vmem:[%s61] sm:%s60] %v59
    %s63 = scalar_lea.vmem [#allocation0], 16
    %v64 = vld [vmem:[%s63] sm:%s53]
    %s65 = sshllo.u32 0, 1
    %s66 = smul.addr 1, 2
    %s67 = scalar_lea.vmem %s1, %s66
    %68 = vst [vmem:[%s67] sm:%s65] %v64
    %s69 = scalar_lea.vmem [#allocation0], 24
    %v70 = vld [vmem:[%s69] sm:%s53]
    %s71 = sshllo.u32 0, 1
    %s72 = smul.addr 1, 3
    %s73 = scalar_lea.vmem %s1, %s72
    %74 = vst [vmem:[%s73] sm:%s71] %v70
    %s75 = scalar_lea.vmem [#allocation0], 32
    %v76 = vld [vmem:[%s75] sm:%s53]
    %s77 = sshllo.u32 0, 1
    %s78 = smul.addr 1, 4
    %s79 = scalar_lea.vmem %s1, %s78
    %80 = vst [vmem:[%s79] sm:%s77] %v76
    %s81 = scalar_lea.vmem [#allocation0], 40
    %v82 = vld [vmem:[%s81] sm:%s53]
    %s83 = sshllo.u32 0, 1
    %s84 = smul.addr 1, 5
    %s85 = scalar_lea.vmem %s1, %s84
    %86 = vst [vmem:[%s85] sm:%s83] %v82

// kernel: tile.8
$region0: #{tile.8}
  #allocation0 [shape = 's32[1]{0}', space=sflag, size = 0x4, scoped, tag = 'scoped memory for tile.8']
  %s0 = inlined_call_operand.vmem [shape: f32[324], index: 0, kind: input, shape index: {}]
  %s1 = inlined_call_operand.vmem [shape: f32[2,324], index: 1, kind: output, shape index: {}]
  // Predicated region
  $region2: #{tile.8} parent=0 // pred_check
    _
  $region3: #{tile.8} parent=0 // pred_check_branch
    %3 = sbr.rel (0) target = $region5
  $region4: #{tile.8} parent=0 // pred_region
    _
  $region5: #{tile.8} parent=0 // pred_fallthru
    _
  %v4 = vld [vmem:[%s0] ss:$0 sm:$0xff]
  %5 = vst [vmem:[%s1] sm:$0x3] %v4
  %s6 = scalar_lea.vmem %s0, 1
  %v7 = vld [vmem:[%s6] ss:$0 sm:$0xff]
  %s8 = scalar_lea.vmem %s1, 2
  %9 = vst [vmem:[%s8] sm:$0x3] %v7
  %s10 = scalar_lea.vmem %s0, 2
  %v11 = vld [vmem:[%s10] ss:$0 sm:$0xff]
  %s12 = scalar_lea.vmem %s1, 4
  %13 = vst [vmem:[%s12] sm:$0x3] %v11

// kernel: _lambda_.1
$region0: #{_lambda_.1}
  #allocation0 [shape = 'u32[]', space=smem, size = 0x4, offset = 0x4, fixed_abs, tag = 'smem constant byte address 0x4 - core index']
  #allocation1 [shape = 'u32[144,128]{1,0:T(1,128)}', space=vmem, size = 0x12000, scoped, tag = 'internal scratch']
  %s0 = inlined_call_operand.vmem [shape: bf16[1,4,686], index: 0, kind: input, shape index: {}]
  %s1 = inlined_call_operand.vmem [shape: f32[1,648], index: 1, kind: input, shape index: {}]
  %s2 = inlined_call_operand.vmem [shape: bf16[9,8,4], index: 2, kind: input, shape index: {}]
  %s3 = inlined_call_operand.vmem [shape: f32[8,1], index: 3, kind: input, shape index: {}]
  %s4 = inlined_call_operand.vmem [shape: bf16[9,16,8], index: 4, kind: input, shape index: {}]
  %s5 = inlined_call_operand.vmem [shape: f32[16,1], index: 5, kind: input, shape index: {}]
  %s6 = inlined_call_operand.vmem [shape: f32[2,16,256], index: 6, kind: output, shape index: {}]
  %s7 = sld [smem:[#allocation0]]
  $region34: #{_lambda_.1} parent=0
    _
  %s9 = ssub.s32 1, %s7
  %s10 = scalar_select 0, %s9, %s7
  // Predicated region
  $region2: #{_lambda_.1} parent=0 // pred_check
    _
  $region3: #{_lambda_.1} parent=0 // pred_check_branch
    %12 = sbr.rel (0) target = $region5
  $region4: #{_lambda_.1} parent=0 // pred_region
    _
  $region5: #{_lambda_.1} parent=0 // pred_fallthru
    _
  // Predicated region
  $region6: #{_lambda_.1} parent=0 // pred_check
    _
  $region7: #{_lambda_.1} parent=0 // pred_check_branch
    %14 = sbr.rel (0) target = $region9
  $region8: #{_lambda_.1} parent=0 // pred_region
    _
  $region9: #{_lambda_.1} parent=0 // pred_fallthru
    _
  // Predicated region
  $region10: #{_lambda_.1} parent=0 // pred_check
    _
  $region11: #{_lambda_.1} parent=0 // pred_check_branch
    %16 = sbr.rel (0) target = $region13
  $region12: #{_lambda_.1} parent=0 // pred_region
    _
  $region13: #{_lambda_.1} parent=0 // pred_fallthru
    _
  // Predicated region
  $region14: #{_lambda_.1} parent=0 // pred_check
    _
  $region15: #{_lambda_.1} parent=0 // pred_check_branch
    %18 = sbr.rel (0) target = $region17
  $region16: #{_lambda_.1} parent=0 // pred_region
    _
  $region17: #{_lambda_.1} parent=0 // pred_fallthru
    _
  // Predicated region
  $region18: #{_lambda_.1} parent=0 // pred_check
    _
  $region19: #{_lambda_.1} parent=0 // pred_check_branch
    %20 = sbr.rel (0) target = $region21
  $region20: #{_lambda_.1} parent=0 // pred_region
    _
  $region21: #{_lambda_.1} parent=0 // pred_fallthru
    _
  // Predicated region
  $region22: #{_lambda_.1} parent=0 // pred_check
    _
  $region23: #{_lambda_.1} parent=0 // pred_check_branch
    %22 = sbr.rel (0) target = $region25
  $region24: #{_lambda_.1} parent=0 // pred_region
    _
  $region25: #{_lambda_.1} parent=0 // pred_fallthru
    _
  %v24 = vld [vmem:[%s1] sm:$0x3f]
  %vm25 = vcmp.ne.f32.partialorder %v24, 0.0
  %v26 = vld [vmem:[%s0] sm:$0xff]
  %v27 = vld [vmem:[%s0 + $0x8] sm:$0xf]
  %v28 = vld [vmem:[%s3] sm:$0xff]
  %v29 = vld [vmem:[%s2] sm:$0xf]
  %s30 = scalar_lea.vmem %s2, 4
  %v31 = vld [vmem:[%s30] sm:$0xf]
  %v34 = vcombine.high %v26, %v26
  %v36 = vunpack.c.l.s4 1983009808
  %v37 = vunpack.c.0.s8 %v36
  %v38 = vlaneseq
  %v39 = vshrl.u32 %v38, 7
  %v40 = vsub.s32 %v37, %v39
  %v41 = vrot.slane %v26, %v40
  %v43 = vunpack.c.l.s4 1983009808
  %v44 = vunpack.c.0.s8 %v43
  %v45 = vlaneseq
  %v46 = vshrl.u32 %v45, 7
  %v47 = vsub.s32 %v44, %v46
  %v48 = vrot.slane %v34, %v47
  %v49 = vcombine.high %v41, %v41
  %v50 = vcombine.high %v48, %v48
  %v52 = vunpack.c.l.s4 1983009808
  %v53 = vunpack.c.0.s8 %v52
  %v54 = vlaneseq
  %v55 = vshrl.u32 %v54, 7
  %v56 = vsub.s32 %v53, %v55
  %v57 = vrot.slane %v27, %v56
  %v58 = vcombine.high %v57, %v57
  %59 = vrot.lane.b32.xlu0 %v41, 127
  %v60 = vpop.permute.xlu0 %59
  %61 = vrot.lane.b32.xlu0 %v49, 127
  %v62 = vpop.permute.xlu0 %61
  %63 = vrot.lane.b32.xlu0 %v48, 127
  %v64 = vpop.permute.xlu0 %63
  %65 = vrot.lane.b32.xlu0 %v50, 127
  %v66 = vpop.permute.xlu0 %65
  %67 = vrot.lane.b32.xlu0 %v57, 127
  %v68 = vpop.permute.xlu0 %67
  %69 = vrot.lane.b32.xlu0 %v58, 127
  %v70 = vpop.permute.xlu0 %69
  %vm71 = vcmask 1039360
  %v72 = vsel %vm71, %v60, %v62
  %v73 = vsel %vm71, %v62, %v64
  %v74 = vsel %vm71, %v64, %v66
  %v75 = vsel %vm71, %v66, %v68
  %v76 = vsel %vm71, %v68, %v70
  %vm77 = vcmask 31744
  %v79 = vsel %vm77, %v31, 0
  %vm81 = vcmask 1041408
  %v83 = vsel %vm81, %v72, 0
  %v86 = vsel %vm81, %v73, 0
  %v89 = vsel %vm81, %v74, 0
  %v92 = vsel %vm81, %v75, 0
  %v95 = vsel %vm81, %v76, 0
  %v98 = vsel %vm81, %v70, 0
  %100 = vmatprep.subr.bf16.mxu0 %v86
  %101 = vmatpush1.bf16.msra.mxu0 %v83
  %102 = vmatprep.subr.bf16.mxu0 0
  %103 = vmatpush1.bf16.msra.mxu0 0
  %104 = vmatprep.subr.bf16.mxu0 0
  %105 = vmatpush1.bf16.msra.mxu0 0
  %106 = vmatprep.subr.bf16.mxu0 0
  %107 = vmatpush1.bf16.msra.mxu0 0
  %108 = vmatprep.subr.bf16.mxu0 0
  %109 = vmatpush1.bf16.msra.mxu0 0
  %110 = vmatprep.subr.bf16.mxu0 0
  %111 = vmatpush1.bf16.msra.mxu0 0
  %112 = vmatprep.subr.bf16.mxu0 0
  %113 = vmatpush1.bf16.msra.mxu0 0
  %114 = vmatprep.subr.bf16.mxu0 0
  %115 = vmatpush1.bf16.msra.mxu0 0
  %116 = vmatprep.subr.bf16.mxu0 0
  %117 = vmatpush1.bf16.msra.mxu0 0
  %118 = vmatprep.subr.bf16.mxu0 0
  %119 = vmatpush1.bf16.msra.mxu0 0
  %120 = vmatprep.subr.bf16.mxu0 0
  %121 = vmatpush1.bf16.msra.mxu0 0
  %122 = vmatprep.subr.bf16.mxu0 0
  %123 = vmatpush1.bf16.msra.mxu0 0
  %124 = vmatprep.subr.bf16.mxu0 0
  %125 = vmatpush1.bf16.msra.mxu0 0
  %126 = vmatprep.subr.bf16.mxu0 0
  %127 = vmatpush1.bf16.msra.mxu0 0
  %128 = vmatprep.subr.bf16.mxu0 0
  %129 = vmatpush1.bf16.msra.mxu0 0
  %130 = vmatprep.subr.bf16.mxu0 0
  %131 = vmatpush1.bf16.msra.mxu0 0
  %132 = vmatprep.mubr.bf16.mxu0 0
  %133 = vmatmul.mubr.bf16.gmra.mrb[0].mxu0 %v79
  %v134 = vpop.f32.mrb[0].mxu0
  %v135 = vadd.f32 0.0, %v134
  %v136 = vpop.f32.mrb[0].mxu0
  %v137 = vadd.f32 0.0, %v136
  %v138 = vpop.f32.mrb[0].mxu0
  %v139 = vpop.f32.mrb[0].mxu0
  %140 = vdwg.mxu0
  %141 = vmatprep.subr.bf16.mxu0 %v92
  %142 = vmatpush1.bf16.msra.mxu0 %v89
  %143 = vmatprep.subr.bf16.mxu0 0
  %144 = vmatpush1.bf16.msra.mxu0 0
  %145 = vmatprep.subr.bf16.mxu0 0
  %146 = vmatpush1.bf16.msra.mxu0 0
  %147 = vmatprep.subr.bf16.mxu0 0
  %148 = vmatpush1.bf16.msra.mxu0 0
  %149 = vmatprep.subr.bf16.mxu0 0
  %150 = vmatpush1.bf16.msra.mxu0 0
  %151 = vmatprep.subr.bf16.mxu0 0
  %152 = vmatpush1.bf16.msra.mxu0 0
  %153 = vmatprep.subr.bf16.mxu0 0
  %154 = vmatpush1.bf16.msra.mxu0 0
  %155 = vmatprep.subr.bf16.mxu0 0
  %156 = vmatpush1.bf16.msra.mxu0 0
  %157 = vmatprep.subr.bf16.mxu0 0
  %158 = vmatpush1.bf16.msra.mxu0 0
  %159 = vmatprep.subr.bf16.mxu0 0
  %160 = vmatpush1.bf16.msra.mxu0 0
  %161 = vmatprep.subr.bf16.mxu0 0
  %162 = vmatpush1.bf16.msra.mxu0 0
  %163 = vmatprep.subr.bf16.mxu0 0
  %164 = vmatpush1.bf16.msra.mxu0 0
  %165 = vmatprep.subr.bf16.mxu0 0
  %166 = vmatpush1.bf16.msra.mxu0 0
  %167 = vmatprep.subr.bf16.mxu0 0
  %168 = vmatpush1.bf16.msra.mxu0 0
  %169 = vmatprep.subr.bf16.mxu0 0
  %170 = vmatpush1.bf16.msra.mxu0 0
  %171 = vmatprep.subr.bf16.mxu0 0
  %172 = vmatpush1.bf16.msra.mxu0 0
  %173 = vmatprep.mubr.bf16.mxu0 0
  %174 = vmatmul.mubr.bf16.gmra.mrb[0].mxu0 %v79
  %v175 = vpop.f32.mrb[0].mxu0
  %v176 = vadd.f32 0.0, %v175
  %v177 = vpop.f32.mrb[0].mxu0
  %v178 = vadd.f32 0.0, %v177
  %v179 = vpop.f32.mrb[0].mxu0
  %v180 = vpop.f32.mrb[0].mxu0
  %181 = vdwg.mxu0
  %182 = vmatprep.subr.bf16.mxu0 %v98
  %183 = vmatpush1.bf16.msra.mxu0 %v95
  %184 = vmatprep.subr.bf16.mxu0 0
  %185 = vmatpush1.bf16.msra.mxu0 0
  %186 = vmatprep.subr.bf16.mxu0 0
  %187 = vmatpush1.bf16.msra.mxu0 0
  %188 = vmatprep.subr.bf16.mxu0 0
  %189 = vmatpush1.bf16.msra.mxu0 0
  %190 = vmatprep.subr.bf16.mxu0 0
  %191 = vmatpush1.bf16.msra.mxu0 0
  %192 = vmatprep.subr.bf16.mxu0 0
  %193 = vmatpush1.bf16.msra.mxu0 0
  %194 = vmatprep.subr.bf16.mxu0 0
  %195 = vmatpush1.bf16.msra.mxu0 0
  %196 = vmatprep.subr.bf16.mxu0 0
  %197 = vmatpush1.bf16.msra.mxu0 0
  %198 = vmatprep.subr.bf16.mxu0 0
  %199 = vmatpush1.bf16.msra.mxu0 0
  %200 = vmatprep.subr.bf16.mxu0 0
  %201 = vmatpush1.bf16.msra.mxu0 0
  %202 = vmatprep.subr.bf16.mxu0 0
  %203 = vmatpush1.bf16.msra.mxu0 0
  %204 = vmatprep.subr.bf16.mxu0 0
  %205 = vmatpush1.bf16.msra.mxu0 0
  %206 = vmatprep.subr.bf16.mxu0 0
  %207 = vmatpush1.bf16.msra.mxu0 0
  %208 = vmatprep.subr.bf16.mxu0 0
  %209 = vmatpush1.bf16.msra.mxu0 0
  %210 = vmatprep.subr.bf16.mxu0 0
  %211 = vmatpush1.bf16.msra.mxu0 0
  %212 = vmatprep.subr.bf16.mxu0 0
  %213 = vmatpush1.bf16.msra.mxu0 0
  %214 = vmatprep.mubr.bf16.mxu0 0
  %215 = vmatmul.mubr.bf16.gmra.mrb[0].mxu0 %v79
  %v216 = vpop.f32.mrb[0].mxu0
  %v217 = vadd.f32 0.0, %v216
  %v218 = vpop.f32.mrb[0].mxu0
  %v219 = vadd.f32 0.0, %v218
  %v220 = vpop.f32.mrb[0].mxu0
  %v221 = vpop.f32.mrb[0].mxu0
  %222 = vdwg.mxu0
  %v224 = vsel %vm77, %v29, 0
  %v227 = vsel %vm81, %v41, 0
  %v230 = vsel %vm81, %v49, 0
  %v233 = vsel %vm81, %v48, 0
  %v236 = vsel %vm81, %v50, 0
  %v239 = vsel %vm81, %v57, 0
  %v242 = vsel %vm81, %v58, 0
  %244 = vmatprep.subr.bf16.mxu0 %v230
  %245 = vmatpush1.bf16.msra.mxu0 %v227
  %246 = vmatprep.subr.bf16.mxu0 0
  %247 = vmatpush1.bf16.msra.mxu0 0
  %248 = vmatprep.subr.bf16.mxu0 0
  %249 = vmatpush1.bf16.msra.mxu0 0
  %250 = vmatprep.subr.bf16.mxu0 0
  %251 = vmatpush1.bf16.msra.mxu0 0
  %252 = vmatprep.subr.bf16.mxu0 0
  %253 = vmatpush1.bf16.msra.mxu0 0
  %254 = vmatprep.subr.bf16.mxu0 0
  %255 = vmatpush1.bf16.msra.mxu0 0
  %256 = vmatprep.subr.bf16.mxu0 0
  %257 = vmatpush1.bf16.msra.mxu0 0
  %258 = vmatprep.subr.bf16.mxu0 0
  %259 = vmatpush1.bf16.msra.mxu0 0
  %260 = vmatprep.subr.bf16.mxu0 0
  %261 = vmatpush1.bf16.msra.mxu0 0
  %262 = vmatprep.subr.bf16.mxu0 0
  %263 = vmatpush1.bf16.msra.mxu0 0
  %264 = vmatprep.subr.bf16.mxu0 0
  %265 = vmatpush1.bf16.msra.mxu0 0
  %266 = vmatprep.subr.bf16.mxu0 0
  %267 = vmatpush1.bf16.msra.mxu0 0
  %268 = vmatprep.subr.bf16.mxu0 0
  %269 = vmatpush1.bf16.msra.mxu0 0
  %270 = vmatprep.subr.bf16.mxu0 0
  %271 = vmatpush1.bf16.msra.mxu0 0
  %272 = vmatprep.subr.bf16.mxu0 0
  %273 = vmatpush1.bf16.msra.mxu0 0
  %274 = vmatprep.subr.bf16.mxu0 0
  %275 = vmatpush1.bf16.msra.mxu0 0
  %276 = vmatprep.mubr.bf16.mxu0 0
  %277 = vmatmul.mubr.bf16.gmra.mrb[0].mxu0 %v224
  %v278 = vpop.f32.mrb[0].mxu0
  %v279 = vadd.f32 %v135, %v278
  %v280 = vpop.f32.mrb[0].mxu0
  %v281 = vadd.f32 %v137, %v280
  %v282 = vpop.f32.mrb[0].mxu0
  %v283 = vpop.f32.mrb[0].mxu0
  %284 = vdwg.mxu0
  %285 = vmatprep.subr.bf16.mxu0 %v236
  %286 = vmatpush1.bf16.msra.mxu0 %v233
  %287 = vmatprep.subr.bf16.mxu0 0
  %288 = vmatpush1.bf16.msra.mxu0 0
  %289 = vmatprep.subr.bf16.mxu0 0
  %290 = vmatpush1.bf16.msra.mxu0 0
  %291 = vmatprep.subr.bf16.mxu0 0
  %292 = vmatpush1.bf16.msra.mxu0 0
  %293 = vmatprep.subr.bf16.mxu0 0
  %294 = vmatpush1.bf16.msra.mxu0 0
  %295 = vmatprep.subr.bf16.mxu0 0
  %296 = vmatpush1.bf16.msra.mxu0 0
  %297 = vmatprep.subr.bf16.mxu0 0
  %298 = vmatpush1.bf16.msra.mxu0 0
  %299 = vmatprep.subr.bf16.mxu0 0
  %300 = vmatpush1.bf16.msra.mxu0 0
  %301 = vmatprep.subr.bf16.mxu0 0
  %302 = vmatpush1.bf16.msra.mxu0 0
  %303 = vmatprep.subr.bf16.mxu0 0
  %304 = vmatpush1.bf16.msra.mxu0 0
  %305 = vmatprep.subr.bf16.mxu0 0
  %306 = vmatpush1.bf16.msra.mxu0 0
  %307 = vmatprep.subr.bf16.mxu0 0
  %308 = vmatpush1.bf16.msra.mxu0 0
  %309 = vmatprep.subr.bf16.mxu0 0
  %310 = vmatpush1.bf16.msra.mxu0 0
  %311 = vmatprep.subr.bf16.mxu0 0
  %312 = vmatpush1.bf16.msra.mxu0 0
  %313 = vmatprep.subr.bf16.mxu0 0
  %314 = vmatpush1.bf16.msra.mxu0 0
  %315 = vmatprep.subr.bf16.mxu0 0
  %316 = vmatpush1.bf16.msra.mxu0 0
  %317 = vmatprep.mubr.bf16.mxu0 0
  %318 = vmatmul.mubr.bf16.gmra.mrb[0].mxu0 %v224
  %v319 = vpop.f32.mrb[0].mxu0
  %v320 = vadd.f32 %v176, %v319
  %v321 = vpop.f32.mrb[0].mxu0
  %v322 = vadd.f32 %v178, %v321
  %v323 = vpop.f32.mrb[0].mxu0
  %v324 = vpop.f32.mrb[0].mxu0
  %325 = vdwg.mxu0
  %326 = vmatprep.subr.bf16.mxu0 %v242
  %327 = vmatpush1.bf16.msra.mxu0 %v239
  %328 = vmatprep.subr.bf16.mxu0 0
  %329 = vmatpush1.bf16.msra.mxu0 0
  %330 = vmatprep.subr.bf16.mxu0 0
  %331 = vmatpush1.bf16.msra.mxu0 0
  %332 = vmatprep.subr.bf16.mxu0 0
  %333 = vmatpush1.bf16.msra.mxu0 0
  %334 = vmatprep.subr.bf16.mxu0 0
  %335 = vmatpush1.bf16.msra.mxu0 0
  %336 = vmatprep.subr.bf16.mxu0 0
  %337 = vmatpush1.bf16.msra.mxu0 0
  %338 = vmatprep.subr.bf16.mxu0 0
  %339 = vmatpush1.bf16.msra.mxu0 0
  %340 = vmatprep.subr.bf16.mxu0 0
  %341 = vmatpush1.bf16.msra.mxu0 0
  %342 = vmatprep.subr.bf16.mxu0 0
  %343 = vmatpush1.bf16.msra.mxu0 0
  %344 = vmatprep.subr.bf16.mxu0 0
  %345 = vmatpush1.bf16.msra.mxu0 0
  %346 = vmatprep.subr.bf16.mxu0 0
  %347 = vmatpush1.bf16.msra.mxu0 0
  %348 = vmatprep.subr.bf16.mxu0 0
  %349 = vmatpush1.bf16.msra.mxu0 0
  %350 = vmatprep.subr.bf16.mxu0 0
  %351 = vmatpush1.bf16.msra.mxu0 0
  %352 = vmatprep.subr.bf16.mxu0 0
  %353 = vmatpush1.bf16.msra.mxu0 0
  %354 = vmatprep.subr.bf16.mxu0 0
  %355 = vmatpush1.bf16.msra.mxu0 0
  %356 = vmatprep.subr.bf16.mxu0 0
  %357 = vmatpush1.bf16.msra.mxu0 0
  %358 = vmatprep.mubr.bf16.mxu0 0
  %359 = vmatmul.mubr.bf16.gmra.mrb[0].mxu0 %v224
  %v360 = vpop.f32.mrb[0].mxu0
  %v361 = vadd.f32 %v217, %v360
  %v362 = vpop.f32.mrb[0].mxu0
  %v363 = vadd.f32 %v219, %v362
  %v364 = vpop.f32.mrb[0].mxu0
  %v365 = vpop.f32.mrb[0].mxu0
  %366 = vdwg.mxu0
  %s367 = scalar_lea.vmem %s2, 8
  %v368 = vld [vmem:[%s367] sm:$0xf]
  %369 = vrot.lane.b32.xlu0 %v41, 126
  %v370 = vpop.permute.xlu0 %369
  %371 = vrot.lane.b32.xlu0 %v49, 126
  %v372 = vpop.permute.xlu0 %371
  %373 = vrot.lane.b32.xlu0 %v48, 126
  %v374 = vpop.permute.xlu0 %373
  %375 = vrot.lane.b32.xlu0 %v50, 126
  %v376 = vpop.permute.xlu0 %375
  %377 = vrot.lane.b32.xlu0 %v57, 126
  %v378 = vpop.permute.xlu0 %377
  %379 = vrot.lane.b32.xlu0 %v58, 126
  %v380 = vpop.permute.xlu0 %379
  %vm381 = vcmask 1031168
  %v382 = vsel %vm381, %v370, %v372
  %v383 = vsel %vm381, %v372, %v374
  %v384 = vsel %vm381, %v374, %v376
  %v385 = vsel %vm381, %v376, %v378
  %v386 = vsel %vm381, %v378, %v380
  %v388 = vsel %vm77, %v368, 0
  %v391 = vsel %vm81, %v382, 0
  %v394 = vsel %vm81, %v383, 0
  %v397 = vsel %vm81, %v384, 0
  %v400 = vsel %vm81, %v385, 0
  %v403 = vsel %vm81, %v386, 0
  %v406 = vsel %vm81, %v380, 0
  %408 = vmatprep.subr.bf16.mxu0 %v394
  %409 = vmatpush1.bf16.msra.mxu0 %v391
  %410 = vmatprep.subr.bf16.mxu0 0
  %411 = vmatpush1.bf16.msra.mxu0 0
  %412 = vmatprep.subr.bf16.mxu0 0
  %413 = vmatpush1.bf16.msra.mxu0 0
  %414 = vmatprep.subr.bf16.mxu0 0
  %415 = vmatpush1.bf16.msra.mxu0 0
  %416 = vmatprep.subr.bf16.mxu0 0
  %417 = vmatpush1.bf16.msra.mxu0 0
  %418 = vmatprep.subr.bf16.mxu0 0
  %419 = vmatpush1.bf16.msra.mxu0 0
  %420 = vmatprep.subr.bf16.mxu0 0
  %421 = vmatpush1.bf16.msra.mxu0 0
  %422 = vmatprep.subr.bf16.mxu0 0
  %423 = vmatpush1.bf16.msra.mxu0 0
  %424 = vmatprep.subr.bf16.mxu0 0
  %425 = vmatpush1.bf16.msra.mxu0 0
  %426 = vmatprep.subr.bf16.mxu0 0
  %427 = vmatpush1.bf16.msra.mxu0 0
  %428 = vmatprep.subr.bf16.mxu0 0
  %429 = vmatpush1.bf16.msra.mxu0 0
  %430 = vmatprep.subr.bf16.mxu0 0
  %431 = vmatpush1.bf16.msra.mxu0 0
  %432 = vmatprep.subr.bf16.mxu0 0
  %433 = vmatpush1.bf16.msra.mxu0 0
  %434 = vmatprep.subr.bf16.mxu0 0
  %435 = vmatpush1.bf16.msra.mxu0 0
  %436 = vmatprep.subr.bf16.mxu0 0
  %437 = vmatpush1.bf16.msra.mxu0 0
  %438 = vmatprep.subr.bf16.mxu0 0
  %439 = vmatpush1.bf16.msra.mxu0 0
  %440 = vmatprep.mubr.bf16.mxu0 0
  %441 = vmatmul.mubr.bf16.gmra.mrb[0].mxu0 %v388
  %v442 = vpop.f32.mrb[0].mxu0
  %v443 = vadd.f32 0.0, %v442
  %v444 = vpop.f32.mrb[0].mxu0
  %v445 = vadd.f32 0.0, %v444
  %v446 = vpop.f32.mrb[0].mxu0
  %v447 = vpop.f32.mrb[0].mxu0
  %448 = vdwg.mxu0
  %449 = vmatprep.subr.bf16.mxu0 %v400
  %450 = vmatpush1.bf16.msra.mxu0 %v397
  %451 = vmatprep.subr.bf16.mxu0 0
  %452 = vmatpush1.bf16.msra.mxu0 0
  %453 = vmatprep.subr.bf16.mxu0 0
  %454 = vmatpush1.bf16.msra.mxu0 0
  %455 = vmatprep.subr.bf16.mxu0 0
  %456 = vmatpush1.bf16.msra.mxu0 0
  %457 = vmatprep.subr.bf16.mxu0 0
  %458 = vmatpush1.bf16.msra.mxu0 0
  %459 = vmatprep.subr.bf16.mxu0 0
  %460 = vmatpush1.bf16.msra.mxu0 0
  %461 = vmatprep.subr.bf16.mxu0 0
  %462 = vmatpush1.bf16.msra.mxu0 0
  %463 = vmatprep.subr.bf16.mxu0 0
  %464 = vmatpush1.bf16.msra.mxu0 0
  %465 = vmatprep.subr.bf16.mxu0 0
  %466 = vmatpush1.bf16.msra.mxu0 0
  %467 = vmatprep.subr.bf16.mxu0 0
  %468 = vmatpush1.bf16.msra.mxu0 0
  %469 = vmatprep.subr.bf16.mxu0 0
  %470 = vmatpush1.bf16.msra.mxu0 0
  %471 = vmatprep.subr.bf16.mxu0 0
  %472 = vmatpush1.bf16.msra.mxu0 0
  %473 = vmatprep.subr.bf16.mxu0 0
  %474 = vmatpush1.bf16.msra.mxu0 0
  %475 = vmatprep.subr.bf16.mxu0 0
  %476 = vmatpush1.bf16.msra.mxu0 0
  %477 = vmatprep.subr.bf16.mxu0 0
  %478 = vmatpush1.bf16.msra.mxu0 0
  %479 = vmatprep.subr.bf16.mxu0 0
  %480 = vmatpush1.bf16.msra.mxu0 0
  %481 = vmatprep.mubr.bf16.mxu0 0
  %482 = vmatmul.mubr.bf16.gmra.mrb[0].mxu0 %v388
  %v483 = vpop.f32.mrb[0].mxu0
  %v484 = vadd.f32 0.0, %v483
  %v485 = vpop.f32.mrb[0].mxu0
  %v486 = vadd.f32 0.0, %v485
  %v487 = vpop.f32.mrb[0].mxu0
  %v488 = vpop.f32.mrb[0].mxu0
  %489 = vdwg.mxu0
  %490 = vmatprep.subr.bf16.mxu0 %v406
  %491 = vmatpush1.bf16.msra.mxu0 %v403
  %492 = vmatprep.subr.bf16.mxu0 0
  %493 = vmatpush1.bf16.msra.mxu0 0
  %494 = vmatprep.subr.bf16.mxu0 0
  %495 = vmatpush1.bf16.msra.mxu0 0
  %496 = vmatprep.subr.bf16.mxu0 0
  %497 = vmatpush1.bf16.msra.mxu0 0
  %498 = vmatprep.subr.bf16.mxu0 0
  %499 = vmatpush1.bf16.msra.mxu0 0
  %500 = vmatprep.subr.bf16.mxu0 0
  %501 = vmatpush1.bf16.msra.mxu0 0
  %502 = vmatprep.subr.bf16.mxu0 0
  %503 = vmatpush1.bf16.msra.mxu0 0
  %504 = vmatprep.subr.bf16.mxu0 0
  %505 = vmatpush1.bf16.msra.mxu0 0
  %506 = vmatprep.subr.bf16.mxu0 0
  %507 = vmatpush1.bf16.msra.mxu0 0
  %508 = vmatprep.subr.bf16.mxu0 0
  %509 = vmatpush1.bf16.msra.mxu0 0
  %510 = vmatprep.subr.bf16.mxu0 0
  %511 = vmatpush1.bf16.msra.mxu0 0
  %512 = vmatprep.subr.bf16.mxu0 0
  %513 = vmatpush1.bf16.msra.mxu0 0
  %514 = vmatprep.subr.bf16.mxu0 0
  %515 = vmatpush1.bf16.msra.mxu0 0
  %516 = vmatprep.subr.bf16.mxu0 0
  %517 = vmatpush1.bf16.msra.mxu0 0
  %518 = vmatprep.subr.bf16.mxu0 0
  %519 = vmatpush1.bf16.msra.mxu0 0
  %520 = vmatprep.subr.bf16.mxu0 0
  %521 = vmatpush1.bf16.msra.mxu0 0
  %522 = vmatprep.mubr.bf16.mxu0 0
  %523 = vmatmul.mubr.bf16.gmra.mrb[0].mxu0 %v388
  %v524 = vpop.f32.mrb[0].mxu0
  %v525 = vadd.f32 0.0, %v524
  %v526 = vpop.f32.mrb[0].mxu0
  %v527 = vadd.f32 0.0, %v526
  %v528 = vpop.f32.mrb[0].mxu0
  %v529 = vpop.f32.mrb[0].mxu0
  %530 = vdwg.mxu0
  %v531 = vadd.f32 %v279, %v443
  %v532 = vadd.f32 %v281, %v445
  %v533 = vadd.f32 %v320, %v484
  %v534 = vadd.f32 %v322, %v486
  %v535 = vadd.f32 %v361, %v525
  %v536 = vadd.f32 %v363, %v527
  %s537 = scalar_lea.vmem %s2, 12
  %v538 = vld [vmem:[%s537] sm:$0xf]
  %539 = vrot.lane.b32.xlu0 %v41, 110
  %v540 = vpop.permute.xlu0 %539
  %541 = vrot.lane.b32.xlu0 %v49, 110
  %v542 = vpop.permute.xlu0 %541
  %543 = vrot.lane.b32.xlu0 %v48, 110
  %v544 = vpop.permute.xlu0 %543
  %545 = vrot.lane.b32.xlu0 %v50, 110
  %v546 = vpop.permute.xlu0 %545
  %547 = vrot.lane.b32.xlu0 %v57, 110
  %v548 = vpop.permute.xlu0 %547
  %549 = vrot.lane.b32.xlu0 %v58, 110
  %v550 = vpop.permute.xlu0 %549
  %vm551 = vcmask 900096
  %v552 = vsel %vm551, %v540, %v542
  %v553 = vsel %vm551, %v542, %v544
  %v554 = vsel %vm551, %v544, %v546
  %v555 = vsel %vm551, %v546, %v548
  %v556 = vsel %vm551, %v548, %v550
  %v558 = vsel %vm77, %v538, 0
  %v561 = vsel %vm81, %v552, 0
  %v564 = vsel %vm81, %v553, 0
  %v567 = vsel %vm81, %v554, 0
  %v570 = vsel %vm81, %v555, 0
  %v573 = vsel %vm81, %v556, 0
  %v576 = vsel %vm81, %v550, 0
  %578 = vmatprep.subr.bf16.mxu0 %v564
  %579 = vmatpush1.bf16.msra.mxu0 %v561
  %580 = vmatprep.subr.bf16.mxu0 0
  %581 = vmatpush1.bf16.msra.mxu0 0
  %582 = vmatprep.subr.bf16.mxu0 0
  %583 = vmatpush1.bf16.msra.mxu0 0
  %584 = vmatprep.subr.bf16.mxu0 0
  %585 = vmatpush1.bf16.msra.mxu0 0
  %586 = vmatprep.subr.bf16.mxu0 0
  %587 = vmatpush1.bf16.msra.mxu0 0
  %588 = vmatprep.subr.bf16.mxu0 0
  %589 = vmatpush1.bf16.msra.mxu0 0
  %590 = vmatprep.subr.bf16.mxu0 0
  %591 = vmatpush1.bf16.msra.mxu0 0
  %592 = vmatprep.subr.bf16.mxu0 0
  %593 = vmatpush1.bf16.msra.mxu0 0
  %594 = vmatprep.subr.bf16.mxu0 0
  %595 = vmatpush1.bf16.msra.mxu0 0
  %596 = vmatprep.subr.bf16.mxu0 0
  %597 = vmatpush1.bf16.msra.mxu0 0
  %598 = vmatprep.subr.bf16.mxu0 0
  %599 = vmatpush1.bf16.msra.mxu0 0
  %600 = vmatprep.subr.bf16.mxu0 0
  %601 = vmatpush1.bf16.msra.mxu0 0
  %602 = vmatprep.subr.bf16.mxu0 0
  %603 = vmatpush1.bf16.msra.mxu0 0
  %604 = vmatprep.subr.bf16.mxu0 0
  %605 = vmatpush1.bf16.msra.mxu0 0
  %606 = vmatprep.subr.bf16.mxu0 0
  %607 = vmatpush1.bf16.msra.mxu0 0
  %608 = vmatprep.subr.bf16.mxu0 0
  %609 = vmatpush1.bf16.msra.mxu0 0
  %610 = vmatprep.mubr.bf16.mxu0 0
  %611 = vmatmul.mubr.bf16.gmra.mrb[0].mxu0 %v558
  %v612 = vpop.f32.mrb[0].mxu0
  %v613 = vadd.f32 0.0, %v612
  %v614 = vpop.f32.mrb[0].mxu0
  %v615 = vadd.f32 0.0, %v614
  %v616 = vpop.f32.mrb[0].mxu0
  %v617 = vpop.f32.mrb[0].mxu0
  %618 = vdwg.mxu0
  %619 = vmatprep.subr.bf16.mxu0 %v570
  %620 = vmatpush1.bf16.msra.mxu0 %v567
  %621 = vmatprep.subr.bf16.mxu0 0
  %622 = vmatpush1.bf16.msra.mxu0 0
  %623 = vmatprep.subr.bf16.mxu0 0
  %624 = vmatpush1.bf16.msra.mxu0 0
  %625 = vmatprep.subr.bf16.mxu0 0
  %626 = vmatpush1.bf16.msra.mxu0 0
  %627 = vmatprep.subr.bf16.mxu0 0
  %628 = vmatpush1.bf16.msra.mxu0 0
  %629 = vmatprep.subr.bf16.mxu0 0
  %630 = vmatpush1.bf16.msra.mxu0 0
  %631 = vmatprep.subr.bf16.mxu0 0
  %632 = vmatpush1.bf16.msra.mxu0 0
  %633 = vmatprep.subr.bf16.mxu0 0
  %634 = vmatpush1.bf16.msra.mxu0 0
  %635 = vmatprep.subr.bf16.mxu0 0
  %636 = vmatpush1.bf16.msra.mxu0 0
  %637 = vmatprep.subr.bf16.mxu0 0
  %638 = vmatpush1.bf16.msra.mxu0 0
  %639 = vmatprep.subr.bf16.mxu0 0
  %640 = vmatpush1.bf16.msra.mxu0 0
  %641 = vmatprep.subr.bf16.mxu0 0
  %642 = vmatpush1.bf16.msra.mxu0 0
  %643 = vmatprep.subr.bf16.mxu0 0
  %644 = vmatpush1.bf16.msra.mxu0 0
  %645 = vmatprep.subr.bf16.mxu0 0
  %646 = vmatpush1.bf16.msra.mxu0 0
  %647 = vmatprep.subr.bf16.mxu0 0
  %648 = vmatpush1.bf16.msra.mxu0 0
  %649 = vmatprep.subr.bf16.mxu0 0
  %650 = vmatpush1.bf16.msra.mxu0 0
  %651 = vmatprep.mubr.bf16.mxu0 0
  %652 = vmatmul.mubr.bf16.gmra.mrb[0].mxu0 %v558
  %v653 = vpop.f32.mrb[0].mxu0
  %v654 = vadd.f32 0.0, %v653
  %v655 = vpop.f32.mrb[0].mxu0
  %v656 = vadd.f32 0.0, %v655
  %v657 = vpop.f32.mrb[0].mxu0
  %v658 = vpop.f32.mrb[0].mxu0
  %659 = vdwg.mxu0
  %660 = vmatprep.subr.bf16.mxu0 %v576
  %661 = vmatpush1.bf16.msra.mxu0 %v573
  %662 = vmatprep.subr.bf16.mxu0 0
  %663 = vmatpush1.bf16.msra.mxu0 0
  %664 = vmatprep.subr.bf16.mxu0 0
  %665 = vmatpush1.bf16.msra.mxu0 0
  %666 = vmatprep.subr.bf16.mxu0 0
  %667 = vmatpush1.bf16.msra.mxu0 0
  %668 = vmatprep.subr.bf16.mxu0 0
  %669 = vmatpush1.bf16.msra.mxu0 0
  %670 = vmatprep.subr.bf16.mxu0 0
  %671 = vmatpush1.bf16.msra.mxu0 0
  %672 = vmatprep.subr.bf16.mxu0 0
  %673 = vmatpush1.bf16.msra.mxu0 0
  %674 = vmatprep.subr.bf16.mxu0 0
  %675 = vmatpush1.bf16.msra.mxu0 0
  %676 = vmatprep.subr.bf16.mxu0 0
  %677 = vmatpush1.bf16.msra.mxu0 0
  %678 = vmatprep.subr.bf16.mxu0 0
  %679 = vmatpush1.bf16.msra.mxu0 0
  %680 = vmatprep.subr.bf16.mxu0 0
  %681 = vmatpush1.bf16.msra.mxu0 0
  %682 = vmatprep.subr.bf16.mxu0 0
  %683 = vmatpush1.bf16.msra.mxu0 0
  %684 = vmatprep.subr.bf16.mxu0 0
  %685 = vmatpush1.bf16.msra.mxu0 0
  %686 = vmatprep.subr.bf16.mxu0 0
  %687 = vmatpush1.bf16.msra.mxu0 0
  %688 = vmatprep.subr.bf16.mxu0 0
  %689 = vmatpush1.bf16.msra.mxu0 0
  %690 = vmatprep.subr.bf16.mxu0 0
  %691 = vmatpush1.bf16.msra.mxu0 0
  %692 = vmatprep.mubr.bf16.mxu0 0
  %693 = vmatmul.mubr.bf16.gmra.mrb[0].mxu0 %v558
  %v694 = vpop.f32.mrb[0].mxu0
  %v695 = vadd.f32 0.0, %v694
  %v696 = vpop.f32.mrb[0].mxu0
  %v697 = vadd.f32 0.0, %v696
  %v698 = vpop.f32.mrb[0].mxu0
  %v699 = vpop.f32.mrb[0].mxu0
  %700 = vdwg.mxu0
  %v701 = vadd.f32 %v531, %v613
  %v702 = vadd.f32 %v532, %v615
  %v703 = vadd.f32 %v533, %v654
  %v704 = vadd.f32 %v534, %v656
  %v705 = vadd.f32 %v535, %v695
  %v706 = vadd.f32 %v536, %v697
  %s707 = scalar_lea.vmem %s2, 16
  %v708 = vld [vmem:[%s707] sm:$0xf]
  %709 = vrot.lane.b32.xlu0 %v41, 109
  %v710 = vpop.permute.xlu0 %709
  %711 = vrot.lane.b32.xlu0 %v49, 109
  %v712 = vpop.permute.xlu0 %711
  %713 = vrot.lane.b32.xlu0 %v48, 109
  %v714 = vpop.permute.xlu0 %713
  %715 = vrot.lane.b32.xlu0 %v50, 109
  %v716 = vpop.permute.xlu0 %715
  %717 = vrot.lane.b32.xlu0 %v57, 109
  %v718 = vpop.permute.xlu0 %717
  %719 = vrot.lane.b32.xlu0 %v58, 109
  %v720 = vpop.permute.xlu0 %719
  %vm721 = vcmask 891904
  %v722 = vsel %vm721, %v710, %v712
  %v723 = vsel %vm721, %v712, %v714
  %v724 = vsel %vm721, %v714, %v716
  %v725 = vsel %vm721, %v716, %v718
  %v726 = vsel %vm721, %v718, %v720
  %v728 = vsel %vm77, %v708, 0
  %v731 = vsel %vm81, %v722, 0
  %v734 = vsel %vm81, %v723, 0
  %v737 = vsel %vm81, %v724, 0
  %v740 = vsel %vm81, %v725, 0
  %v743 = vsel %vm81, %v726, 0
  %v746 = vsel %vm81, %v720, 0
  %748 = vmatprep.subr.bf16.mxu0 %v734
  %749 = vmatpush1.bf16.msra.mxu0 %v731
  %750 = vmatprep.subr.bf16.mxu0 0
  %751 = vmatpush1.bf16.msra.mxu0 0
  %752 = vmatprep.subr.bf16.mxu0 0
  %753 = vmatpush1.bf16.msra.mxu0 0
  %754 = vmatprep.subr.bf16.mxu0 0
  %755 = vmatpush1.bf16.msra.mxu0 0
  %756 = vmatprep.subr.bf16.mxu0 0
  %757 = vmatpush1.bf16.msra.mxu0 0
  %758 = vmatprep.subr.bf16.mxu0 0
  %759 = vmatpush1.bf16.msra.mxu0 0
  %760 = vmatprep.subr.bf16.mxu0 0
  %761 = vmatpush1.bf16.msra.mxu0 0
  %762 = vmatprep.subr.bf16.mxu0 0
  %763 = vmatpush1.bf16.msra.mxu0 0
  %764 = vmatprep.subr.bf16.mxu0 0
  %765 = vmatpush1.bf16.msra.mxu0 0
  %766 = vmatprep.subr.bf16.mxu0 0
  %767 = vmatpush1.bf16.msra.mxu0 0
  %768 = vmatprep.subr.bf16.mxu0 0
  %769 = vmatpush1.bf16.msra.mxu0 0
  %770 = vmatprep.subr.bf16.mxu0 0
  %771 = vmatpush1.bf16.msra.mxu0 0
  %772 = vmatprep.subr.bf16.mxu0 0
  %773 = vmatpush1.bf16.msra.mxu0 0
  %774 = vmatprep.subr.bf16.mxu0 0
  %775 = vmatpush1.bf16.msra.mxu0 0
  %776 = vmatprep.subr.bf16.mxu0 0
  %777 = vmatpush1.bf16.msra.mxu0 0
  %778 = vmatprep.subr.bf16.mxu0 0
  %779 = vmatpush1.bf16.msra.mxu0 0
  %780 = vmatprep.mubr.bf16.mxu0 0
  %781 = vmatmul.mubr.bf16.gmra.mrb[0].mxu0 %v728
  %v782 = vpop.f32.mrb[0].mxu0
  %v783 = vadd.f32 0.0, %v782
  %v784 = vpop.f32.mrb[0].mxu0
  %v785 = vadd.f32 0.0, %v784
  %v786 = vpop.f32.mrb[0].mxu0
  %v787 = vpop.f32.mrb[0].mxu0
  %788 = vdwg.mxu0
  %789 = vmatprep.subr.bf16.mxu0 %v740
  %790 = vmatpush1.bf16.msra.mxu0 %v737
  %791 = vmatprep.subr.bf16.mxu0 0
  %792 = vmatpush1.bf16.msra.mxu0 0
  %793 = vmatprep.subr.bf16.mxu0 0
  %794 = vmatpush1.bf16.msra.mxu0 0
  %795 = vmatprep.subr.bf16.mxu0 0
  %796 = vmatpush1.bf16.msra.mxu0 0
  %797 = vmatprep.subr.bf16.mxu0 0
  %798 = vmatpush1.bf16.msra.mxu0 0
  %799 = vmatprep.subr.bf16.mxu0 0
  %800 = vmatpush1.bf16.msra.mxu0 0
  %801 = vmatprep.subr.bf16.mxu0 0
  %802 = vmatpush1.bf16.msra.mxu0 0
  %803 = vmatprep.subr.bf16.mxu0 0
  %804 = vmatpush1.bf16.msra.mxu0 0
  %805 = vmatprep.subr.bf16.mxu0 0
  %806 = vmatpush1.bf16.msra.mxu0 0
  %807 = vmatprep.subr.bf16.mxu0 0
  %808 = vmatpush1.bf16.msra.mxu0 0
  %809 = vmatprep.subr.bf16.mxu0 0
  %810 = vmatpush1.bf16.msra.mxu0 0
  %811 = vmatprep.subr.bf16.mxu0 0
  %812 = vmatpush1.bf16.msra.mxu0 0
  %813 = vmatprep.subr.bf16.mxu0 0
  %814 = vmatpush1.bf16.msra.mxu0 0
  %815 = vmatprep.subr.bf16.mxu0 0
  %816 = vmatpush1.bf16.msra.mxu0 0
  %817 = vmatprep.subr.bf16.mxu0 0
  %818 = vmatpush1.bf16.msra.mxu0 0
  %819 = vmatprep.subr.bf16.mxu0 0
  %820 = vmatpush1.bf16.msra.mxu0 0
  %821 = vmatprep.mubr.bf16.mxu0 0
  %822 = vmatmul.mubr.bf16.gmra.mrb[0].mxu0 %v728
  %v823 = vpop.f32.mrb[0].mxu0
  %v824 = vadd.f32 0.0, %v823
  %v825 = vpop.f32.mrb[0].mxu0
  %v826 = vadd.f32 0.0, %v825
  %v827 = vpop.f32.mrb[0].mxu0
  %v828 = vpop.f32.mrb[0].mxu0
  %829 = vdwg.mxu0
  %830 = vmatprep.subr.bf16.mxu0 %v746
  %831 = vmatpush1.bf16.msra.mxu0 %v743
  %832 = vmatprep.subr.bf16.mxu0 0
  %833 = vmatpush1.bf16.msra.mxu0 0
  %834 = vmatprep.subr.bf16.mxu0 0
  %835 = vmatpush1.bf16.msra.mxu0 0
  %836 = vmatprep.subr.bf16.mxu0 0
  %837 = vmatpush1.bf16.msra.mxu0 0
  %838 = vmatprep.subr.bf16.mxu0 0
  %839 = vmatpush1.bf16.msra.mxu0 0
  %840 = vmatprep.subr.bf16.mxu0 0
  %841 = vmatpush1.bf16.msra.mxu0 0
  %842 = vmatprep.subr.bf16.mxu0 0
  %843 = vmatpush1.bf16.msra.mxu0 0
  %844 = vmatprep.subr.bf16.mxu0 0
  %845 = vmatpush1.bf16.msra.mxu0 0
  %846 = vmatprep.subr.bf16.mxu0 0
  %847 = vmatpush1.bf16.msra.mxu0 0
  %848 = vmatprep.subr.bf16.mxu0 0
  %849 = vmatpush1.bf16.msra.mxu0 0
  %850 = vmatprep.subr.bf16.mxu0 0
  %851 = vmatpush1.bf16.msra.mxu0 0
  %852 = vmatprep.subr.bf16.mxu0 0
  %853 = vmatpush1.bf16.msra.mxu0 0
  %854 = vmatprep.subr.bf16.mxu0 0
  %855 = vmatpush1.bf16.msra.mxu0 0
  %856 = vmatprep.subr.bf16.mxu0 0
  %857 = vmatpush1.bf16.msra.mxu0 0
  %858 = vmatprep.subr.bf16.mxu0 0
  %859 = vmatpush1.bf16.msra.mxu0 0
  %860 = vmatprep.subr.bf16.mxu0 0
  %861 = vmatpush1.bf16.msra.mxu0 0
  %862 = vmatprep.mubr.bf16.mxu0 0
  %863 = vmatmul.mubr.bf16.gmra.mrb[0].mxu0 %v728
  %v864 = vpop.f32.mrb[0].mxu0
  %v865 = vadd.f32 0.0, %v864
  %v866 = vpop.f32.mrb[0].mxu0
  %v867 = vadd.f32 0.0, %v866
  %v868 = vpop.f32.mrb[0].mxu0
  %v869 = vpop.f32.mrb[0].mxu0
  %870 = vdwg.mxu0
  %v871 = vadd.f32 %v701, %v783
  %v872 = vadd.f32 %v702, %v785
  %v873 = vadd.f32 %v703, %v824
  %v874 = vadd.f32 %v704, %v826
  %v875 = vadd.f32 %v705, %v865
  %v876 = vadd.f32 %v706, %v867
  %s877 = scalar_lea.vmem %s2, 20
  %v878 = vld [vmem:[%s877] sm:$0xf]
  %879 = vrot.lane.b32.xlu0 %v41, 108
  %v880 = vpop.permute.xlu0 %879
  %881 = vrot.lane.b32.xlu0 %v49, 108
  %v882 = vpop.permute.xlu0 %881
  %883 = vrot.lane.b32.xlu0 %v48, 108
  %v884 = vpop.permute.xlu0 %883
  %885 = vrot.lane.b32.xlu0 %v50, 108
  %v886 = vpop.permute.xlu0 %885
  %887 = vrot.lane.b32.xlu0 %v57, 108
  %v888 = vpop.permute.xlu0 %887
  %889 = vrot.lane.b32.xlu0 %v58, 108
  %v890 = vpop.permute.xlu0 %889
  %vm891 = vcmask 883712
  %v892 = vsel %vm891, %v880, %v882
  %v893 = vsel %vm891, %v882, %v884
  %v894 = vsel %vm891, %v884, %v886
  %v895 = vsel %vm891, %v886, %v888
  %v896 = vsel %vm891, %v888, %v890
  %v898 = vsel %vm77, %v878, 0
  %v901 = vsel %vm81, %v892, 0
  %v904 = vsel %vm81, %v893, 0
  %v907 = vsel %vm81, %v894, 0
  %v910 = vsel %vm81, %v895, 0
  %v913 = vsel %vm81, %v896, 0
  %v916 = vsel %vm81, %v890, 0
  %918 = vmatprep.subr.bf16.mxu0 %v904
  %919 = vmatpush1.bf16.msra.mxu0 %v901
  %920 = vmatprep.subr.bf16.mxu0 0
  %921 = vmatpush1.bf16.msra.mxu0 0
  %922 = vmatprep.subr.bf16.mxu0 0
  %923 = vmatpush1.bf16.msra.mxu0 0
  %924 = vmatprep.subr.bf16.mxu0 0
  %925 = vmatpush1.bf16.msra.mxu0 0
  %926 = vmatprep.subr.bf16.mxu0 0
  %927 = vmatpush1.bf16.msra.mxu0 0
  %928 = vmatprep.subr.bf16.mxu0 0
  %929 = vmatpush1.bf16.msra.mxu0 0
  %930 = vmatprep.subr.bf16.mxu0 0
  %931 = vmatpush1.bf16.msra.mxu0 0
  %932 = vmatprep.subr.bf16.mxu0 0
  %933 = vmatpush1.bf16.msra.mxu0 0
  %934 = vmatprep.subr.bf16.mxu0 0
  %935 = vmatpush1.bf16.msra.mxu0 0
  %936 = vmatprep.subr.bf16.mxu0 0
  %937 = vmatpush1.bf16.msra.mxu0 0
  %938 = vmatprep.subr.bf16.mxu0 0
  %939 = vmatpush1.bf16.msra.mxu0 0
  %940 = vmatprep.subr.bf16.mxu0 0
  %941 = vmatpush1.bf16.msra.mxu0 0
  %942 = vmatprep.subr.bf16.mxu0 0
  %943 = vmatpush1.bf16.msra.mxu0 0
  %944 = vmatprep.subr.bf16.mxu0 0
  %945 = vmatpush1.bf16.msra.mxu0 0
  %946 = vmatprep.subr.bf16.mxu0 0
  %947 = vmatpush1.bf16.msra.mxu0 0
  %948 = vmatprep.subr.bf16.mxu0 0
  %949 = vmatpush1.bf16.msra.mxu0 0
  %950 = vmatprep.mubr.bf16.mxu0 0
  %951 = vmatmul.mubr.bf16.gmra.mrb[0].mxu0 %v898
  %v952 = vpop.f32.mrb[0].mxu0
  %v953 = vadd.f32 0.0, %v952
  %v954 = vpop.f32.mrb[0].mxu0
  %v955 = vadd.f32 0.0, %v954
  %v956 = vpop.f32.mrb[0].mxu0
  %v957 = vpop.f32.mrb[0].mxu0
  %958 = vdwg.mxu0
  %959 = vmatprep.subr.bf16.mxu0 %v910
  %960 = vmatpush1.bf16.msra.mxu0 %v907
  %961 = vmatprep.subr.bf16.mxu0 0
  %962 = vmatpush1.bf16.msra.mxu0 0
  %963 = vmatprep.subr.bf16.mxu0 0
  %964 = vmatpush1.bf16.msra.mxu0 0
  %965 = vmatprep.subr.bf16.mxu0 0
  %966 = vmatpush1.bf16.msra.mxu0 0
  %967 = vmatprep.subr.bf16.mxu0 0
  %968 = vmatpush1.bf16.msra.mxu0 0
  %969 = vmatprep.subr.bf16.mxu0 0
  %970 = vmatpush1.bf16.msra.mxu0 0
  %971 = vmatprep.subr.bf16.mxu0 0
  %972 = vmatpush1.bf16.msra.mxu0 0
  %973 = vmatprep.subr.bf16.mxu0 0
  %974 = vmatpush1.bf16.msra.mxu0 0
  %975 = vmatprep.subr.bf16.mxu0 0
  %976 = vmatpush1.bf16.msra.mxu0 0
  %977 = vmatprep.subr.bf16.mxu0 0
  %978 = vmatpush1.bf16.msra.mxu0 0
  %979 = vmatprep.subr.bf16.mxu0 0
  %980 = vmatpush1.bf16.msra.mxu0 0
  %981 = vmatprep.subr.bf16.mxu0 0
  %982 = vmatpush1.bf16.msra.mxu0 0
  %983 = vmatprep.subr.bf16.mxu0 0
  %984 = vmatpush1.bf16.msra.mxu0 0
  %985 = vmatprep.subr.bf16.mxu0 0
  %986 = vmatpush1.bf16.msra.mxu0 0
  %987 = vmatprep.subr.bf16.mxu0 0
  %988 = vmatpush1.bf16.msra.mxu0 0
  %989 = vmatprep.subr.bf16.mxu0 0
  %990 = vmatpush1.bf16.msra.mxu0 0
  %991 = vmatprep.mubr.bf16.mxu0 0
  %992 = vmatmul.mubr.bf16.gmra.mrb[0].mxu0 %v898
  %v993 = vpop.f32.mrb[0].mxu0
  %v994 = vadd.f32 0.0, %v993
  %v995 = vpop.f32.mrb[0].mxu0
  %v996 = vadd.f32 0.0, %v995
  %v997 = vpop.f32.mrb[0].mxu0
  %v998 = vpop.f32.mrb[0].mxu0
  %999 = vdwg.mxu0
  %1000 = vmatprep.subr.bf16.mxu0 %v916
  %1001 = vmatpush1.bf16.msra.mxu0 %v913
  %1002 = vmatprep.subr.bf16.mxu0 0
  %1003 = vmatpush1.bf16.msra.mxu0 0
  %1004 = vmatprep.subr.bf16.mxu0 0
  %1005 = vmatpush1.bf16.msra.mxu0 0
  %1006 = vmatprep.subr.bf16.mxu0 0
  %1007 = vmatpush1.bf16.msra.mxu0 0
  %1008 = vmatprep.subr.bf16.mxu0 0
  %1009 = vmatpush1.bf16.msra.mxu0 0
  %1010 = vmatprep.subr.bf16.mxu0 0
  %1011 = vmatpush1.bf16.msra.mxu0 0
  %1012 = vmatprep.subr.bf16.mxu0 0
  %1013 = vmatpush1.bf16.msra.mxu0 0
  %1014 = vmatprep.subr.bf16.mxu0 0
  %1015 = vmatpush1.bf16.msra.mxu0 0
  %1016 = vmatprep.subr.bf16.mxu0 0
  %1017 = vmatpush1.bf16.msra.mxu0 0
  %1018 = vmatprep.subr.bf16.mxu0 0
  %1019 = vmatpush1.bf16.msra.mxu0 0
  %1020 = vmatprep.subr.bf16.mxu0 0
  %1021 = vmatpush1.bf16.msra.mxu0 0
  %1022 = vmatprep.subr.bf16.mxu0 0
  %1023 = vmatpush1.bf16.msra.mxu0 0
  %1024 = vmatprep.subr.bf16.mxu0 0
  %1025 = vmatpush1.bf16.msra.mxu0 0
  %1026 = vmatprep.subr.bf16.mxu0 0
  %1027 = vmatpush1.bf16.msra.mxu0 0
  %1028 = vmatprep.subr.bf16.mxu0 0
  %1029 = vmatpush1.bf16.msra.mxu0 0
  %1030 = vmatprep.subr.bf16.mxu0 0
  %1031 = vmatpush1.bf16.msra.mxu0 0
  %1032 = vmatprep.mubr.bf16.mxu0 0
  %1033 = vmatmul.mubr.bf16.gmra.mrb[0].mxu0 %v898
  %v1034 = vpop.f32.mrb[0].mxu0
  %v1035 = vadd.f32 0.0, %v1034
  %v1036 = vpop.f32.mrb[0].mxu0
  %v1037 = vadd.f32 0.0, %v1036
  %v1038 = vpop.f32.mrb[0].mxu0
  %v1039 = vpop.f32.mrb[0].mxu0
  %1040 = vdwg.mxu0
  %v1041 = vadd.f32 %v871, %v953
  %v1042 = vadd.f32 %v872, %v955
  %v1043 = vadd.f32 %v873, %v994
  %v1044 = vadd.f32 %v874, %v996
  %v1045 = vadd.f32 %v875, %v1035
  %v1046 = vadd.f32 %v876, %v1037
  %s1047 = scalar_lea.vmem %s2, 24
  %v1048 = vld [vmem:[%s1047] sm:$0xf]
  %1049 = vrot.lane.b32.xlu0 %v41, 92
  %v1050 = vpop.permute.xlu0 %1049
  %1051 = vrot.lane.b32.xlu0 %v49, 92
  %v1052 = vpop.permute.xlu0 %1051
  %1053 = vrot.lane.b32.xlu0 %v48, 92
  %v1054 = vpop.permute.xlu0 %1053
  %1055 = vrot.lane.b32.xlu0 %v50, 92
  %v1056 = vpop.permute.xlu0 %1055
  %1057 = vrot.lane.b32.xlu0 %v57, 92
  %v1058 = vpop.permute.xlu0 %1057
  %1059 = vrot.lane.b32.xlu0 %v58, 92
  %v1060 = vpop.permute.xlu0 %1059
  %vm1061 = vcmask 752640
  %v1062 = vsel %vm1061, %v1050, %v1052
  %v1063 = vsel %vm1061, %v1052, %v1054
  %v1064 = vsel %vm1061, %v1054, %v1056
  %v1065 = vsel %vm1061, %v1056, %v1058
  %v1066 = vsel %vm1061, %v1058, %v1060
  %v1068 = vsel %vm77, %v1048, 0
  %v1071 = vsel %vm81, %v1062, 0
  %v1074 = vsel %vm81, %v1063, 0
  %v1077 = vsel %vm81, %v1064, 0
  %v1080 = vsel %vm81, %v1065, 0
  %v1083 = vsel %vm81, %v1066, 0
  %v1086 = vsel %vm81, %v1060, 0
  %1088 = vmatprep.subr.bf16.mxu0 %v1074
  %1089 = vmatpush1.bf16.msra.mxu0 %v1071
  %1090 = vmatprep.subr.bf16.mxu0 0
  %1091 = vmatpush1.bf16.msra.mxu0 0
  %1092 = vmatprep.subr.bf16.mxu0 0
  %1093 = vmatpush1.bf16.msra.mxu0 0
  %1094 = vmatprep.subr.bf16.mxu0 0
  %1095 = vmatpush1.bf16.msra.mxu0 0
  %1096 = vmatprep.subr.bf16.mxu0 0
  %1097 = vmatpush1.bf16.msra.mxu0 0
  %1098 = vmatprep.subr.bf16.mxu0 0
  %1099 = vmatpush1.bf16.msra.mxu0 0
  %1100 = vmatprep.subr.bf16.mxu0 0
  %1101 = vmatpush1.bf16.msra.mxu0 0
  %1102 = vmatprep.subr.bf16.mxu0 0
  %1103 = vmatpush1.bf16.msra.mxu0 0
  %1104 = vmatprep.subr.bf16.mxu0 0
  %1105 = vmatpush1.bf16.msra.mxu0 0
  %1106 = vmatprep.subr.bf16.mxu0 0
  %1107 = vmatpush1.bf16.msra.mxu0 0
  %1108 = vmatprep.subr.bf16.mxu0 0
  %1109 = vmatpush1.bf16.msra.mxu0 0
  %1110 = vmatprep.subr.bf16.mxu0 0
  %1111 = vmatpush1.bf16.msra.mxu0 0
  %1112 = vmatprep.subr.bf16.mxu0 0
  %1113 = vmatpush1.bf16.msra.mxu0 0
  %1114 = vmatprep.subr.bf16.mxu0 0
  %1115 = vmatpush1.bf16.msra.mxu0 0
  %1116 = vmatprep.subr.bf16.mxu0 0
  %1117 = vmatpush1.bf16.msra.mxu0 0
  %1118 = vmatprep.subr.bf16.mxu0 0
  %1119 = vmatpush1.bf16.msra.mxu0 0
  %1120 = vmatprep.mubr.bf16.mxu0 0
  %1121 = vmatmul.mubr.bf16.gmra.mrb[0].mxu0 %v1068
  %v1122 = vpop.f32.mrb[0].mxu0
  %v1123 = vadd.f32 0.0, %v1122
  %v1124 = vpop.f32.mrb[0].mxu0
  %v1125 = vadd.f32 0.0, %v1124
  %v1126 = vpop.f32.mrb[0].mxu0
  %v1127 = vpop.f32.mrb[0].mxu0
  %1128 = vdwg.mxu0
  %1129 = vmatprep.subr.bf16.mxu0 %v1080
  %1130 = vmatpush1.bf16.msra.mxu0 %v1077
  %1131 = vmatprep.subr.bf16.mxu0 0
  %1132 = vmatpush1.bf16.msra.mxu0 0
  %1133 = vmatprep.subr.bf16.mxu0 0
  %1134 = vmatpush1.bf16.msra.mxu0 0
  %1135 = vmatprep.subr.bf16.mxu0 0
  %1136 = vmatpush1.bf16.msra.mxu0 0
  %1137 = vmatprep.subr.bf16.mxu0 0
  %1138 = vmatpush1.bf16.msra.mxu0 0
  %1139 = vmatprep.subr.bf16.mxu0 0
  %1140 = vmatpush1.bf16.msra.mxu0 0
  %1141 = vmatprep.subr.bf16.mxu0 0
  %1142 = vmatpush1.bf16.msra.mxu0 0
  %1143 = vmatprep.subr.bf16.mxu0 0
  %1144 = vmatpush1.bf16.msra.mxu0 0
  %1145 = vmatprep.subr.bf16.mxu0 0
  %1146 = vmatpush1.bf16.msra.mxu0 0
  %1147 = vmatprep.subr.bf16.mxu0 0
  %1148 = vmatpush1.bf16.msra.mxu0 0
  %1149 = vmatprep.subr.bf16.mxu0 0
  %1150 = vmatpush1.bf16.msra.mxu0 0
  %1151 = vmatprep.subr.bf16.mxu0 0
  %1152 = vmatpush1.bf16.msra.mxu0 0
  %1153 = vmatprep.subr.bf16.mxu0 0
  %1154 = vmatpush1.bf16.msra.mxu0 0
  %1155 = vmatprep.subr.bf16.mxu0 0
  %1156 = vmatpush1.bf16.msra.mxu0 0
  %1157 = vmatprep.subr.bf16.mxu0 0
  %1158 = vmatpush1.bf16.msra.mxu0 0
  %1159 = vmatprep.subr.bf16.mxu0 0
  %1160 = vmatpush1.bf16.msra.mxu0 0
  %1161 = vmatprep.mubr.bf16.mxu0 0
  %1162 = vmatmul.mubr.bf16.gmra.mrb[0].mxu0 %v1068
  %v1163 = vpop.f32.mrb[0].mxu0
  %v1164 = vadd.f32 0.0, %v1163
  %v1165 = vpop.f32.mrb[0].mxu0
  %v1166 = vadd.f32 0.0, %v1165
  %v1167 = vpop.f32.mrb[0].mxu0
  %v1168 = vpop.f32.mrb[0].mxu0
  %1169 = vdwg.mxu0
  %1170 = vmatprep.subr.bf16.mxu0 %v1086
  %1171 = vmatpush1.bf16.msra.mxu0 %v1083
  %1172 = vmatprep.subr.bf16.mxu0 0
  %1173 = vmatpush1.bf16.msra.mxu0 0
  %1174 = vmatprep.subr.bf16.mxu0 0
  %1175 = vmatpush1.bf16.msra.mxu0 0
  %1176 = vmatprep.subr.bf16.mxu0 0
  %1177 = vmatpush1.bf16.msra.mxu0 0
  %1178 = vmatprep.subr.bf16.mxu0 0
  %1179 = vmatpush1.bf16.msra.mxu0 0
  %1180 = vmatprep.subr.bf16.mxu0 0
  %1181 = vmatpush1.bf16.msra.mxu0 0
  %1182 = vmatprep.subr.bf16.mxu0 0
  %1183 = vmatpush1.bf16.msra.mxu0 0
  %1184 = vmatprep.subr.bf16.mxu0 0
  %1185 = vmatpush1.bf16.msra.mxu0 0
  %1186 = vmatprep.subr.bf16.mxu0 0
  %1187 = vmatpush1.bf16.msra.mxu0 0
  %1188 = vmatprep.subr.bf16.mxu0 0
  %1189 = vmatpush1.bf16.msra.mxu0 0
  %1190 = vmatprep.subr.bf16.mxu0 0
  %1191 = vmatpush1.bf16.msra.mxu0 0
  %1192 = vmatprep.subr.bf16.mxu0 0
  %1193 = vmatpush1.bf16.msra.mxu0 0
  %1194 = vmatprep.subr.bf16.mxu0 0
  %1195 = vmatpush1.bf16.msra.mxu0 0
  %1196 = vmatprep.subr.bf16.mxu0 0
  %1197 = vmatpush1.bf16.msra.mxu0 0
  %1198 = vmatprep.subr.bf16.mxu0 0
  %1199 = vmatpush1.bf16.msra.mxu0 0
  %1200 = vmatprep.subr.bf16.mxu0 0
  %1201 = vmatpush1.bf16.msra.mxu0 0
  %1202 = vmatprep.mubr.bf16.mxu0 0
  %1203 = vmatmul.mubr.bf16.gmra.mrb[0].mxu0 %v1068
  %v1204 = vpop.f32.mrb[0].mxu0
  %v1205 = vadd.f32 0.0, %v1204
  %v1206 = vpop.f32.mrb[0].mxu0
  %v1207 = vadd.f32 0.0, %v1206
  %v1208 = vpop.f32.mrb[0].mxu0
  %v1209 = vpop.f32.mrb[0].mxu0
  %1210 = vdwg.mxu0
  %v1211 = vadd.f32 %v1041, %v1123
  %v1212 = vadd.f32 %v1042, %v1125
  %v1213 = vadd.f32 %v1043, %v1164
  %v1214 = vadd.f32 %v1044, %v1166
  %v1215 = vadd.f32 %v1045, %v1205
  %v1216 = vadd.f32 %v1046, %v1207
  %s1217 = scalar_lea.vmem %s2, 28
  %v1218 = vld [vmem:[%s1217] sm:$0xf]
  %1219 = vrot.lane.b32.xlu0 %v41, 91
  %v1220 = vpop.permute.xlu0 %1219
  %1221 = vrot.lane.b32.xlu0 %v49, 91
  %v1222 = vpop.permute.xlu0 %1221
  %1223 = vrot.lane.b32.xlu0 %v48, 91
  %v1224 = vpop.permute.xlu0 %1223
  %1225 = vrot.lane.b32.xlu0 %v50, 91
  %v1226 = vpop.permute.xlu0 %1225
  %1227 = vrot.lane.b32.xlu0 %v57, 91
  %v1228 = vpop.permute.xlu0 %1227
  %1229 = vrot.lane.b32.xlu0 %v58, 91
  %v1230 = vpop.permute.xlu0 %1229
  %vm1231 = vcmask 744448
  %v1232 = vsel %vm1231, %v1220, %v1222
  %v1233 = vsel %vm1231, %v1222, %v1224
  %v1234 = vsel %vm1231, %v1224, %v1226
  %v1235 = vsel %vm1231, %v1226, %v1228
  %v1236 = vsel %vm1231, %v1228, %v1230
  %v1238 = vsel %vm77, %v1218, 0
  %v1241 = vsel %vm81, %v1232, 0
  %v1244 = vsel %vm81, %v1233, 0
  %v1247 = vsel %vm81, %v1234, 0
  %v1250 = vsel %vm81, %v1235, 0
  %v1253 = vsel %vm81, %v1236, 0
  %v1256 = vsel %vm81, %v1230, 0
  %1258 = vmatprep.subr.bf16.mxu0 %v1244
  %1259 = vmatpush1.bf16.msra.mxu0 %v1241
  %1260 = vmatprep.subr.bf16.mxu0 0
  %1261 = vmatpush1.bf16.msra.mxu0 0
  %1262 = vmatprep.subr.bf16.mxu0 0
  %1263 = vmatpush1.bf16.msra.mxu0 0
  %1264 = vmatprep.subr.bf16.mxu0 0
  %1265 = vmatpush1.bf16.msra.mxu0 0
  %1266 = vmatprep.subr.bf16.mxu0 0
  %1267 = vmatpush1.bf16.msra.mxu0 0
  %1268 = vmatprep.subr.bf16.mxu0 0
  %1269 = vmatpush1.bf16.msra.mxu0 0
  %1270 = vmatprep.subr.bf16.mxu0 0
  %1271 = vmatpush1.bf16.msra.mxu0 0
  %1272 = vmatprep.subr.bf16.mxu0 0
  %1273 = vmatpush1.bf16.msra.mxu0 0
  %1274 = vmatprep.subr.bf16.mxu0 0
  %1275 = vmatpush1.bf16.msra.mxu0 0
  %1276 = vmatprep.subr.bf16.mxu0 0
  %1277 = vmatpush1.bf16.msra.mxu0 0
  %1278 = vmatprep.subr.bf16.mxu0 0
  %1279 = vmatpush1.bf16.msra.mxu0 0
  %1280 = vmatprep.subr.bf16.mxu0 0
  %1281 = vmatpush1.bf16.msra.mxu0 0
  %1282 = vmatprep.subr.bf16.mxu0 0
  %1283 = vmatpush1.bf16.msra.mxu0 0
  %1284 = vmatprep.subr.bf16.mxu0 0
  %1285 = vmatpush1.bf16.msra.mxu0 0
  %1286 = vmatprep.subr.bf16.mxu0 0
  %1287 = vmatpush1.bf16.msra.mxu0 0
  %1288 = vmatprep.subr.bf16.mxu0 0
  %1289 = vmatpush1.bf16.msra.mxu0 0
  %1290 = vmatprep.mubr.bf16.mxu0 0
  %1291 = vmatmul.mubr.bf16.gmra.mrb[0].mxu0 %v1238
  %v1292 = vpop.f32.mrb[0].mxu0
  %v1293 = vadd.f32 0.0, %v1292
  %v1294 = vpop.f32.mrb[0].mxu0
  %v1295 = vadd.f32 0.0, %v1294
  %v1296 = vpop.f32.mrb[0].mxu0
  %v1297 = vpop.f32.mrb[0].mxu0
  %1298 = vdwg.mxu0
  %1299 = vmatprep.subr.bf16.mxu0 %v1250
  %1300 = vmatpush1.bf16.msra.mxu0 %v1247
  %1301 = vmatprep.subr.bf16.mxu0 0
  %1302 = vmatpush1.bf16.msra.mxu0 0
  %1303 = vmatprep.subr.bf16.mxu0 0
  %1304 = vmatpush1.bf16.msra.mxu0 0
  %1305 = vmatprep.subr.bf16.mxu0 0
  %1306 = vmatpush1.bf16.msra.mxu0 0
  %1307 = vmatprep.subr.bf16.mxu0 0
  %1308 = vmatpush1.bf16.msra.mxu0 0
  %1309 = vmatprep.subr.bf16.mxu0 0
  %1310 = vmatpush1.bf16.msra.mxu0 0
  %1311 = vmatprep.subr.bf16.mxu0 0
  %1312 = vmatpush1.bf16.msra.mxu0 0
  %1313 = vmatprep.subr.bf16.mxu0 0
  %1314 = vmatpush1.bf16.msra.mxu0 0
  %1315 = vmatprep.subr.bf16.mxu0 0
  %1316 = vmatpush1.bf16.msra.mxu0 0
  %1317 = vmatprep.subr.bf16.mxu0 0
  %1318 = vmatpush1.bf16.msra.mxu0 0
  %1319 = vmatprep.subr.bf16.mxu0 0
  %1320 = vmatpush1.bf16.msra.mxu0 0
  %1321 = vmatprep.subr.bf16.mxu0 0
  %1322 = vmatpush1.bf16.msra.mxu0 0
  %1323 = vmatprep.subr.bf16.mxu0 0
  %1324 = vmatpush1.bf16.msra.mxu0 0
  %1325 = vmatprep.subr.bf16.mxu0 0
  %1326 = vmatpush1.bf16.msra.mxu0 0
  %1327 = vmatprep.subr.bf16.mxu0 0
  %1328 = vmatpush1.bf16.msra.mxu0 0
  %1329 = vmatprep.subr.bf16.mxu0 0
  %1330 = vmatpush1.bf16.msra.mxu0 0
  %1331 = vmatprep.mubr.bf16.mxu0 0
  %1332 = vmatmul.mubr.bf16.gmra.mrb[0].mxu0 %v1238
  %v1333 = vpop.f32.mrb[0].mxu0
  %v1334 = vadd.f32 0.0, %v1333
  %v1335 = vpop.f32.mrb[0].mxu0
  %v1336 = vadd.f32 0.0, %v1335
  %v1337 = vpop.f32.mrb[0].mxu0
  %v1338 = vpop.f32.mrb[0].mxu0
  %1339 = vdwg.mxu0
  %1340 = vmatprep.subr.bf16.mxu0 %v1256
  %1341 = vmatpush1.bf16.msra.mxu0 %v1253
  %1342 = vmatprep.subr.bf16.mxu0 0
  %1343 = vmatpush1.bf16.msra.mxu0 0
  %1344 = vmatprep.subr.bf16.mxu0 0
  %1345 = vmatpush1.bf16.msra.mxu0 0
  %1346 = vmatprep.subr.bf16.mxu0 0
  %1347 = vmatpush1.bf16.msra.mxu0 0
  %1348 = vmatprep.subr.bf16.mxu0 0
  %1349 = vmatpush1.bf16.msra.mxu0 0
  %1350 = vmatprep.subr.bf16.mxu0 0
  %1351 = vmatpush1.bf16.msra.mxu0 0
  %1352 = vmatprep.subr.bf16.mxu0 0
  %1353 = vmatpush1.bf16.msra.mxu0 0
  %1354 = vmatprep.subr.bf16.mxu0 0
  %1355 = vmatpush1.bf16.msra.mxu0 0
  %1356 = vmatprep.subr.bf16.mxu0 0
  %1357 = vmatpush1.bf16.msra.mxu0 0
  %1358 = vmatprep.subr.bf16.mxu0 0
  %1359 = vmatpush1.bf16.msra.mxu0 0
  %1360 = vmatprep.subr.bf16.mxu0 0
  %1361 = vmatpush1.bf16.msra.mxu0 0
  %1362 = vmatprep.subr.bf16.mxu0 0
  %1363 = vmatpush1.bf16.msra.mxu0 0
  %1364 = vmatprep.subr.bf16.mxu0 0
  %1365 = vmatpush1.bf16.msra.mxu0 0
  %1366 = vmatprep.subr.bf16.mxu0 0
  %1367 = vmatpush1.bf16.msra.mxu0 0
  %1368 = vmatprep.subr.bf16.mxu0 0
  %1369 = vmatpush1.bf16.msra.mxu0 0
  %1370 = vmatprep.subr.bf16.mxu0 0
  %1371 = vmatpush1.bf16.msra.mxu0 0
  %1372 = vmatprep.mubr.bf16.mxu0 0
  %1373 = vmatmul.mubr.bf16.gmra.mrb[0].mxu0 %v1238
  %v1374 = vpop.f32.mrb[0].mxu0
  %v1375 = vadd.f32 0.0, %v1374
  %v1376 = vpop.f32.mrb[0].mxu0
  %v1377 = vadd.f32 0.0, %v1376
  %v1378 = vpop.f32.mrb[0].mxu0
  %v1379 = vpop.f32.mrb[0].mxu0
  %1380 = vdwg.mxu0
  %v1381 = vadd.f32 %v1211, %v1293
  %v1382 = vadd.f32 %v1212, %v1295
  %v1383 = vadd.f32 %v1213, %v1334
  %v1384 = vadd.f32 %v1214, %v1336
  %v1385 = vadd.f32 %v1215, %v1375
  %v1386 = vadd.f32 %v1216, %v1377
  %s1387 = scalar_lea.vmem %s2, 32
  %v1388 = vld [vmem:[%s1387] sm:$0xf]
  %1389 = vrot.lane.b32.xlu0 %v41, 90
  %v1390 = vpop.permute.xlu0 %1389
  %1391 = vrot.lane.b32.xlu0 %v49, 90
  %v1392 = vpop.permute.xlu0 %1391
  %1393 = vrot.lane.b32.xlu0 %v48, 90
  %v1394 = vpop.permute.xlu0 %1393
  %1395 = vrot.lane.b32.xlu0 %v50, 90
  %v1396 = vpop.permute.xlu0 %1395
  %1397 = vrot.lane.b32.xlu0 %v57, 90
  %v1398 = vpop.permute.xlu0 %1397
  %1399 = vrot.lane.b32.xlu0 %v58, 90
  %v1400 = vpop.permute.xlu0 %1399
  %vm1401 = vcmask 736256
  %v1402 = vsel %vm1401, %v1390, %v1392
  %v1403 = vsel %vm1401, %v1392, %v1394
  %v1404 = vsel %vm1401, %v1394, %v1396
  %v1405 = vsel %vm1401, %v1396, %v1398
  %v1406 = vsel %vm1401, %v1398, %v1400
  %v1408 = vsel %vm77, %v1388, 0
  %v1411 = vsel %vm81, %v1402, 0
  %v1414 = vsel %vm81, %v1403, 0
  %v1417 = vsel %vm81, %v1404, 0
  %v1420 = vsel %vm81, %v1405, 0
  %v1423 = vsel %vm81, %v1406, 0
  %v1426 = vsel %vm81, %v1400, 0
  %1428 = vmatprep.subr.bf16.mxu0 %v1414
  %1429 = vmatpush1.bf16.msra.mxu0 %v1411
  %1430 = vmatprep.subr.bf16.mxu0 0
  %1431 = vmatpush1.bf16.msra.mxu0 0
  %1432 = vmatprep.subr.bf16.mxu0 0
  %1433 = vmatpush1.bf16.msra.mxu0 0
  %1434 = vmatprep.subr.bf16.mxu0 0
  %1435 = vmatpush1.bf16.msra.mxu0 0
  %1436 = vmatprep.subr.bf16.mxu0 0
  %1437 = vmatpush1.bf16.msra.mxu0 0
  %1438 = vmatprep.subr.bf16.mxu0 0
  %1439 = vmatpush1.bf16.msra.mxu0 0
  %1440 = vmatprep.subr.bf16.mxu0 0
  %1441 = vmatpush1.bf16.msra.mxu0 0
  %1442 = vmatprep.subr.bf16.mxu0 0
  %1443 = vmatpush1.bf16.msra.mxu0 0
  %1444 = vmatprep.subr.bf16.mxu0 0
  %1445 = vmatpush1.bf16.msra.mxu0 0
  %1446 = vmatprep.subr.bf16.mxu0 0
  %1447 = vmatpush1.bf16.msra.mxu0 0
  %1448 = vmatprep.subr.bf16.mxu0 0
  %1449 = vmatpush1.bf16.msra.mxu0 0
  %1450 = vmatprep.subr.bf16.mxu0 0
  %1451 = vmatpush1.bf16.msra.mxu0 0
  %1452 = vmatprep.subr.bf16.mxu0 0
  %1453 = vmatpush1.bf16.msra.mxu0 0
  %1454 = vmatprep.subr.bf16.mxu0 0
  %1455 = vmatpush1.bf16.msra.mxu0 0
  %1456 = vmatprep.subr.bf16.mxu0 0
  %1457 = vmatpush1.bf16.msra.mxu0 0
  %1458 = vmatprep.subr.bf16.mxu0 0
  %1459 = vmatpush1.bf16.msra.mxu0 0
  %1460 = vmatprep.mubr.bf16.mxu0 0
  %1461 = vmatmul.mubr.bf16.gmra.mrb[0].mxu0 %v1408
  %v1462 = vpop.f32.mrb[0].mxu0
  %v1463 = vadd.f32 0.0, %v1462
  %v1464 = vpop.f32.mrb[0].mxu0
  %v1465 = vadd.f32 0.0, %v1464
  %v1466 = vpop.f32.mrb[0].mxu0
  %v1467 = vpop.f32.mrb[0].mxu0
  %1468 = vdwg.mxu0
  %1469 = vmatprep.subr.bf16.mxu0 %v1420
  %1470 = vmatpush1.bf16.msra.mxu0 %v1417
  %1471 = vmatprep.subr.bf16.mxu0 0
  %1472 = vmatpush1.bf16.msra.mxu0 0
  %1473 = vmatprep.subr.bf16.mxu0 0
  %1474 = vmatpush1.bf16.msra.mxu0 0
  %1475 = vmatprep.subr.bf16.mxu0 0
  %1476 = vmatpush1.bf16.msra.mxu0 0
  %1477 = vmatprep.subr.bf16.mxu0 0
  %1478 = vmatpush1.bf16.msra.mxu0 0
  %1479 = vmatprep.subr.bf16.mxu0 0
  %1480 = vmatpush1.bf16.msra.mxu0 0
  %1481 = vmatprep.subr.bf16.mxu0 0
  %1482 = vmatpush1.bf16.msra.mxu0 0
  %1483 = vmatprep.subr.bf16.mxu0 0
  %1484 = vmatpush1.bf16.msra.mxu0 0
  %1485 = vmatprep.subr.bf16.mxu0 0
  %1486 = vmatpush1.bf16.msra.mxu0 0
  %1487 = vmatprep.subr.bf16.mxu0 0
  %1488 = vmatpush1.bf16.msra.mxu0 0
  %1489 = vmatprep.subr.bf16.mxu0 0
  %1490 = vmatpush1.bf16.msra.mxu0 0
  %1491 = vmatprep.subr.bf16.mxu0 0
  %1492 = vmatpush1.bf16.msra.mxu0 0
  %1493 = vmatprep.subr.bf16.mxu0 0
  %1494 = vmatpush1.bf16.msra.mxu0 0
  %1495 = vmatprep.subr.bf16.mxu0 0
  %1496 = vmatpush1.bf16.msra.mxu0 0
  %1497 = vmatprep.subr.bf16.mxu0 0
  %1498 = vmatpush1.bf16.msra.mxu0 0
  %1499 = vmatprep.subr.bf16.mxu0 0
  %1500 = vmatpush1.bf16.msra.mxu0 0
  %1501 = vmatprep.mubr.bf16.mxu0 0
  %1502 = vmatmul.mubr.bf16.gmra.mrb[0].mxu0 %v1408
  %v1503 = vpop.f32.mrb[0].mxu0
  %v1504 = vadd.f32 0.0, %v1503
  %v1505 = vpop.f32.mrb[0].mxu0
  %v1506 = vadd.f32 0.0, %v1505
  %v1507 = vpop.f32.mrb[0].mxu0
  %v1508 = vpop.f32.mrb[0].mxu0
  %1509 = vdwg.mxu0
  %1510 = vmatprep.subr.bf16.mxu0 %v1426
  %1511 = vmatpush1.bf16.msra.mxu0 %v1423
  %1512 = vmatprep.subr.bf16.mxu0 0
  %1513 = vmatpush1.bf16.msra.mxu0 0
  %1514 = vmatprep.subr.bf16.mxu0 0
  %1515 = vmatpush1.bf16.msra.mxu0 0
  %1516 = vmatprep.subr.bf16.mxu0 0
  %1517 = vmatpush1.bf16.msra.mxu0 0
  %1518 = vmatprep.subr.bf16.mxu0 0
  %1519 = vmatpush1.bf16.msra.mxu0 0
  %1520 = vmatprep.subr.bf16.mxu0 0
  %1521 = vmatpush1.bf16.msra.mxu0 0
  %1522 = vmatprep.subr.bf16.mxu0 0
  %1523 = vmatpush1.bf16.msra.mxu0 0
  %1524 = vmatprep.subr.bf16.mxu0 0
  %1525 = vmatpush1.bf16.msra.mxu0 0
  %1526 = vmatprep.subr.bf16.mxu0 0
  %1527 = vmatpush1.bf16.msra.mxu0 0
  %1528 = vmatprep.subr.bf16.mxu0 0
  %1529 = vmatpush1.bf16.msra.mxu0 0
  %1530 = vmatprep.subr.bf16.mxu0 0
  %1531 = vmatpush1.bf16.msra.mxu0 0
  %1532 = vmatprep.subr.bf16.mxu0 0
  %1533 = vmatpush1.bf16.msra.mxu0 0
  %1534 = vmatprep.subr.bf16.mxu0 0
  %1535 = vmatpush1.bf16.msra.mxu0 0
  %1536 = vmatprep.subr.bf16.mxu0 0
  %1537 = vmatpush1.bf16.msra.mxu0 0
  %1538 = vmatprep.subr.bf16.mxu0 0
  %1539 = vmatpush1.bf16.msra.mxu0 0
  %1540 = vmatprep.subr.bf16.mxu0 0
  %1541 = vmatpush1.bf16.msra.mxu0 0
  %1542 = vmatprep.mubr.bf16.mxu0 0
  %1543 = vmatmul.mubr.bf16.gmra.mrb[0].mxu0 %v1408
  %v1544 = vpop.f32.mrb[0].mxu0
  %v1545 = vadd.f32 0.0, %v1544
  %v1546 = vpop.f32.mrb[0].mxu0
  %v1547 = vadd.f32 0.0, %v1546
  %v1548 = vpop.f32.mrb[0].mxu0
  %v1549 = vpop.f32.mrb[0].mxu0
  %1550 = vdwg.mxu0
  %v1551 = vadd.f32 %v1381, %v1463
  %v1552 = vadd.f32 %v1382, %v1465
  %v1553 = vadd.f32 %v1383, %v1504
  %v1554 = vadd.f32 %v1384, %v1506
  %v1555 = vadd.f32 %v1385, %v1545
  %v1556 = vadd.f32 %v1386, %v1547
  %1558 = vset.pattern.permute.xlu0 0
  %1559 = vperm.xlu0 %1558, %v28
  %v1560 = vpop.permute.xlu0 %1559
  %v1562 = vadd.f32 %v1551, %v1560
  %v1563 = vadd.f32 %v1552, %v1560
  %v1564 = vadd.f32 %v1553, %v1560
  %v1565 = vadd.f32 %v1554, %v1560
  %v1566 = vadd.f32 %v1555, %v1560
  %v1567 = vadd.f32 %v1556, %v1560
  %v1568 = vmax.f32 %v1562, 0.0
  %v1569 = vmax.f32 %v1563, 0.0
  %v1570 = vmax.f32 %v1564, 0.0
  %v1571 = vmax.f32 %v1565, 0.0
  %v1572 = vmax.f32 %v1566, 0.0
  %v1573 = vmax.f32 %v1567, 0.0
  %v1574 = vsel %vm25, 1, 0
  %v1575 = vlaneseq
  %v1576 = vshrl.u32 %v1575, 7
  %v1577 = vsub.s32 0, %v1576
  %v1578 = vrot.slane %v1574, %v1577
  %v1579 = vlaneseq
  %v1580 = vshrl.u32 %v1579, 7
  %v1581 = vsub.s32 1, %v1580
  %v1582 = vrot.slane %v1574, %v1581
  %v1583 = vlaneseq
  %v1584 = vshrl.u32 %v1583, 7
  %v1585 = vsub.s32 2, %v1584
  %v1586 = vrot.slane %v1574, %v1585
  %v1587 = vlaneseq
  %v1588 = vshrl.u32 %v1587, 7
  %v1589 = vsub.s32 3, %v1588
  %v1590 = vrot.slane %v1574, %v1589
  %v1591 = vlaneseq
  %v1592 = vshrl.u32 %v1591, 7
  %v1593 = vsub.s32 4, %v1592
  %v1594 = vrot.slane %v1574, %v1593
  %v1595 = vlaneseq
  %v1596 = vshrl.u32 %v1595, 7
  %v1597 = vsub.s32 5, %v1596
  %v1598 = vrot.slane %v1574, %v1597
  %vm1599 = vcmp.eq.s32.totalorder %v1578, 1
  %vm1600 = vcmp.eq.s32.totalorder %v1582, 1
  %vm1601 = vcmp.eq.s32.totalorder %v1586, 1
  %vm1602 = vcmp.eq.s32.totalorder %v1590, 1
  %vm1603 = vcmp.eq.s32.totalorder %v1594, 1
  %vm1604 = vcmp.eq.s32.totalorder %v1598, 1
  %v1605 = vsel %vm1599, %v1568, 0.0
  %v1606 = vsel %vm1600, %v1569, 0.0
  %v1607 = vsel %vm1601, %v1570, 0.0
  %v1608 = vsel %vm1602, %v1571, 0.0
  %v1609 = vsel %vm1603, %v1572, 0.0
  %v1610 = vsel %vm1604, %v1573, 0.0
  %v1611 = vpack.c.bf16 %v1605, %v1605
  %v1612 = vpack.c.bf16 %v1606, %v1606
  %v1613 = vpack.c.bf16 %v1607, %v1607
  %v1614 = vpack.c.bf16 %v1608, %v1608
  %v1615 = vpack.c.bf16 %v1609, %v1609
  %v1616 = vpack.c.bf16 %v1610, %v1610
  %1623 = vrot.lane.b32.xlu0 %v1611, 19
  %v1624 = vpop.permute.xlu0 %1623
  %1625 = vrot.lane.b32.xlu0 %v1612, 19
  %v1626 = vpop.permute.xlu0 %1625
  %1627 = vrot.lane.b32.xlu0 %v1613, 19
  %v1628 = vpop.permute.xlu0 %1627
  %1629 = vrot.lane.b32.xlu0 %v1614, 19
  %v1630 = vpop.permute.xlu0 %1629
  %1631 = vrot.lane.b32.xlu0 %v1615, 19
  %v1632 = vpop.permute.xlu0 %1631
  %1633 = vrot.lane.b32.xlu0 %v1616, 19
  %v1634 = vpop.permute.xlu0 %1633
  %vm1635 = vcmask 154624
  %v1636 = vsel %vm1635, %v1624, %v1626
  %v1637 = vsel %vm1635, %v1626, %v1628
  %v1638 = vsel %vm1635, %v1628, %v1630
  %v1639 = vsel %vm1635, %v1630, %v1632
  %v1640 = vsel %vm1635, %v1632, %v1634
  %vm1641 = vcmask 154624
  %v1644 = vsel %vm1641, 0, %v1624
  %vm1645 = vcmask 220160
  %v1647 = vsel %vm1645, %v1640, 0
  %v1648 = vld [vmem:[%s5] sm:$0xff]
  %v1649 = vld [vmem:[%s5 + $0x8] sm:$0xff]
  %v1650 = vld [vmem:[%s4] sm:$0xf]
  %v1651 = vld [vmem:[%s4 + $0x4] sm:$0xf]
  %s1652 = scalar_lea.vmem %s4, 8
  %v1653 = vld [vmem:[%s1652] sm:$0xf]
  %v1654 = vld [vmem:[%s1652 + $0x4] sm:$0xf]
  %v1657 = vunpack.c.l.b16 %v1653
  %v1658 = vunpack.c.l.b16 %v1654
  %v1659 = vpack.c.b16 %v1658, %v1657
  %1662 = vrot.lane.b32.xlu0 %v1644, 127
  %v1663 = vpop.permute.xlu0 %1662
  %1664 = vrot.lane.b32.xlu0 %v1636, 127
  %v1665 = vpop.permute.xlu0 %1664
  %1666 = vrot.lane.b32.xlu0 %v1637, 127
  %v1667 = vpop.permute.xlu0 %1666
  %1668 = vrot.lane.b32.xlu0 %v1638, 127
  %v1669 = vpop.permute.xlu0 %1668
  %1670 = vrot.lane.b32.xlu0 %v1639, 127
  %v1671 = vpop.permute.xlu0 %1670
  %1672 = vrot.lane.b32.xlu0 %v1647, 127
  %v1673 = vpop.permute.xlu0 %1672
  %v1674 = vsel %vm71, %v1663, %v1665
  %v1675 = vsel %vm71, %v1665, %v1667
  %v1676 = vsel %vm71, %v1667, %v1669
  %v1677 = vsel %vm71, %v1669, %v1671
  %v1678 = vsel %vm71, %v1671, %v1673
  %vm1679 = vcmask 64512
  %v1681 = vsel %vm1679, %v1659, 0
  %vm1683 = vcmask 1043456
  %v1685 = vsel %vm1683, %v1674, 0
  %v1688 = vsel %vm1683, %v1675, 0
  %v1691 = vsel %vm1683, %v1676, 0
  %v1694 = vsel %vm1683, %v1677, 0
  %v1697 = vsel %vm1683, %v1678, 0
  %v1700 = vsel %vm1683, %v1673, 0
  %1702 = vmatprep.subr.bf16.mxu0 %v1688
  %1703 = vmatpush1.bf16.msra.mxu0 %v1685
  %1704 = vmatprep.subr.bf16.mxu0 0
  %1705 = vmatpush1.bf16.msra.mxu0 0
  %1706 = vmatprep.subr.bf16.mxu0 0
  %1707 = vmatpush1.bf16.msra.mxu0 0
  %1708 = vmatprep.subr.bf16.mxu0 0
  %1709 = vmatpush1.bf16.msra.mxu0 0
  %1710 = vmatprep.subr.bf16.mxu0 0
  %1711 = vmatpush1.bf16.msra.mxu0 0
  %1712 = vmatprep.subr.bf16.mxu0 0
  %1713 = vmatpush1.bf16.msra.mxu0 0
  %1714 = vmatprep.subr.bf16.mxu0 0
  %1715 = vmatpush1.bf16.msra.mxu0 0
  %1716 = vmatprep.subr.bf16.mxu0 0
  %1717 = vmatpush1.bf16.msra.mxu0 0
  %1718 = vmatprep.subr.bf16.mxu0 0
  %1719 = vmatpush1.bf16.msra.mxu0 0
  %1720 = vmatprep.subr.bf16.mxu0 0
  %1721 = vmatpush1.bf16.msra.mxu0 0
  %1722 = vmatprep.subr.bf16.mxu0 0
  %1723 = vmatpush1.bf16.msra.mxu0 0
  %1724 = vmatprep.subr.bf16.mxu0 0
  %1725 = vmatpush1.bf16.msra.mxu0 0
  %1726 = vmatprep.subr.bf16.mxu0 0
  %1727 = vmatpush1.bf16.msra.mxu0 0
  %1728 = vmatprep.subr.bf16.mxu0 0
  %1729 = vmatpush1.bf16.msra.mxu0 0
  %1730 = vmatprep.subr.bf16.mxu0 0
  %1731 = vmatpush1.bf16.msra.mxu0 0
  %1732 = vmatprep.subr.bf16.mxu0 0
  %1733 = vmatpush1.bf16.msra.mxu0 0
  %1734 = vmatprep.mubr.bf16.mxu0 0
  %1735 = vmatmul.mubr.bf16.gmra.mrb[0].mxu0 %v1681
  %v1736 = vpop.f32.mrb[0].mxu0
  %v1737 = vadd.f32 0.0, %v1736
  %v1738 = vpop.f32.mrb[0].mxu0
  %v1739 = vadd.f32 0.0, %v1738
  %v1740 = vpop.f32.mrb[0].mxu0
  %v1741 = vadd.f32 0.0, %v1740
  %v1742 = vpop.f32.mrb[0].mxu0
  %v1743 = vadd.f32 0.0, %v1742
  %1744 = vdwg.mxu0
  %1745 = vmatprep.subr.bf16.mxu0 %v1694
  %1746 = vmatpush1.bf16.msra.mxu0 %v1691
  %1747 = vmatprep.subr.bf16.mxu0 0
  %1748 = vmatpush1.bf16.msra.mxu0 0
  %1749 = vmatprep.subr.bf16.mxu0 0
  %1750 = vmatpush1.bf16.msra.mxu0 0
  %1751 = vmatprep.subr.bf16.mxu0 0
  %1752 = vmatpush1.bf16.msra.mxu0 0
  %1753 = vmatprep.subr.bf16.mxu0 0
  %1754 = vmatpush1.bf16.msra.mxu0 0
  %1755 = vmatprep.subr.bf16.mxu0 0
  %1756 = vmatpush1.bf16.msra.mxu0 0
  %1757 = vmatprep.subr.bf16.mxu0 0
  %1758 = vmatpush1.bf16.msra.mxu0 0
  %1759 = vmatprep.subr.bf16.mxu0 0
  %1760 = vmatpush1.bf16.msra.mxu0 0
  %1761 = vmatprep.subr.bf16.mxu0 0
  %1762 = vmatpush1.bf16.msra.mxu0 0
  %1763 = vmatprep.subr.bf16.mxu0 0
  %1764 = vmatpush1.bf16.msra.mxu0 0
  %1765 = vmatprep.subr.bf16.mxu0 0
  %1766 = vmatpush1.bf16.msra.mxu0 0
  %1767 = vmatprep.subr.bf16.mxu0 0
  %1768 = vmatpush1.bf16.msra.mxu0 0
  %1769 = vmatprep.subr.bf16.mxu0 0
  %1770 = vmatpush1.bf16.msra.mxu0 0
  %1771 = vmatprep.subr.bf16.mxu0 0
  %1772 = vmatpush1.bf16.msra.mxu0 0
  %1773 = vmatprep.subr.bf16.mxu0 0
  %1774 = vmatpush1.bf16.msra.mxu0 0
  %1775 = vmatprep.subr.bf16.mxu0 0
  %1776 = vmatpush1.bf16.msra.mxu0 0
  %1777 = vmatprep.mubr.bf16.mxu0 0
  %1778 = vmatmul.mubr.bf16.gmra.mrb[0].mxu0 %v1681
  %v1779 = vpop.f32.mrb[0].mxu0
  %v1780 = vadd.f32 0.0, %v1779
  %v1781 = vpop.f32.mrb[0].mxu0
  %v1782 = vadd.f32 0.0, %v1781
  %v1783 = vpop.f32.mrb[0].mxu0
  %v1784 = vadd.f32 0.0, %v1783
  %v1785 = vpop.f32.mrb[0].mxu0
  %v1786 = vadd.f32 0.0, %v1785
  %1787 = vdwg.mxu0
  %1788 = vmatprep.subr.bf16.mxu0 %v1700
  %1789 = vmatpush1.bf16.msra.mxu0 %v1697
  %1790 = vmatprep.subr.bf16.mxu0 0
  %1791 = vmatpush1.bf16.msra.mxu0 0
  %1792 = vmatprep.subr.bf16.mxu0 0
  %1793 = vmatpush1.bf16.msra.mxu0 0
  %1794 = vmatprep.subr.bf16.mxu0 0
  %1795 = vmatpush1.bf16.msra.mxu0 0
  %1796 = vmatprep.subr.bf16.mxu0 0
  %1797 = vmatpush1.bf16.msra.mxu0 0
  %1798 = vmatprep.subr.bf16.mxu0 0
  %1799 = vmatpush1.bf16.msra.mxu0 0
  %1800 = vmatprep.subr.bf16.mxu0 0
  %1801 = vmatpush1.bf16.msra.mxu0 0
  %1802 = vmatprep.subr.bf16.mxu0 0
  %1803 = vmatpush1.bf16.msra.mxu0 0
  %1804 = vmatprep.subr.bf16.mxu0 0
  %1805 = vmatpush1.bf16.msra.mxu0 0
  %1806 = vmatprep.subr.bf16.mxu0 0
  %1807 = vmatpush1.bf16.msra.mxu0 0
  %1808 = vmatprep.subr.bf16.mxu0 0
  %1809 = vmatpush1.bf16.msra.mxu0 0
  %1810 = vmatprep.subr.bf16.mxu0 0
  %1811 = vmatpush1.bf16.msra.mxu0 0
  %1812 = vmatprep.subr.bf16.mxu0 0
  %1813 = vmatpush1.bf16.msra.mxu0 0
  %1814 = vmatprep.subr.bf16.mxu0 0
  %1815 = vmatpush1.bf16.msra.mxu0 0
  %1816 = vmatprep.subr.bf16.mxu0 0
  %1817 = vmatpush1.bf16.msra.mxu0 0
  %1818 = vmatprep.subr.bf16.mxu0 0
  %1819 = vmatpush1.bf16.msra.mxu0 0
  %1820 = vmatprep.mubr.bf16.mxu0 0
  %1821 = vmatmul.mubr.bf16.gmra.mrb[0].mxu0 %v1681
  %v1822 = vpop.f32.mrb[0].mxu0
  %v1823 = vadd.f32 0.0, %v1822
  %v1824 = vpop.f32.mrb[0].mxu0
  %v1825 = vpop.f32.mrb[0].mxu0
  %v1826 = vadd.f32 0.0, %v1825
  %v1827 = vpop.f32.mrb[0].mxu0
  %1828 = vdwg.mxu0
  %v1831 = vunpack.c.l.b16 %v1650
  %v1832 = vunpack.c.l.b16 %v1651
  %v1833 = vpack.c.b16 %v1832, %v1831
  %v1835 = vsel %vm1679, %v1833, 0
  %v1837 = vsel %vm1683, %v1644, 0
  %v1840 = vsel %vm1683, %v1636, 0
  %v1843 = vsel %vm1683, %v1637, 0
  %v1846 = vsel %vm1683, %v1638, 0
  %v1849 = vsel %vm1683, %v1639, 0
  %v1851 = vsel %vm1683, %v1647, 0
  %1853 = vmatprep.subr.bf16.mxu0 %v1840
  %1854 = vmatpush1.bf16.msra.mxu0 %v1837
  %1855 = vmatprep.subr.bf16.mxu0 0
  %1856 = vmatpush1.bf16.msra.mxu0 0
  %1857 = vmatprep.subr.bf16.mxu0 0
  %1858 = vmatpush1.bf16.msra.mxu0 0
  %1859 = vmatprep.subr.bf16.mxu0 0
  %1860 = vmatpush1.bf16.msra.mxu0 0
  %1861 = vmatprep.subr.bf16.mxu0 0
  %1862 = vmatpush1.bf16.msra.mxu0 0
  %1863 = vmatprep.subr.bf16.mxu0 0
  %1864 = vmatpush1.bf16.msra.mxu0 0
  %1865 = vmatprep.subr.bf16.mxu0 0
  %1866 = vmatpush1.bf16.msra.mxu0 0
  %1867 = vmatprep.subr.bf16.mxu0 0
  %1868 = vmatpush1.bf16.msra.mxu0 0
  %1869 = vmatprep.subr.bf16.mxu0 0
  %1870 = vmatpush1.bf16.msra.mxu0 0
  %1871 = vmatprep.subr.bf16.mxu0 0
  %1872 = vmatpush1.bf16.msra.mxu0 0
  %1873 = vmatprep.subr.bf16.mxu0 0
  %1874 = vmatpush1.bf16.msra.mxu0 0
  %1875 = vmatprep.subr.bf16.mxu0 0
  %1876 = vmatpush1.bf16.msra.mxu0 0
  %1877 = vmatprep.subr.bf16.mxu0 0
  %1878 = vmatpush1.bf16.msra.mxu0 0
  %1879 = vmatprep.subr.bf16.mxu0 0
  %1880 = vmatpush1.bf16.msra.mxu0 0
  %1881 = vmatprep.subr.bf16.mxu0 0
  %1882 = vmatpush1.bf16.msra.mxu0 0
  %1883 = vmatprep.subr.bf16.mxu0 0
  %1884 = vmatpush1.bf16.msra.mxu0 0
  %1885 = vmatprep.mubr.bf16.mxu0 0
  %1886 = vmatmul.mubr.bf16.gmra.mrb[0].mxu0 %v1835
  %v1887 = vpop.f32.mrb[0].mxu0
  %v1888 = vadd.f32 %v1737, %v1887
  %v1889 = vpop.f32.mrb[0].mxu0
  %v1890 = vadd.f32 %v1739, %v1889
  %v1891 = vpop.f32.mrb[0].mxu0
  %v1892 = vadd.f32 %v1741, %v1891
  %v1893 = vpop.f32.mrb[0].mxu0
  %v1894 = vadd.f32 %v1743, %v1893
  %1895 = vdwg.mxu0
  %1896 = vmatprep.subr.bf16.mxu0 %v1846
  %1897 = vmatpush1.bf16.msra.mxu0 %v1843
  %1898 = vmatprep.subr.bf16.mxu0 0
  %1899 = vmatpush1.bf16.msra.mxu0 0
  %1900 = vmatprep.subr.bf16.mxu0 0
  %1901 = vmatpush1.bf16.msra.mxu0 0
  %1902 = vmatprep.subr.bf16.mxu0 0
  %1903 = vmatpush1.bf16.msra.mxu0 0
  %1904 = vmatprep.subr.bf16.mxu0 0
  %1905 = vmatpush1.bf16.msra.mxu0 0
  %1906 = vmatprep.subr.bf16.mxu0 0
  %1907 = vmatpush1.bf16.msra.mxu0 0
  %1908 = vmatprep.subr.bf16.mxu0 0
  %1909 = vmatpush1.bf16.msra.mxu0 0
  %1910 = vmatprep.subr.bf16.mxu0 0
  %1911 = vmatpush1.bf16.msra.mxu0 0
  %1912 = vmatprep.subr.bf16.mxu0 0
  %1913 = vmatpush1.bf16.msra.mxu0 0
  %1914 = vmatprep.subr.bf16.mxu0 0
  %1915 = vmatpush1.bf16.msra.mxu0 0
  %1916 = vmatprep.subr.bf16.mxu0 0
  %1917 = vmatpush1.bf16.msra.mxu0 0
  %1918 = vmatprep.subr.bf16.mxu0 0
  %1919 = vmatpush1.bf16.msra.mxu0 0
  %1920 = vmatprep.subr.bf16.mxu0 0
  %1921 = vmatpush1.bf16.msra.mxu0 0
  %1922 = vmatprep.subr.bf16.mxu0 0
  %1923 = vmatpush1.bf16.msra.mxu0 0
  %1924 = vmatprep.subr.bf16.mxu0 0
  %1925 = vmatpush1.bf16.msra.mxu0 0
  %1926 = vmatprep.subr.bf16.mxu0 0
  %1927 = vmatpush1.bf16.msra.mxu0 0
  %1928 = vmatprep.mubr.bf16.mxu0 0
  %1929 = vmatmul.mubr.bf16.gmra.mrb[0].mxu0 %v1835
  %v1930 = vpop.f32.mrb[0].mxu0
  %v1931 = vadd.f32 %v1780, %v1930
  %v1932 = vpop.f32.mrb[0].mxu0
  %v1933 = vadd.f32 %v1782, %v1932
  %v1934 = vpop.f32.mrb[0].mxu0
  %v1935 = vadd.f32 %v1784, %v1934
  %v1936 = vpop.f32.mrb[0].mxu0
  %v1937 = vadd.f32 %v1786, %v1936
  %1938 = vdwg.mxu0
  %1939 = vmatprep.subr.bf16.mxu0 %v1851
  %1940 = vmatpush1.bf16.msra.mxu0 %v1849
  %1941 = vmatprep.subr.bf16.mxu0 0
  %1942 = vmatpush1.bf16.msra.mxu0 0
  %1943 = vmatprep.subr.bf16.mxu0 0
  %1944 = vmatpush1.bf16.msra.mxu0 0
  %1945 = vmatprep.subr.bf16.mxu0 0
  %1946 = vmatpush1.bf16.msra.mxu0 0
  %1947 = vmatprep.subr.bf16.mxu0 0
  %1948 = vmatpush1.bf16.msra.mxu0 0
  %1949 = vmatprep.subr.bf16.mxu0 0
  %1950 = vmatpush1.bf16.msra.mxu0 0
  %1951 = vmatprep.subr.bf16.mxu0 0
  %1952 = vmatpush1.bf16.msra.mxu0 0
  %1953 = vmatprep.subr.bf16.mxu0 0
  %1954 = vmatpush1.bf16.msra.mxu0 0
  %1955 = vmatprep.subr.bf16.mxu0 0
  %1956 = vmatpush1.bf16.msra.mxu0 0
  %1957 = vmatprep.subr.bf16.mxu0 0
  %1958 = vmatpush1.bf16.msra.mxu0 0
  %1959 = vmatprep.subr.bf16.mxu0 0
  %1960 = vmatpush1.bf16.msra.mxu0 0
  %1961 = vmatprep.subr.bf16.mxu0 0
  %1962 = vmatpush1.bf16.msra.mxu0 0
  %1963 = vmatprep.subr.bf16.mxu0 0
  %1964 = vmatpush1.bf16.msra.mxu0 0
  %1965 = vmatprep.subr.bf16.mxu0 0
  %1966 = vmatpush1.bf16.msra.mxu0 0
  %1967 = vmatprep.subr.bf16.mxu0 0
  %1968 = vmatpush1.bf16.msra.mxu0 0
  %1969 = vmatprep.subr.bf16.mxu0 0
  %1970 = vmatpush1.bf16.msra.mxu0 0
  %1971 = vmatprep.mubr.bf16.mxu0 0
  %1972 = vmatmul.mubr.bf16.gmra.mrb[0].mxu0 %v1835
  %v1973 = vpop.f32.mrb[0].mxu0
  %v1974 = vadd.f32 %v1823, %v1973
  %v1975 = vpop.f32.mrb[0].mxu0
  %v1976 = vpop.f32.mrb[0].mxu0
  %v1977 = vadd.f32 %v1826, %v1976
  %v1978 = vpop.f32.mrb[0].mxu0
  %1979 = vdwg.mxu0
  %s1980 = scalar_lea.vmem %s4, 16
  %v1981 = vld [vmem:[%s1980] sm:$0xf]
  %v1982 = vld [vmem:[%s1980 + $0x4] sm:$0xf]
  %v1985 = vunpack.c.l.b16 %v1981
  %v1986 = vunpack.c.l.b16 %v1982
  %v1987 = vpack.c.b16 %v1986, %v1985
  %1988 = vrot.lane.b32.xlu0 %v1644, 126
  %v1989 = vpop.permute.xlu0 %1988
  %1990 = vrot.lane.b32.xlu0 %v1636, 126
  %v1991 = vpop.permute.xlu0 %1990
  %1992 = vrot.lane.b32.xlu0 %v1637, 126
  %v1993 = vpop.permute.xlu0 %1992
  %1994 = vrot.lane.b32.xlu0 %v1638, 126
  %v1995 = vpop.permute.xlu0 %1994
  %1996 = vrot.lane.b32.xlu0 %v1639, 126
  %v1997 = vpop.permute.xlu0 %1996
  %1998 = vrot.lane.b32.xlu0 %v1647, 126
  %v1999 = vpop.permute.xlu0 %1998
  %v2000 = vsel %vm381, %v1989, %v1991
  %v2001 = vsel %vm381, %v1991, %v1993
  %v2002 = vsel %vm381, %v1993, %v1995
  %v2003 = vsel %vm381, %v1995, %v1997
  %v2004 = vsel %vm381, %v1997, %v1999
  %v2006 = vsel %vm1679, %v1987, 0
  %v2009 = vsel %vm1683, %v2000, 0
  %v2012 = vsel %vm1683, %v2001, 0
  %v2015 = vsel %vm1683, %v2002, 0
  %v2018 = vsel %vm1683, %v2003, 0
  %v2021 = vsel %vm1683, %v2004, 0
  %v2024 = vsel %vm1683, %v1999, 0
  %2026 = vmatprep.subr.bf16.mxu0 %v2012
  %2027 = vmatpush1.bf16.msra.mxu0 %v2009
  %2028 = vmatprep.subr.bf16.mxu0 0
  %2029 = vmatpush1.bf16.msra.mxu0 0
  %2030 = vmatprep.subr.bf16.mxu0 0
  %2031 = vmatpush1.bf16.msra.mxu0 0
  %2032 = vmatprep.subr.bf16.mxu0 0
  %2033 = vmatpush1.bf16.msra.mxu0 0
  %2034 = vmatprep.subr.bf16.mxu0 0
  %2035 = vmatpush1.bf16.msra.mxu0 0
  %2036 = vmatprep.subr.bf16.mxu0 0
  %2037 = vmatpush1.bf16.msra.mxu0 0
  %2038 = vmatprep.subr.bf16.mxu0 0
  %2039 = vmatpush1.bf16.msra.mxu0 0
  %2040 = vmatprep.subr.bf16.mxu0 0
  %2041 = vmatpush1.bf16.msra.mxu0 0
  %2042 = vmatprep.subr.bf16.mxu0 0
  %2043 = vmatpush1.bf16.msra.mxu0 0
  %2044 = vmatprep.subr.bf16.mxu0 0
  %2045 = vmatpush1.bf16.msra.mxu0 0
  %2046 = vmatprep.subr.bf16.mxu0 0
  %2047 = vmatpush1.bf16.msra.mxu0 0
  %2048 = vmatprep.subr.bf16.mxu0 0
  %2049 = vmatpush1.bf16.msra.mxu0 0
  %2050 = vmatprep.subr.bf16.mxu0 0
  %2051 = vmatpush1.bf16.msra.mxu0 0
  %2052 = vmatprep.subr.bf16.mxu0 0
  %2053 = vmatpush1.bf16.msra.mxu0 0
  %2054 = vmatprep.subr.bf16.mxu0 0
  %2055 = vmatpush1.bf16.msra.mxu0 0
  %2056 = vmatprep.subr.bf16.mxu0 0
  %2057 = vmatpush1.bf16.msra.mxu0 0
  %2058 = vmatprep.mubr.bf16.mxu0 0
  %2059 = vmatmul.mubr.bf16.gmra.mrb[0].mxu0 %v2006
  %v2060 = vpop.f32.mrb[0].mxu0
  %v2061 = vadd.f32 0.0, %v2060
  %v2062 = vpop.f32.mrb[0].mxu0
  %v2063 = vadd.f32 0.0, %v2062
  %v2064 = vpop.f32.mrb[0].mxu0
  %v2065 = vadd.f32 0.0, %v2064
  %v2066 = vpop.f32.mrb[0].mxu0
  %v2067 = vadd.f32 0.0, %v2066
  %2068 = vdwg.mxu0
  %2069 = vmatprep.subr.bf16.mxu0 %v2018
  %2070 = vmatpush1.bf16.msra.mxu0 %v2015
  %2071 = vmatprep.subr.bf16.mxu0 0
  %2072 = vmatpush1.bf16.msra.mxu0 0
  %2073 = vmatprep.subr.bf16.mxu0 0
  %2074 = vmatpush1.bf16.msra.mxu0 0
  %2075 = vmatprep.subr.bf16.mxu0 0
  %2076 = vmatpush1.bf16.msra.mxu0 0
  %2077 = vmatprep.subr.bf16.mxu0 0
  %2078 = vmatpush1.bf16.msra.mxu0 0
  %2079 = vmatprep.subr.bf16.mxu0 0
  %2080 = vmatpush1.bf16.msra.mxu0 0
  %2081 = vmatprep.subr.bf16.mxu0 0
  %2082 = vmatpush1.bf16.msra.mxu0 0
  %2083 = vmatprep.subr.bf16.mxu0 0
  %2084 = vmatpush1.bf16.msra.mxu0 0
  %2085 = vmatprep.subr.bf16.mxu0 0
  %2086 = vmatpush1.bf16.msra.mxu0 0
  %2087 = vmatprep.subr.bf16.mxu0 0
  %2088 = vmatpush1.bf16.msra.mxu0 0
  %2089 = vmatprep.subr.bf16.mxu0 0
  %2090 = vmatpush1.bf16.msra.mxu0 0
  %2091 = vmatprep.subr.bf16.mxu0 0
  %2092 = vmatpush1.bf16.msra.mxu0 0
  %2093 = vmatprep.subr.bf16.mxu0 0
  %2094 = vmatpush1.bf16.msra.mxu0 0
  %2095 = vmatprep.subr.bf16.mxu0 0
  %2096 = vmatpush1.bf16.msra.mxu0 0
  %2097 = vmatprep.subr.bf16.mxu0 0
  %2098 = vmatpush1.bf16.msra.mxu0 0
  %2099 = vmatprep.subr.bf16.mxu0 0
  %2100 = vmatpush1.bf16.msra.mxu0 0
  %2101 = vmatprep.mubr.bf16.mxu0 0
  %2102 = vmatmul.mubr.bf16.gmra.mrb[0].mxu0 %v2006
  %v2103 = vpop.f32.mrb[0].mxu0
  %v2104 = vadd.f32 0.0, %v2103
  %v2105 = vpop.f32.mrb[0].mxu0
  %v2106 = vadd.f32 0.0, %v2105
  %v2107 = vpop.f32.mrb[0].mxu0
  %v2108 = vadd.f32 0.0, %v2107
  %v2109 = vpop.f32.mrb[0].mxu0
  %v2110 = vadd.f32 0.0, %v2109
  %2111 = vdwg.mxu0
  %2112 = vmatprep.subr.bf16.mxu0 %v2024
  %2113 = vmatpush1.bf16.msra.mxu0 %v2021
  %2114 = vmatprep.subr.bf16.mxu0 0
  %2115 = vmatpush1.bf16.msra.mxu0 0
  %2116 = vmatprep.subr.bf16.mxu0 0
  %2117 = vmatpush1.bf16.msra.mxu0 0
  %2118 = vmatprep.subr.bf16.mxu0 0
  %2119 = vmatpush1.bf16.msra.mxu0 0
  %2120 = vmatprep.subr.bf16.mxu0 0
  %2121 = vmatpush1.bf16.msra.mxu0 0
  %2122 = vmatprep.subr.bf16.mxu0 0
  %2123 = vmatpush1.bf16.msra.mxu0 0
  %2124 = vmatprep.subr.bf16.mxu0 0
  %2125 = vmatpush1.bf16.msra.mxu0 0
  %2126 = vmatprep.subr.bf16.mxu0 0
  %2127 = vmatpush1.bf16.msra.mxu0 0
  %2128 = vmatprep.subr.bf16.mxu0 0
  %2129 = vmatpush1.bf16.msra.mxu0 0
  %2130 = vmatprep.subr.bf16.mxu0 0
  %2131 = vmatpush1.bf16.msra.mxu0 0
  %2132 = vmatprep.subr.bf16.mxu0 0
  %2133 = vmatpush1.bf16.msra.mxu0 0
  %2134 = vmatprep.subr.bf16.mxu0 0
  %2135 = vmatpush1.bf16.msra.mxu0 0
  %2136 = vmatprep.subr.bf16.mxu0 0
  %2137 = vmatpush1.bf16.msra.mxu0 0
  %2138 = vmatprep.subr.bf16.mxu0 0
  %2139 = vmatpush1.bf16.msra.mxu0 0
  %2140 = vmatprep.subr.bf16.mxu0 0
  %2141 = vmatpush1.bf16.msra.mxu0 0
  %2142 = vmatprep.subr.bf16.mxu0 0
  %2143 = vmatpush1.bf16.msra.mxu0 0
  %2144 = vmatprep.mubr.bf16.mxu0 0
  %2145 = vmatmul.mubr.bf16.gmra.mrb[0].mxu0 %v2006
  %v2146 = vpop.f32.mrb[0].mxu0
  %v2147 = vadd.f32 0.0, %v2146
  %v2148 = vpop.f32.mrb[0].mxu0
  %v2149 = vpop.f32.mrb[0].mxu0
  %v2150 = vadd.f32 0.0, %v2149
  %v2151 = vpop.f32.mrb[0].mxu0
  %2152 = vdwg.mxu0
  %v2153 = vadd.f32 %v1888, %v2061
  %v2154 = vadd.f32 %v1890, %v2063
  %v2155 = vadd.f32 %v1931, %v2104
  %v2156 = vadd.f32 %v1933, %v2106
  %v2157 = vadd.f32 %v1974, %v2147
  %v2158 = vadd.f32 %v1892, %v2065
  %v2159 = vadd.f32 %v1894, %v2067
  %v2160 = vadd.f32 %v1935, %v2108
  %v2161 = vadd.f32 %v1937, %v2110
  %v2162 = vadd.f32 %v1977, %v2150
  %s2163 = scalar_lea.vmem %s4, 24
  %v2164 = vld [vmem:[%s2163] sm:$0xf]
  %v2165 = vld [vmem:[%s2163 + $0x4] sm:$0xf]
  %v2168 = vunpack.c.l.b16 %v2164
  %v2169 = vunpack.c.l.b16 %v2165
  %v2170 = vpack.c.b16 %v2169, %v2168
  %2171 = vrot.lane.b32.xlu0 %v1644, 110
  %v2172 = vpop.permute.xlu0 %2171
  %2173 = vrot.lane.b32.xlu0 %v1636, 110
  %v2174 = vpop.permute.xlu0 %2173
  %2175 = vrot.lane.b32.xlu0 %v1637, 110
  %v2176 = vpop.permute.xlu0 %2175
  %2177 = vrot.lane.b32.xlu0 %v1638, 110
  %v2178 = vpop.permute.xlu0 %2177
  %2179 = vrot.lane.b32.xlu0 %v1639, 110
  %v2180 = vpop.permute.xlu0 %2179
  %2181 = vrot.lane.b32.xlu0 %v1647, 110
  %v2182 = vpop.permute.xlu0 %2181
  %v2183 = vsel %vm551, %v2172, %v2174
  %v2184 = vsel %vm551, %v2174, %v2176
  %v2185 = vsel %vm551, %v2176, %v2178
  %v2186 = vsel %vm551, %v2178, %v2180
  %v2187 = vsel %vm551, %v2180, %v2182
  %v2189 = vsel %vm1679, %v2170, 0
  %v2192 = vsel %vm1683, %v2183, 0
  %v2195 = vsel %vm1683, %v2184, 0
  %v2198 = vsel %vm1683, %v2185, 0
  %v2201 = vsel %vm1683, %v2186, 0
  %v2204 = vsel %vm1683, %v2187, 0
  %v2207 = vsel %vm1683, %v2182, 0
  %2209 = vmatprep.subr.bf16.mxu0 %v2195
  %2210 = vmatpush1.bf16.msra.mxu0 %v2192
  %2211 = vmatprep.subr.bf16.mxu0 0
  %2212 = vmatpush1.bf16.msra.mxu0 0
  %2213 = vmatprep.subr.bf16.mxu0 0
  %2214 = vmatpush1.bf16.msra.mxu0 0
  %2215 = vmatprep.subr.bf16.mxu0 0
  %2216 = vmatpush1.bf16.msra.mxu0 0
  %2217 = vmatprep.subr.bf16.mxu0 0
  %2218 = vmatpush1.bf16.msra.mxu0 0
  %2219 = vmatprep.subr.bf16.mxu0 0
  %2220 = vmatpush1.bf16.msra.mxu0 0
  %2221 = vmatprep.subr.bf16.mxu0 0
  %2222 = vmatpush1.bf16.msra.mxu0 0
  %2223 = vmatprep.subr.bf16.mxu0 0
  %2224 = vmatpush1.bf16.msra.mxu0 0
  %2225 = vmatprep.subr.bf16.mxu0 0
  %2226 = vmatpush1.bf16.msra.mxu0 0
  %2227 = vmatprep.subr.bf16.mxu0 0
  %2228 = vmatpush1.bf16.msra.mxu0 0
  %2229 = vmatprep.subr.bf16.mxu0 0
  %2230 = vmatpush1.bf16.msra.mxu0 0
  %2231 = vmatprep.subr.bf16.mxu0 0
  %2232 = vmatpush1.bf16.msra.mxu0 0
  %2233 = vmatprep.subr.bf16.mxu0 0
  %2234 = vmatpush1.bf16.msra.mxu0 0
  %2235 = vmatprep.subr.bf16.mxu0 0
  %2236 = vmatpush1.bf16.msra.mxu0 0
  %2237 = vmatprep.subr.bf16.mxu0 0
  %2238 = vmatpush1.bf16.msra.mxu0 0
  %2239 = vmatprep.subr.bf16.mxu0 0
  %2240 = vmatpush1.bf16.msra.mxu0 0
  %2241 = vmatprep.mubr.bf16.mxu0 0
  %2242 = vmatmul.mubr.bf16.gmra.mrb[0].mxu0 %v2189
  %v2243 = vpop.f32.mrb[0].mxu0
  %v2244 = vadd.f32 0.0, %v2243
  %v2245 = vpop.f32.mrb[0].mxu0
  %v2246 = vadd.f32 0.0, %v2245
  %v2247 = vpop.f32.mrb[0].mxu0
  %v2248 = vadd.f32 0.0, %v2247
  %v2249 = vpop.f32.mrb[0].mxu0
  %v2250 = vadd.f32 0.0, %v2249
  %2251 = vdwg.mxu0
  %2252 = vmatprep.subr.bf16.mxu0 %v2201
  %2253 = vmatpush1.bf16.msra.mxu0 %v2198
  %2254 = vmatprep.subr.bf16.mxu0 0
  %2255 = vmatpush1.bf16.msra.mxu0 0
  %2256 = vmatprep.subr.bf16.mxu0 0
  %2257 = vmatpush1.bf16.msra.mxu0 0
  %2258 = vmatprep.subr.bf16.mxu0 0
  %2259 = vmatpush1.bf16.msra.mxu0 0
  %2260 = vmatprep.subr.bf16.mxu0 0
  %2261 = vmatpush1.bf16.msra.mxu0 0
  %2262 = vmatprep.subr.bf16.mxu0 0
  %2263 = vmatpush1.bf16.msra.mxu0 0
  %2264 = vmatprep.subr.bf16.mxu0 0
  %2265 = vmatpush1.bf16.msra.mxu0 0
  %2266 = vmatprep.subr.bf16.mxu0 0
  %2267 = vmatpush1.bf16.msra.mxu0 0
  %2268 = vmatprep.subr.bf16.mxu0 0
  %2269 = vmatpush1.bf16.msra.mxu0 0
  %2270 = vmatprep.subr.bf16.mxu0 0
  %2271 = vmatpush1.bf16.msra.mxu0 0
  %2272 = vmatprep.subr.bf16.mxu0 0
  %2273 = vmatpush1.bf16.msra.mxu0 0
  %2274 = vmatprep.subr.bf16.mxu0 0
  %2275 = vmatpush1.bf16.msra.mxu0 0
  %2276 = vmatprep.subr.bf16.mxu0 0
  %2277 = vmatpush1.bf16.msra.mxu0 0
  %2278 = vmatprep.subr.bf16.mxu0 0
  %2279 = vmatpush1.bf16.msra.mxu0 0
  %2280 = vmatprep.subr.bf16.mxu0 0
  %2281 = vmatpush1.bf16.msra.mxu0 0
  %2282 = vmatprep.subr.bf16.mxu0 0
  %2283 = vmatpush1.bf16.msra.mxu0 0
  %2284 = vmatprep.mubr.bf16.mxu0 0
  %2285 = vmatmul.mubr.bf16.gmra.mrb[0].mxu0 %v2189
  %v2286 = vpop.f32.mrb[0].mxu0
  %v2287 = vadd.f32 0.0, %v2286
  %v2288 = vpop.f32.mrb[0].mxu0
  %v2289 = vadd.f32 0.0, %v2288
  %v2290 = vpop.f32.mrb[0].mxu0
  %v2291 = vadd.f32 0.0, %v2290
  %v2292 = vpop.f32.mrb[0].mxu0
  %v2293 = vadd.f32 0.0, %v2292
  %2294 = vdwg.mxu0
  %2295 = vmatprep.subr.bf16.mxu0 %v2207
  %2296 = vmatpush1.bf16.msra.mxu0 %v2204
  %2297 = vmatprep.subr.bf16.mxu0 0
  %2298 = vmatpush1.bf16.msra.mxu0 0
  %2299 = vmatprep.subr.bf16.mxu0 0
  %2300 = vmatpush1.bf16.msra.mxu0 0
  %2301 = vmatprep.subr.bf16.mxu0 0
  %2302 = vmatpush1.bf16.msra.mxu0 0
  %2303 = vmatprep.subr.bf16.mxu0 0
  %2304 = vmatpush1.bf16.msra.mxu0 0
  %2305 = vmatprep.subr.bf16.mxu0 0
  %2306 = vmatpush1.bf16.msra.mxu0 0
  %2307 = vmatprep.subr.bf16.mxu0 0
  %2308 = vmatpush1.bf16.msra.mxu0 0
  %2309 = vmatprep.subr.bf16.mxu0 0
  %2310 = vmatpush1.bf16.msra.mxu0 0
  %2311 = vmatprep.subr.bf16.mxu0 0
  %2312 = vmatpush1.bf16.msra.mxu0 0
  %2313 = vmatprep.subr.bf16.mxu0 0
  %2314 = vmatpush1.bf16.msra.mxu0 0
  %2315 = vmatprep.subr.bf16.mxu0 0
  %2316 = vmatpush1.bf16.msra.mxu0 0
  %2317 = vmatprep.subr.bf16.mxu0 0
  %2318 = vmatpush1.bf16.msra.mxu0 0
  %2319 = vmatprep.subr.bf16.mxu0 0
  %2320 = vmatpush1.bf16.msra.mxu0 0
  %2321 = vmatprep.subr.bf16.mxu0 0
  %2322 = vmatpush1.bf16.msra.mxu0 0
  %2323 = vmatprep.subr.bf16.mxu0 0
  %2324 = vmatpush1.bf16.msra.mxu0 0
  %2325 = vmatprep.subr.bf16.mxu0 0
  %2326 = vmatpush1.bf16.msra.mxu0 0
  %2327 = vmatprep.mubr.bf16.mxu0 0
  %2328 = vmatmul.mubr.bf16.gmra.mrb[0].mxu0 %v2189
  %v2329 = vpop.f32.mrb[0].mxu0
  %v2330 = vadd.f32 0.0, %v2329
  %v2331 = vpop.f32.mrb[0].mxu0
  %v2332 = vpop.f32.mrb[0].mxu0
  %v2333 = vadd.f32 0.0, %v2332
  %v2334 = vpop.f32.mrb[0].mxu0
  %2335 = vdwg.mxu0
  %v2336 = vadd.f32 %v2153, %v2244
  %v2337 = vadd.f32 %v2154, %v2246
  %v2338 = vadd.f32 %v2155, %v2287
  %v2339 = vadd.f32 %v2156, %v2289
  %v2340 = vadd.f32 %v2157, %v2330
  %v2341 = vadd.f32 %v2158, %v2248
  %v2342 = vadd.f32 %v2159, %v2250
  %v2343 = vadd.f32 %v2160, %v2291
  %v2344 = vadd.f32 %v2161, %v2293
  %v2345 = vadd.f32 %v2162, %v2333
  %s2346 = scalar_lea.vmem %s4, 32
  %v2347 = vld [vmem:[%s2346] sm:$0xf]
  %v2348 = vld [vmem:[%s2346 + $0x4] sm:$0xf]
  %v2351 = vunpack.c.l.b16 %v2347
  %v2352 = vunpack.c.l.b16 %v2348
  %v2353 = vpack.c.b16 %v2352, %v2351
  %2354 = vrot.lane.b32.xlu0 %v1644, 109
  %v2355 = vpop.permute.xlu0 %2354
  %2356 = vrot.lane.b32.xlu0 %v1636, 109
  %v2357 = vpop.permute.xlu0 %2356
  %2358 = vrot.lane.b32.xlu0 %v1637, 109
  %v2359 = vpop.permute.xlu0 %2358
  %2360 = vrot.lane.b32.xlu0 %v1638, 109
  %v2361 = vpop.permute.xlu0 %2360
  %2362 = vrot.lane.b32.xlu0 %v1639, 109
  %v2363 = vpop.permute.xlu0 %2362
  %2364 = vrot.lane.b32.xlu0 %v1647, 109
  %v2365 = vpop.permute.xlu0 %2364
  %v2366 = vsel %vm721, %v2355, %v2357
  %v2367 = vsel %vm721, %v2357, %v2359
  %v2368 = vsel %vm721, %v2359, %v2361
  %v2369 = vsel %vm721, %v2361, %v2363
  %v2370 = vsel %vm721, %v2363, %v2365
  %v2372 = vsel %vm1679, %v2353, 0
  %v2375 = vsel %vm1683, %v2366, 0
  %v2378 = vsel %vm1683, %v2367, 0
  %v2381 = vsel %vm1683, %v2368, 0
  %v2384 = vsel %vm1683, %v2369, 0
  %v2387 = vsel %vm1683, %v2370, 0
  %v2390 = vsel %vm1683, %v2365, 0
  %2392 = vmatprep.subr.bf16.mxu0 %v2378
  %2393 = vmatpush1.bf16.msra.mxu0 %v2375
  %2394 = vmatprep.subr.bf16.mxu0 0
  %2395 = vmatpush1.bf16.msra.mxu0 0
  %2396 = vmatprep.subr.bf16.mxu0 0
  %2397 = vmatpush1.bf16.msra.mxu0 0
  %2398 = vmatprep.subr.bf16.mxu0 0
  %2399 = vmatpush1.bf16.msra.mxu0 0
  %2400 = vmatprep.subr.bf16.mxu0 0
  %2401 = vmatpush1.bf16.msra.mxu0 0
  %2402 = vmatprep.subr.bf16.mxu0 0
  %2403 = vmatpush1.bf16.msra.mxu0 0
  %2404 = vmatprep.subr.bf16.mxu0 0
  %2405 = vmatpush1.bf16.msra.mxu0 0
  %2406 = vmatprep.subr.bf16.mxu0 0
  %2407 = vmatpush1.bf16.msra.mxu0 0
  %2408 = vmatprep.subr.bf16.mxu0 0
  %2409 = vmatpush1.bf16.msra.mxu0 0
  %2410 = vmatprep.subr.bf16.mxu0 0
  %2411 = vmatpush1.bf16.msra.mxu0 0
  %2412 = vmatprep.subr.bf16.mxu0 0
  %2413 = vmatpush1.bf16.msra.mxu0 0
  %2414 = vmatprep.subr.bf16.mxu0 0
  %2415 = vmatpush1.bf16.msra.mxu0 0
  %2416 = vmatprep.subr.bf16.mxu0 0
  %2417 = vmatpush1.bf16.msra.mxu0 0
  %2418 = vmatprep.subr.bf16.mxu0 0
  %2419 = vmatpush1.bf16.msra.mxu0 0
  %2420 = vmatprep.subr.bf16.mxu0 0
  %2421 = vmatpush1.bf16.msra.mxu0 0
  %2422 = vmatprep.subr.bf16.mxu0 0
  %2423 = vmatpush1.bf16.msra.mxu0 0
  %2424 = vmatprep.mubr.bf16.mxu0 0
  %2425 = vmatmul.mubr.bf16.gmra.mrb[0].mxu0 %v2372
  %v2426 = vpop.f32.mrb[0].mxu0
  %v2427 = vadd.f32 0.0, %v2426
  %v2428 = vpop.f32.mrb[0].mxu0
  %v2429 = vadd.f32 0.0, %v2428
  %v2430 = vpop.f32.mrb[0].mxu0
  %v2431 = vadd.f32 0.0, %v2430
  %v2432 = vpop.f32.mrb[0].mxu0
  %v2433 = vadd.f32 0.0, %v2432
  %2434 = vdwg.mxu0
  %2435 = vmatprep.subr.bf16.mxu0 %v2384
  %2436 = vmatpush1.bf16.msra.mxu0 %v2381
  %2437 = vmatprep.subr.bf16.mxu0 0
  %2438 = vmatpush1.bf16.msra.mxu0 0
  %2439 = vmatprep.subr.bf16.mxu0 0
  %2440 = vmatpush1.bf16.msra.mxu0 0
  %2441 = vmatprep.subr.bf16.mxu0 0
  %2442 = vmatpush1.bf16.msra.mxu0 0
  %2443 = vmatprep.subr.bf16.mxu0 0
  %2444 = vmatpush1.bf16.msra.mxu0 0
  %2445 = vmatprep.subr.bf16.mxu0 0
  %2446 = vmatpush1.bf16.msra.mxu0 0
  %2447 = vmatprep.subr.bf16.mxu0 0
  %2448 = vmatpush1.bf16.msra.mxu0 0
  %2449 = vmatprep.subr.bf16.mxu0 0
  %2450 = vmatpush1.bf16.msra.mxu0 0
  %2451 = vmatprep.subr.bf16.mxu0 0
  %2452 = vmatpush1.bf16.msra.mxu0 0
  %2453 = vmatprep.subr.bf16.mxu0 0
  %2454 = vmatpush1.bf16.msra.mxu0 0
  %2455 = vmatprep.subr.bf16.mxu0 0
  %2456 = vmatpush1.bf16.msra.mxu0 0
  %2457 = vmatprep.subr.bf16.mxu0 0
  %2458 = vmatpush1.bf16.msra.mxu0 0
  %2459 = vmatprep.subr.bf16.mxu0 0
  %2460 = vmatpush1.bf16.msra.mxu0 0
  %2461 = vmatprep.subr.bf16.mxu0 0
  %2462 = vmatpush1.bf16.msra.mxu0 0
  %2463 = vmatprep.subr.bf16.mxu0 0
  %2464 = vmatpush1.bf16.msra.mxu0 0
  %2465 = vmatprep.subr.bf16.mxu0 0
  %2466 = vmatpush1.bf16.msra.mxu0 0
  %2467 = vmatprep.mubr.bf16.mxu0 0
  %2468 = vmatmul.mubr.bf16.gmra.mrb[0].mxu0 %v2372
  %v2469 = vpop.f32.mrb[0].mxu0
  %v2470 = vadd.f32 0.0, %v2469
  %v2471 = vpop.f32.mrb[0].mxu0
  %v2472 = vadd.f32 0.0, %v2471
  %v2473 = vpop.f32.mrb[0].mxu0
  %v2474 = vadd.f32 0.0, %v2473
  %v2475 = vpop.f32.mrb[0].mxu0
  %v2476 = vadd.f32 0.0, %v2475
  %2477 = vdwg.mxu0
  %2478 = vmatprep.subr.bf16.mxu0 %v2390
  %2479 = vmatpush1.bf16.msra.mxu0 %v2387
  %2480 = vmatprep.subr.bf16.mxu0 0
  %2481 = vmatpush1.bf16.msra.mxu0 0
  %2482 = vmatprep.subr.bf16.mxu0 0
  %2483 = vmatpush1.bf16.msra.mxu0 0
  %2484 = vmatprep.subr.bf16.mxu0 0
  %2485 = vmatpush1.bf16.msra.mxu0 0
  %2486 = vmatprep.subr.bf16.mxu0 0
  %2487 = vmatpush1.bf16.msra.mxu0 0
  %2488 = vmatprep.subr.bf16.mxu0 0
  %2489 = vmatpush1.bf16.msra.mxu0 0
  %2490 = vmatprep.subr.bf16.mxu0 0
  %2491 = vmatpush1.bf16.msra.mxu0 0
  %2492 = vmatprep.subr.bf16.mxu0 0
  %2493 = vmatpush1.bf16.msra.mxu0 0
  %2494 = vmatprep.subr.bf16.mxu0 0
  %2495 = vmatpush1.bf16.msra.mxu0 0
  %2496 = vmatprep.subr.bf16.mxu0 0
  %2497 = vmatpush1.bf16.msra.mxu0 0
  %2498 = vmatprep.subr.bf16.mxu0 0
  %2499 = vmatpush1.bf16.msra.mxu0 0
  %2500 = vmatprep.subr.bf16.mxu0 0
  %2501 = vmatpush1.bf16.msra.mxu0 0
  %2502 = vmatprep.subr.bf16.mxu0 0
  %2503 = vmatpush1.bf16.msra.mxu0 0
  %2504 = vmatprep.subr.bf16.mxu0 0
  %2505 = vmatpush1.bf16.msra.mxu0 0
  %2506 = vmatprep.subr.bf16.mxu0 0
  %2507 = vmatpush1.bf16.msra.mxu0 0
  %2508 = vmatprep.subr.bf16.mxu0 0
  %2509 = vmatpush1.bf16.msra.mxu0 0
  %2510 = vmatprep.mubr.bf16.mxu0 0
  %2511 = vmatmul.mubr.bf16.gmra.mrb[0].mxu0 %v2372
  %v2512 = vpop.f32.mrb[0].mxu0
  %v2513 = vadd.f32 0.0, %v2512
  %v2514 = vpop.f32.mrb[0].mxu0
  %v2515 = vpop.f32.mrb[0].mxu0
  %v2516 = vadd.f32 0.0, %v2515
  %v2517 = vpop.f32.mrb[0].mxu0
  %2518 = vdwg.mxu0
  %v2519 = vadd.f32 %v2336, %v2427
  %v2520 = vadd.f32 %v2337, %v2429
  %v2521 = vadd.f32 %v2338, %v2470
  %v2522 = vadd.f32 %v2339, %v2472
  %v2523 = vadd.f32 %v2340, %v2513
  %v2524 = vadd.f32 %v2341, %v2431
  %v2525 = vadd.f32 %v2342, %v2433
  %v2526 = vadd.f32 %v2343, %v2474
  %v2527 = vadd.f32 %v2344, %v2476
  %v2528 = vadd.f32 %v2345, %v2516
  %s2529 = scalar_lea.vmem %s4, 40
  %v2530 = vld [vmem:[%s2529] sm:$0xf]
  %v2531 = vld [vmem:[%s2529 + $0x4] sm:$0xf]
  %v2534 = vunpack.c.l.b16 %v2530
  %v2535 = vunpack.c.l.b16 %v2531
  %v2536 = vpack.c.b16 %v2535, %v2534
  %2537 = vrot.lane.b32.xlu0 %v1644, 108
  %v2538 = vpop.permute.xlu0 %2537
  %2539 = vrot.lane.b32.xlu0 %v1636, 108
  %v2540 = vpop.permute.xlu0 %2539
  %2541 = vrot.lane.b32.xlu0 %v1637, 108
  %v2542 = vpop.permute.xlu0 %2541
  %2543 = vrot.lane.b32.xlu0 %v1638, 108
  %v2544 = vpop.permute.xlu0 %2543
  %2545 = vrot.lane.b32.xlu0 %v1639, 108
  %v2546 = vpop.permute.xlu0 %2545
  %2547 = vrot.lane.b32.xlu0 %v1647, 108
  %v2548 = vpop.permute.xlu0 %2547
  %v2549 = vsel %vm891, %v2538, %v2540
  %v2550 = vsel %vm891, %v2540, %v2542
  %v2551 = vsel %vm891, %v2542, %v2544
  %v2552 = vsel %vm891, %v2544, %v2546
  %v2553 = vsel %vm891, %v2546, %v2548
  %v2555 = vsel %vm1679, %v2536, 0
  %v2558 = vsel %vm1683, %v2549, 0
  %v2561 = vsel %vm1683, %v2550, 0
  %v2564 = vsel %vm1683, %v2551, 0
  %v2567 = vsel %vm1683, %v2552, 0
  %v2570 = vsel %vm1683, %v2553, 0
  %v2573 = vsel %vm1683, %v2548, 0
  %2575 = vmatprep.subr.bf16.mxu0 %v2561
  %2576 = vmatpush1.bf16.msra.mxu0 %v2558
  %2577 = vmatprep.subr.bf16.mxu0 0
  %2578 = vmatpush1.bf16.msra.mxu0 0
  %2579 = vmatprep.subr.bf16.mxu0 0
  %2580 = vmatpush1.bf16.msra.mxu0 0
  %2581 = vmatprep.subr.bf16.mxu0 0
  %2582 = vmatpush1.bf16.msra.mxu0 0
  %2583 = vmatprep.subr.bf16.mxu0 0
  %2584 = vmatpush1.bf16.msra.mxu0 0
  %2585 = vmatprep.subr.bf16.mxu0 0
  %2586 = vmatpush1.bf16.msra.mxu0 0
  %2587 = vmatprep.subr.bf16.mxu0 0
  %2588 = vmatpush1.bf16.msra.mxu0 0
  %2589 = vmatprep.subr.bf16.mxu0 0
  %2590 = vmatpush1.bf16.msra.mxu0 0
  %2591 = vmatprep.subr.bf16.mxu0 0
  %2592 = vmatpush1.bf16.msra.mxu0 0
  %2593 = vmatprep.subr.bf16.mxu0 0
  %2594 = vmatpush1.bf16.msra.mxu0 0
  %2595 = vmatprep.subr.bf16.mxu0 0
  %2596 = vmatpush1.bf16.msra.mxu0 0
  %2597 = vmatprep.subr.bf16.mxu0 0
  %2598 = vmatpush1.bf16.msra.mxu0 0
  %2599 = vmatprep.subr.bf16.mxu0 0
  %2600 = vmatpush1.bf16.msra.mxu0 0
  %2601 = vmatprep.subr.bf16.mxu0 0
  %2602 = vmatpush1.bf16.msra.mxu0 0
  %2603 = vmatprep.subr.bf16.mxu0 0
  %2604 = vmatpush1.bf16.msra.mxu0 0
  %2605 = vmatprep.subr.bf16.mxu0 0
  %2606 = vmatpush1.bf16.msra.mxu0 0
  %2607 = vmatprep.mubr.bf16.mxu0 0
  %2608 = vmatmul.mubr.bf16.gmra.mrb[0].mxu0 %v2555
  %v2609 = vpop.f32.mrb[0].mxu0
  %v2610 = vadd.f32 0.0, %v2609
  %v2611 = vpop.f32.mrb[0].mxu0
  %v2612 = vadd.f32 0.0, %v2611
  %v2613 = vpop.f32.mrb[0].mxu0
  %v2614 = vadd.f32 0.0, %v2613
  %v2615 = vpop.f32.mrb[0].mxu0
  %v2616 = vadd.f32 0.0, %v2615
  %2617 = vdwg.mxu0
  %2618 = vmatprep.subr.bf16.mxu0 %v2567
  %2619 = vmatpush1.bf16.msra.mxu0 %v2564
  %2620 = vmatprep.subr.bf16.mxu0 0
  %2621 = vmatpush1.bf16.msra.mxu0 0
  %2622 = vmatprep.subr.bf16.mxu0 0
  %2623 = vmatpush1.bf16.msra.mxu0 0
  %2624 = vmatprep.subr.bf16.mxu0 0
  %2625 = vmatpush1.bf16.msra.mxu0 0
  %2626 = vmatprep.subr.bf16.mxu0 0
  %2627 = vmatpush1.bf16.msra.mxu0 0
  %2628 = vmatprep.subr.bf16.mxu0 0
  %2629 = vmatpush1.bf16.msra.mxu0 0
  %2630 = vmatprep.subr.bf16.mxu0 0
  %2631 = vmatpush1.bf16.msra.mxu0 0
  %2632 = vmatprep.subr.bf16.mxu0 0
  %2633 = vmatpush1.bf16.msra.mxu0 0
  %2634 = vmatprep.subr.bf16.mxu0 0
  %2635 = vmatpush1.bf16.msra.mxu0 0
  %2636 = vmatprep.subr.bf16.mxu0 0
  %2637 = vmatpush1.bf16.msra.mxu0 0
  %2638 = vmatprep.subr.bf16.mxu0 0
  %2639 = vmatpush1.bf16.msra.mxu0 0
  %2640 = vmatprep.subr.bf16.mxu0 0
  %2641 = vmatpush1.bf16.msra.mxu0 0
  %2642 = vmatprep.subr.bf16.mxu0 0
  %2643 = vmatpush1.bf16.msra.mxu0 0
  %2644 = vmatprep.subr.bf16.mxu0 0
  %2645 = vmatpush1.bf16.msra.mxu0 0
  %2646 = vmatprep.subr.bf16.mxu0 0
  %2647 = vmatpush1.bf16.msra.mxu0 0
  %2648 = vmatprep.subr.bf16.mxu0 0
  %2649 = vmatpush1.bf16.msra.mxu0 0
  %2650 = vmatprep.mubr.bf16.mxu0 0
  %2651 = vmatmul.mubr.bf16.gmra.mrb[0].mxu0 %v2555
  %v2652 = vpop.f32.mrb[0].mxu0
  %v2653 = vadd.f32 0.0, %v2652
  %v2654 = vpop.f32.mrb[0].mxu0
  %v2655 = vadd.f32 0.0, %v2654
  %v2656 = vpop.f32.mrb[0].mxu0
  %v2657 = vadd.f32 0.0, %v2656
  %v2658 = vpop.f32.mrb[0].mxu0
  %v2659 = vadd.f32 0.0, %v2658
  %2660 = vdwg.mxu0
  %2661 = vmatprep.subr.bf16.mxu0 %v2573
  %2662 = vmatpush1.bf16.msra.mxu0 %v2570
  %2663 = vmatprep.subr.bf16.mxu0 0
  %2664 = vmatpush1.bf16.msra.mxu0 0
  %2665 = vmatprep.subr.bf16.mxu0 0
  %2666 = vmatpush1.bf16.msra.mxu0 0
  %2667 = vmatprep.subr.bf16.mxu0 0
  %2668 = vmatpush1.bf16.msra.mxu0 0
  %2669 = vmatprep.subr.bf16.mxu0 0
  %2670 = vmatpush1.bf16.msra.mxu0 0
  %2671 = vmatprep.subr.bf16.mxu0 0
  %2672 = vmatpush1.bf16.msra.mxu0 0
  %2673 = vmatprep.subr.bf16.mxu0 0
  %2674 = vmatpush1.bf16.msra.mxu0 0
  %2675 = vmatprep.subr.bf16.mxu0 0
  %2676 = vmatpush1.bf16.msra.mxu0 0
  %2677 = vmatprep.subr.bf16.mxu0 0
  %2678 = vmatpush1.bf16.msra.mxu0 0
  %2679 = vmatprep.subr.bf16.mxu0 0
  %2680 = vmatpush1.bf16.msra.mxu0 0
  %2681 = vmatprep.subr.bf16.mxu0 0
  %2682 = vmatpush1.bf16.msra.mxu0 0
  %2683 = vmatprep.subr.bf16.mxu0 0
  %2684 = vmatpush1.bf16.msra.mxu0 0
  %2685 = vmatprep.subr.bf16.mxu0 0
  %2686 = vmatpush1.bf16.msra.mxu0 0
  %2687 = vmatprep.subr.bf16.mxu0 0
  %2688 = vmatpush1.bf16.msra.mxu0 0
  %2689 = vmatprep.subr.bf16.mxu0 0
  %2690 = vmatpush1.bf16.msra.mxu0 0
  %2691 = vmatprep.subr.bf16.mxu0 0
  %2692 = vmatpush1.bf16.msra.mxu0 0
  %2693 = vmatprep.mubr.bf16.mxu0 0
  %2694 = vmatmul.mubr.bf16.gmra.mrb[0].mxu0 %v2555
  %v2695 = vpop.f32.mrb[0].mxu0
  %v2696 = vadd.f32 0.0, %v2695
  %v2697 = vpop.f32.mrb[0].mxu0
  %v2698 = vpop.f32.mrb[0].mxu0
  %v2699 = vadd.f32 0.0, %v2698
  %v2700 = vpop.f32.mrb[0].mxu0
  %2701 = vdwg.mxu0
  %v2702 = vadd.f32 %v2519, %v2610
  %v2703 = vadd.f32 %v2520, %v2612
  %v2704 = vadd.f32 %v2521, %v2653
  %v2705 = vadd.f32 %v2522, %v2655
  %v2706 = vadd.f32 %v2523, %v2696
  %v2707 = vadd.f32 %v2524, %v2614
  %v2708 = vadd.f32 %v2525, %v2616
  %v2709 = vadd.f32 %v2526, %v2657
  %v2710 = vadd.f32 %v2527, %v2659
  %v2711 = vadd.f32 %v2528, %v2699
  %s2712 = scalar_lea.vmem %s4, 48
  %v2713 = vld [vmem:[%s2712] sm:$0xf]
  %v2714 = vld [vmem:[%s2712 + $0x4] sm:$0xf]
  %v2717 = vunpack.c.l.b16 %v2713
  %v2718 = vunpack.c.l.b16 %v2714
  %v2719 = vpack.c.b16 %v2718, %v2717
  %2720 = vrot.lane.b32.xlu0 %v1644, 92
  %v2721 = vpop.permute.xlu0 %2720
  %2722 = vrot.lane.b32.xlu0 %v1636, 92
  %v2723 = vpop.permute.xlu0 %2722
  %2724 = vrot.lane.b32.xlu0 %v1637, 92
  %v2725 = vpop.permute.xlu0 %2724
  %2726 = vrot.lane.b32.xlu0 %v1638, 92
  %v2727 = vpop.permute.xlu0 %2726
  %2728 = vrot.lane.b32.xlu0 %v1639, 92
  %v2729 = vpop.permute.xlu0 %2728
  %2730 = vrot.lane.b32.xlu0 %v1647, 92
  %v2731 = vpop.permute.xlu0 %2730
  %v2732 = vsel %vm1061, %v2721, %v2723
  %v2733 = vsel %vm1061, %v2723, %v2725
  %v2734 = vsel %vm1061, %v2725, %v2727
  %v2735 = vsel %vm1061, %v2727, %v2729
  %v2736 = vsel %vm1061, %v2729, %v2731
  %v2738 = vsel %vm1679, %v2719, 0
  %v2741 = vsel %vm1683, %v2732, 0
  %v2744 = vsel %vm1683, %v2733, 0
  %v2747 = vsel %vm1683, %v2734, 0
  %v2750 = vsel %vm1683, %v2735, 0
  %v2753 = vsel %vm1683, %v2736, 0
  %v2756 = vsel %vm1683, %v2731, 0
  %2758 = vmatprep.subr.bf16.mxu0 %v2744
  %2759 = vmatpush1.bf16.msra.mxu0 %v2741
  %2760 = vmatprep.subr.bf16.mxu0 0
  %2761 = vmatpush1.bf16.msra.mxu0 0
  %2762 = vmatprep.subr.bf16.mxu0 0
  %2763 = vmatpush1.bf16.msra.mxu0 0
  %2764 = vmatprep.subr.bf16.mxu0 0
  %2765 = vmatpush1.bf16.msra.mxu0 0
  %2766 = vmatprep.subr.bf16.mxu0 0
  %2767 = vmatpush1.bf16.msra.mxu0 0
  %2768 = vmatprep.subr.bf16.mxu0 0
  %2769 = vmatpush1.bf16.msra.mxu0 0
  %2770 = vmatprep.subr.bf16.mxu0 0
  %2771 = vmatpush1.bf16.msra.mxu0 0
  %2772 = vmatprep.subr.bf16.mxu0 0
  %2773 = vmatpush1.bf16.msra.mxu0 0
  %2774 = vmatprep.subr.bf16.mxu0 0
  %2775 = vmatpush1.bf16.msra.mxu0 0
  %2776 = vmatprep.subr.bf16.mxu0 0
  %2777 = vmatpush1.bf16.msra.mxu0 0
  %2778 = vmatprep.subr.bf16.mxu0 0
  %2779 = vmatpush1.bf16.msra.mxu0 0
  %2780 = vmatprep.subr.bf16.mxu0 0
  %2781 = vmatpush1.bf16.msra.mxu0 0
  %2782 = vmatprep.subr.bf16.mxu0 0
  %2783 = vmatpush1.bf16.msra.mxu0 0
  %2784 = vmatprep.subr.bf16.mxu0 0
  %2785 = vmatpush1.bf16.msra.mxu0 0
  %2786 = vmatprep.subr.bf16.mxu0 0
  %2787 = vmatpush1.bf16.msra.mxu0 0
  %2788 = vmatprep.subr.bf16.mxu0 0
  %2789 = vmatpush1.bf16.msra.mxu0 0
  %2790 = vmatprep.mubr.bf16.mxu0 0
  %2791 = vmatmul.mubr.bf16.gmra.mrb[0].mxu0 %v2738
  %v2792 = vpop.f32.mrb[0].mxu0
  %v2793 = vadd.f32 0.0, %v2792
  %v2794 = vpop.f32.mrb[0].mxu0
  %v2795 = vadd.f32 0.0, %v2794
  %v2796 = vpop.f32.mrb[0].mxu0
  %v2797 = vadd.f32 0.0, %v2796
  %v2798 = vpop.f32.mrb[0].mxu0
  %v2799 = vadd.f32 0.0, %v2798
  %2800 = vdwg.mxu0
  %2801 = vmatprep.subr.bf16.mxu0 %v2750
  %2802 = vmatpush1.bf16.msra.mxu0 %v2747
  %2803 = vmatprep.subr.bf16.mxu0 0
  %2804 = vmatpush1.bf16.msra.mxu0 0
  %2805 = vmatprep.subr.bf16.mxu0 0
  %2806 = vmatpush1.bf16.msra.mxu0 0
  %2807 = vmatprep.subr.bf16.mxu0 0
  %2808 = vmatpush1.bf16.msra.mxu0 0
  %2809 = vmatprep.subr.bf16.mxu0 0
  %2810 = vmatpush1.bf16.msra.mxu0 0
  %2811 = vmatprep.subr.bf16.mxu0 0
  %2812 = vmatpush1.bf16.msra.mxu0 0
  %2813 = vmatprep.subr.bf16.mxu0 0
  %2814 = vmatpush1.bf16.msra.mxu0 0
  %2815 = vmatprep.subr.bf16.mxu0 0
  %2816 = vmatpush1.bf16.msra.mxu0 0
  %2817 = vmatprep.subr.bf16.mxu0 0
  %2818 = vmatpush1.bf16.msra.mxu0 0
  %2819 = vmatprep.subr.bf16.mxu0 0
  %2820 = vmatpush1.bf16.msra.mxu0 0
  %2821 = vmatprep.subr.bf16.mxu0 0
  %2822 = vmatpush1.bf16.msra.mxu0 0
  %2823 = vmatprep.subr.bf16.mxu0 0
  %2824 = vmatpush1.bf16.msra.mxu0 0
  %2825 = vmatprep.subr.bf16.mxu0 0
  %2826 = vmatpush1.bf16.msra.mxu0 0
  %2827 = vmatprep.subr.bf16.mxu0 0
  %2828 = vmatpush1.bf16.msra.mxu0 0
  %2829 = vmatprep.subr.bf16.mxu0 0
  %2830 = vmatpush1.bf16.msra.mxu0 0
  %2831 = vmatprep.subr.bf16.mxu0 0
  %2832 = vmatpush1.bf16.msra.mxu0 0
  %2833 = vmatprep.mubr.bf16.mxu0 0
  %2834 = vmatmul.mubr.bf16.gmra.mrb[0].mxu0 %v2738
  %v2835 = vpop.f32.mrb[0].mxu0
  %v2836 = vadd.f32 0.0, %v2835
  %v2837 = vpop.f32.mrb[0].mxu0
  %v2838 = vadd.f32 0.0, %v2837
  %v2839 = vpop.f32.mrb[0].mxu0
  %v2840 = vadd.f32 0.0, %v2839
  %v2841 = vpop.f32.mrb[0].mxu0
  %v2842 = vadd.f32 0.0, %v2841
  %2843 = vdwg.mxu0
  %2844 = vmatprep.subr.bf16.mxu0 %v2756
  %2845 = vmatpush1.bf16.msra.mxu0 %v2753
  %2846 = vmatprep.subr.bf16.mxu0 0
  %2847 = vmatpush1.bf16.msra.mxu0 0
  %2848 = vmatprep.subr.bf16.mxu0 0
  %2849 = vmatpush1.bf16.msra.mxu0 0
  %2850 = vmatprep.subr.bf16.mxu0 0
  %2851 = vmatpush1.bf16.msra.mxu0 0
  %2852 = vmatprep.subr.bf16.mxu0 0
  %2853 = vmatpush1.bf16.msra.mxu0 0
  %2854 = vmatprep.subr.bf16.mxu0 0
  %2855 = vmatpush1.bf16.msra.mxu0 0
  %2856 = vmatprep.subr.bf16.mxu0 0
  %2857 = vmatpush1.bf16.msra.mxu0 0
  %2858 = vmatprep.subr.bf16.mxu0 0
  %2859 = vmatpush1.bf16.msra.mxu0 0
  %2860 = vmatprep.subr.bf16.mxu0 0
  %2861 = vmatpush1.bf16.msra.mxu0 0
  %2862 = vmatprep.subr.bf16.mxu0 0
  %2863 = vmatpush1.bf16.msra.mxu0 0
  %2864 = vmatprep.subr.bf16.mxu0 0
  %2865 = vmatpush1.bf16.msra.mxu0 0
  %2866 = vmatprep.subr.bf16.mxu0 0
  %2867 = vmatpush1.bf16.msra.mxu0 0
  %2868 = vmatprep.subr.bf16.mxu0 0
  %2869 = vmatpush1.bf16.msra.mxu0 0
  %2870 = vmatprep.subr.bf16.mxu0 0
  %2871 = vmatpush1.bf16.msra.mxu0 0
  %2872 = vmatprep.subr.bf16.mxu0 0
  %2873 = vmatpush1.bf16.msra.mxu0 0
  %2874 = vmatprep.subr.bf16.mxu0 0
  %2875 = vmatpush1.bf16.msra.mxu0 0
  %2876 = vmatprep.mubr.bf16.mxu0 0
  %2877 = vmatmul.mubr.bf16.gmra.mrb[0].mxu0 %v2738
  %v2878 = vpop.f32.mrb[0].mxu0
  %v2879 = vadd.f32 0.0, %v2878
  %v2880 = vpop.f32.mrb[0].mxu0
  %v2881 = vpop.f32.mrb[0].mxu0
  %v2882 = vadd.f32 0.0, %v2881
  %v2883 = vpop.f32.mrb[0].mxu0
  %2884 = vdwg.mxu0
  %v2885 = vadd.f32 %v2702, %v2793
  %v2886 = vadd.f32 %v2703, %v2795
  %v2887 = vadd.f32 %v2704, %v2836
  %v2888 = vadd.f32 %v2705, %v2838
  %v2889 = vadd.f32 %v2706, %v2879
  %v2890 = vadd.f32 %v2707, %v2797
  %v2891 = vadd.f32 %v2708, %v2799
  %v2892 = vadd.f32 %v2709, %v2840
  %v2893 = vadd.f32 %v2710, %v2842
  %v2894 = vadd.f32 %v2711, %v2882
  %s2895 = scalar_lea.vmem %s4, 56
  %v2896 = vld [vmem:[%s2895] sm:$0xf]
  %v2897 = vld [vmem:[%s2895 + $0x4] sm:$0xf]
  %v2900 = vunpack.c.l.b16 %v2896
  %v2901 = vunpack.c.l.b16 %v2897
  %v2902 = vpack.c.b16 %v2901, %v2900
  %2903 = vrot.lane.b32.xlu0 %v1644, 91
  %v2904 = vpop.permute.xlu0 %2903
  %2905 = vrot.lane.b32.xlu0 %v1636, 91
  %v2906 = vpop.permute.xlu0 %2905
  %2907 = vrot.lane.b32.xlu0 %v1637, 91
  %v2908 = vpop.permute.xlu0 %2907
  %2909 = vrot.lane.b32.xlu0 %v1638, 91
  %v2910 = vpop.permute.xlu0 %2909
  %2911 = vrot.lane.b32.xlu0 %v1639, 91
  %v2912 = vpop.permute.xlu0 %2911
  %2913 = vrot.lane.b32.xlu0 %v1647, 91
  %v2914 = vpop.permute.xlu0 %2913
  %v2915 = vsel %vm1231, %v2904, %v2906
  %v2916 = vsel %vm1231, %v2906, %v2908
  %v2917 = vsel %vm1231, %v2908, %v2910
  %v2918 = vsel %vm1231, %v2910, %v2912
  %v2919 = vsel %vm1231, %v2912, %v2914
  %v2921 = vsel %vm1679, %v2902, 0
  %v2924 = vsel %vm1683, %v2915, 0
  %v2927 = vsel %vm1683, %v2916, 0
  %v2930 = vsel %vm1683, %v2917, 0
  %v2933 = vsel %vm1683, %v2918, 0
  %v2936 = vsel %vm1683, %v2919, 0
  %v2939 = vsel %vm1683, %v2914, 0
  %2941 = vmatprep.subr.bf16.mxu0 %v2927
  %2942 = vmatpush1.bf16.msra.mxu0 %v2924
  %2943 = vmatprep.subr.bf16.mxu0 0
  %2944 = vmatpush1.bf16.msra.mxu0 0
  %2945 = vmatprep.subr.bf16.mxu0 0
  %2946 = vmatpush1.bf16.msra.mxu0 0
  %2947 = vmatprep.subr.bf16.mxu0 0
  %2948 = vmatpush1.bf16.msra.mxu0 0
  %2949 = vmatprep.subr.bf16.mxu0 0
  %2950 = vmatpush1.bf16.msra.mxu0 0
  %2951 = vmatprep.subr.bf16.mxu0 0
  %2952 = vmatpush1.bf16.msra.mxu0 0
  %2953 = vmatprep.subr.bf16.mxu0 0
  %2954 = vmatpush1.bf16.msra.mxu0 0
  %2955 = vmatprep.subr.bf16.mxu0 0
  %2956 = vmatpush1.bf16.msra.mxu0 0
  %2957 = vmatprep.subr.bf16.mxu0 0
  %2958 = vmatpush1.bf16.msra.mxu0 0
  %2959 = vmatprep.subr.bf16.mxu0 0
  %2960 = vmatpush1.bf16.msra.mxu0 0
  %2961 = vmatprep.subr.bf16.mxu0 0
  %2962 = vmatpush1.bf16.msra.mxu0 0
  %2963 = vmatprep.subr.bf16.mxu0 0
  %2964 = vmatpush1.bf16.msra.mxu0 0
  %2965 = vmatprep.subr.bf16.mxu0 0
  %2966 = vmatpush1.bf16.msra.mxu0 0
  %2967 = vmatprep.subr.bf16.mxu0 0
  %2968 = vmatpush1.bf16.msra.mxu0 0
  %2969 = vmatprep.subr.bf16.mxu0 0
  %2970 = vmatpush1.bf16.msra.mxu0 0
  %2971 = vmatprep.subr.bf16.mxu0 0
  %2972 = vmatpush1.bf16.msra.mxu0 0
  %2973 = vmatprep.mubr.bf16.mxu0 0
  %2974 = vmatmul.mubr.bf16.gmra.mrb[0].mxu0 %v2921
  %v2975 = vpop.f32.mrb[0].mxu0
  %v2976 = vadd.f32 0.0, %v2975
  %v2977 = vpop.f32.mrb[0].mxu0
  %v2978 = vadd.f32 0.0, %v2977
  %v2979 = vpop.f32.mrb[0].mxu0
  %v2980 = vadd.f32 0.0, %v2979
  %v2981 = vpop.f32.mrb[0].mxu0
  %v2982 = vadd.f32 0.0, %v2981
  %2983 = vdwg.mxu0
  %2984 = vmatprep.subr.bf16.mxu0 %v2933
  %2985 = vmatpush1.bf16.msra.mxu0 %v2930
  %2986 = vmatprep.subr.bf16.mxu0 0
  %2987 = vmatpush1.bf16.msra.mxu0 0
  %2988 = vmatprep.subr.bf16.mxu0 0
  %2989 = vmatpush1.bf16.msra.mxu0 0
  %2990 = vmatprep.subr.bf16.mxu0 0
  %2991 = vmatpush1.bf16.msra.mxu0 0
  %2992 = vmatprep.subr.bf16.mxu0 0
  %2993 = vmatpush1.bf16.msra.mxu0 0
  %2994 = vmatprep.subr.bf16.mxu0 0
  %2995 = vmatpush1.bf16.msra.mxu0 0
  %2996 = vmatprep.subr.bf16.mxu0 0
  %2997 = vmatpush1.bf16.msra.mxu0 0
  %2998 = vmatprep.subr.bf16.mxu0 0
  %2999 = vmatpush1.bf16.msra.mxu0 0
  %3000 = vmatprep.subr.bf16.mxu0 0
  %3001 = vmatpush1.bf16.msra.mxu0 0
  %3002 = vmatprep.subr.bf16.mxu0 0
  %3003 = vmatpush1.bf16.msra.mxu0 0
  %3004 = vmatprep.subr.bf16.mxu0 0
  %3005 = vmatpush1.bf16.msra.mxu0 0
  %3006 = vmatprep.subr.bf16.mxu0 0
  %3007 = vmatpush1.bf16.msra.mxu0 0
  %3008 = vmatprep.subr.bf16.mxu0 0
  %3009 = vmatpush1.bf16.msra.mxu0 0
  %3010 = vmatprep.subr.bf16.mxu0 0
  %3011 = vmatpush1.bf16.msra.mxu0 0
  %3012 = vmatprep.subr.bf16.mxu0 0
  %3013 = vmatpush1.bf16.msra.mxu0 0
  %3014 = vmatprep.subr.bf16.mxu0 0
  %3015 = vmatpush1.bf16.msra.mxu0 0
  %3016 = vmatprep.mubr.bf16.mxu0 0
  %3017 = vmatmul.mubr.bf16.gmra.mrb[0].mxu0 %v2921
  %v3018 = vpop.f32.mrb[0].mxu0
  %v3019 = vadd.f32 0.0, %v3018
  %v3020 = vpop.f32.mrb[0].mxu0
  %v3021 = vadd.f32 0.0, %v3020
  %v3022 = vpop.f32.mrb[0].mxu0
  %v3023 = vadd.f32 0.0, %v3022
  %v3024 = vpop.f32.mrb[0].mxu0
  %v3025 = vadd.f32 0.0, %v3024
  %3026 = vdwg.mxu0
  %3027 = vmatprep.subr.bf16.mxu0 %v2939
  %3028 = vmatpush1.bf16.msra.mxu0 %v2936
  %3029 = vmatprep.subr.bf16.mxu0 0
  %3030 = vmatpush1.bf16.msra.mxu0 0
  %3031 = vmatprep.subr.bf16.mxu0 0
  %3032 = vmatpush1.bf16.msra.mxu0 0
  %3033 = vmatprep.subr.bf16.mxu0 0
  %3034 = vmatpush1.bf16.msra.mxu0 0
  %3035 = vmatprep.subr.bf16.mxu0 0
  %3036 = vmatpush1.bf16.msra.mxu0 0
  %3037 = vmatprep.subr.bf16.mxu0 0
  %3038 = vmatpush1.bf16.msra.mxu0 0
  %3039 = vmatprep.subr.bf16.mxu0 0
  %3040 = vmatpush1.bf16.msra.mxu0 0
  %3041 = vmatprep.subr.bf16.mxu0 0
  %3042 = vmatpush1.bf16.msra.mxu0 0
  %3043 = vmatprep.subr.bf16.mxu0 0
  %3044 = vmatpush1.bf16.msra.mxu0 0
  %3045 = vmatprep.subr.bf16.mxu0 0
  %3046 = vmatpush1.bf16.msra.mxu0 0
  %3047 = vmatprep.subr.bf16.mxu0 0
  %3048 = vmatpush1.bf16.msra.mxu0 0
  %3049 = vmatprep.subr.bf16.mxu0 0
  %3050 = vmatpush1.bf16.msra.mxu0 0
  %3051 = vmatprep.subr.bf16.mxu0 0
  %3052 = vmatpush1.bf16.msra.mxu0 0
  %3053 = vmatprep.subr.bf16.mxu0 0
  %3054 = vmatpush1.bf16.msra.mxu0 0
  %3055 = vmatprep.subr.bf16.mxu0 0
  %3056 = vmatpush1.bf16.msra.mxu0 0
  %3057 = vmatprep.subr.bf16.mxu0 0
  %3058 = vmatpush1.bf16.msra.mxu0 0
  %3059 = vmatprep.mubr.bf16.mxu0 0
  %3060 = vmatmul.mubr.bf16.gmra.mrb[0].mxu0 %v2921
  %v3061 = vpop.f32.mrb[0].mxu0
  %v3062 = vadd.f32 0.0, %v3061
  %v3063 = vpop.f32.mrb[0].mxu0
  %v3064 = vpop.f32.mrb[0].mxu0
  %v3065 = vadd.f32 0.0, %v3064
  %v3066 = vpop.f32.mrb[0].mxu0
  %3067 = vdwg.mxu0
  %v3068 = vadd.f32 %v2885, %v2976
  %v3069 = vadd.f32 %v2886, %v2978
  %v3070 = vadd.f32 %v2887, %v3019
  %v3071 = vadd.f32 %v2888, %v3021
  %v3072 = vadd.f32 %v2889, %v3062
  %v3073 = vadd.f32 %v2890, %v2980
  %v3074 = vadd.f32 %v2891, %v2982
  %v3075 = vadd.f32 %v2892, %v3023
  %v3076 = vadd.f32 %v2893, %v3025
  %v3077 = vadd.f32 %v2894, %v3065
  %s3078 = scalar_lea.vmem %s4, 64
  %v3079 = vld [vmem:[%s3078] sm:$0xf]
  %v3080 = vld [vmem:[%s3078 + $0x4] sm:$0xf]
  %v3083 = vunpack.c.l.b16 %v3079
  %v3084 = vunpack.c.l.b16 %v3080
  %v3085 = vpack.c.b16 %v3084, %v3083
  %3086 = vrot.lane.b32.xlu0 %v1644, 90
  %v3087 = vpop.permute.xlu0 %3086
  %3088 = vrot.lane.b32.xlu0 %v1636, 90
  %v3089 = vpop.permute.xlu0 %3088
  %3090 = vrot.lane.b32.xlu0 %v1637, 90
  %v3091 = vpop.permute.xlu0 %3090
  %3092 = vrot.lane.b32.xlu0 %v1638, 90
  %v3093 = vpop.permute.xlu0 %3092
  %3094 = vrot.lane.b32.xlu0 %v1639, 90
  %v3095 = vpop.permute.xlu0 %3094
  %3096 = vrot.lane.b32.xlu0 %v1647, 90
  %v3097 = vpop.permute.xlu0 %3096
  %v3098 = vsel %vm1401, %v3087, %v3089
  %v3099 = vsel %vm1401, %v3089, %v3091
  %v3100 = vsel %vm1401, %v3091, %v3093
  %v3101 = vsel %vm1401, %v3093, %v3095
  %v3102 = vsel %vm1401, %v3095, %v3097
  %v3104 = vsel %vm1679, %v3085, 0
  %v3107 = vsel %vm1683, %v3098, 0
  %v3110 = vsel %vm1683, %v3099, 0
  %v3113 = vsel %vm1683, %v3100, 0
  %v3116 = vsel %vm1683, %v3101, 0
  %v3119 = vsel %vm1683, %v3102, 0
  %v3122 = vsel %vm1683, %v3097, 0
  %3124 = vmatprep.subr.bf16.mxu0 %v3110
  %3125 = vmatpush1.bf16.msra.mxu0 %v3107
  %3126 = vmatprep.subr.bf16.mxu0 0
  %3127 = vmatpush1.bf16.msra.mxu0 0
  %3128 = vmatprep.subr.bf16.mxu0 0
  %3129 = vmatpush1.bf16.msra.mxu0 0
  %3130 = vmatprep.subr.bf16.mxu0 0
  %3131 = vmatpush1.bf16.msra.mxu0 0
  %3132 = vmatprep.subr.bf16.mxu0 0
  %3133 = vmatpush1.bf16.msra.mxu0 0
  %3134 = vmatprep.subr.bf16.mxu0 0
  %3135 = vmatpush1.bf16.msra.mxu0 0
  %3136 = vmatprep.subr.bf16.mxu0 0
  %3137 = vmatpush1.bf16.msra.mxu0 0
  %3138 = vmatprep.subr.bf16.mxu0 0
  %3139 = vmatpush1.bf16.msra.mxu0 0
  %3140 = vmatprep.subr.bf16.mxu0 0
  %3141 = vmatpush1.bf16.msra.mxu0 0
  %3142 = vmatprep.subr.bf16.mxu0 0
  %3143 = vmatpush1.bf16.msra.mxu0 0
  %3144 = vmatprep.subr.bf16.mxu0 0
  %3145 = vmatpush1.bf16.msra.mxu0 0
  %3146 = vmatprep.subr.bf16.mxu0 0
  %3147 = vmatpush1.bf16.msra.mxu0 0
  %3148 = vmatprep.subr.bf16.mxu0 0
  %3149 = vmatpush1.bf16.msra.mxu0 0
  %3150 = vmatprep.subr.bf16.mxu0 0
  %3151 = vmatpush1.bf16.msra.mxu0 0
  %3152 = vmatprep.subr.bf16.mxu0 0
  %3153 = vmatpush1.bf16.msra.mxu0 0
  %3154 = vmatprep.subr.bf16.mxu0 0
  %3155 = vmatpush1.bf16.msra.mxu0 0
  %3156 = vmatprep.mubr.bf16.mxu0 0
  %3157 = vmatmul.mubr.bf16.gmra.mrb[0].mxu0 %v3104
  %v3158 = vpop.f32.mrb[0].mxu0
  %v3159 = vadd.f32 0.0, %v3158
  %v3160 = vpop.f32.mrb[0].mxu0
  %v3161 = vadd.f32 0.0, %v3160
  %v3162 = vpop.f32.mrb[0].mxu0
  %v3163 = vadd.f32 0.0, %v3162
  %v3164 = vpop.f32.mrb[0].mxu0
  %v3165 = vadd.f32 0.0, %v3164
  %3166 = vdwg.mxu0
  %3167 = vmatprep.subr.bf16.mxu0 %v3116
  %3168 = vmatpush1.bf16.msra.mxu0 %v3113
  %3169 = vmatprep.subr.bf16.mxu0 0
  %3170 = vmatpush1.bf16.msra.mxu0 0
  %3171 = vmatprep.subr.bf16.mxu0 0
  %3172 = vmatpush1.bf16.msra.mxu0 0
  %3173 = vmatprep.subr.bf16.mxu0 0
  %3174 = vmatpush1.bf16.msra.mxu0 0
  %3175 = vmatprep.subr.bf16.mxu0 0
  %3176 = vmatpush1.bf16.msra.mxu0 0
  %3177 = vmatprep.subr.bf16.mxu0 0
  %3178 = vmatpush1.bf16.msra.mxu0 0
  %3179 = vmatprep.subr.bf16.mxu0 0
  %3180 = vmatpush1.bf16.msra.mxu0 0
  %3181 = vmatprep.subr.bf16.mxu0 0
  %3182 = vmatpush1.bf16.msra.mxu0 0
  %3183 = vmatprep.subr.bf16.mxu0 0
  %3184 = vmatpush1.bf16.msra.mxu0 0
  %3185 = vmatprep.subr.bf16.mxu0 0
  %3186 = vmatpush1.bf16.msra.mxu0 0
  %3187 = vmatprep.subr.bf16.mxu0 0
  %3188 = vmatpush1.bf16.msra.mxu0 0
  %3189 = vmatprep.subr.bf16.mxu0 0
  %3190 = vmatpush1.bf16.msra.mxu0 0
  %3191 = vmatprep.subr.bf16.mxu0 0
  %3192 = vmatpush1.bf16.msra.mxu0 0
  %3193 = vmatprep.subr.bf16.mxu0 0
  %3194 = vmatpush1.bf16.msra.mxu0 0
  %3195 = vmatprep.subr.bf16.mxu0 0
  %3196 = vmatpush1.bf16.msra.mxu0 0
  %3197 = vmatprep.subr.bf16.mxu0 0
  %3198 = vmatpush1.bf16.msra.mxu0 0
  %3199 = vmatprep.mubr.bf16.mxu0 0
  %3200 = vmatmul.mubr.bf16.gmra.mrb[0].mxu0 %v3104
  %v3201 = vpop.f32.mrb[0].mxu0
  %v3202 = vadd.f32 0.0, %v3201
  %v3203 = vpop.f32.mrb[0].mxu0
  %v3204 = vadd.f32 0.0, %v3203
  %v3205 = vpop.f32.mrb[0].mxu0
  %v3206 = vadd.f32 0.0, %v3205
  %v3207 = vpop.f32.mrb[0].mxu0
  %v3208 = vadd.f32 0.0, %v3207
  %3209 = vdwg.mxu0
  %3210 = vmatprep.subr.bf16.mxu0 %v3122
  %3211 = vmatpush1.bf16.msra.mxu0 %v3119
  %3212 = vmatprep.subr.bf16.mxu0 0
  %3213 = vmatpush1.bf16.msra.mxu0 0
  %3214 = vmatprep.subr.bf16.mxu0 0
  %3215 = vmatpush1.bf16.msra.mxu0 0
  %3216 = vmatprep.subr.bf16.mxu0 0
  %3217 = vmatpush1.bf16.msra.mxu0 0
  %3218 = vmatprep.subr.bf16.mxu0 0
  %3219 = vmatpush1.bf16.msra.mxu0 0
  %3220 = vmatprep.subr.bf16.mxu0 0
  %3221 = vmatpush1.bf16.msra.mxu0 0
  %3222 = vmatprep.subr.bf16.mxu0 0
  %3223 = vmatpush1.bf16.msra.mxu0 0
  %3224 = vmatprep.subr.bf16.mxu0 0
  %3225 = vmatpush1.bf16.msra.mxu0 0
  %3226 = vmatprep.subr.bf16.mxu0 0
  %3227 = vmatpush1.bf16.msra.mxu0 0
  %3228 = vmatprep.subr.bf16.mxu0 0
  %3229 = vmatpush1.bf16.msra.mxu0 0
  %3230 = vmatprep.subr.bf16.mxu0 0
  %3231 = vmatpush1.bf16.msra.mxu0 0
  %3232 = vmatprep.subr.bf16.mxu0 0
  %3233 = vmatpush1.bf16.msra.mxu0 0
  %3234 = vmatprep.subr.bf16.mxu0 0
  %3235 = vmatpush1.bf16.msra.mxu0 0
  %3236 = vmatprep.subr.bf16.mxu0 0
  %3237 = vmatpush1.bf16.msra.mxu0 0
  %3238 = vmatprep.subr.bf16.mxu0 0
  %3239 = vmatpush1.bf16.msra.mxu0 0
  %3240 = vmatprep.subr.bf16.mxu0 0
  %3241 = vmatpush1.bf16.msra.mxu0 0
  %3242 = vmatprep.mubr.bf16.mxu0 0
  %3243 = vmatmul.mubr.bf16.gmra.mrb[0].mxu0 %v3104
  %v3244 = vpop.f32.mrb[0].mxu0
  %v3245 = vadd.f32 0.0, %v3244
  %v3246 = vpop.f32.mrb[0].mxu0
  %v3247 = vpop.f32.mrb[0].mxu0
  %v3248 = vadd.f32 0.0, %v3247
  %v3249 = vpop.f32.mrb[0].mxu0
  %3250 = vdwg.mxu0
  %v3251 = vadd.f32 %v3068, %v3159
  %v3252 = vadd.f32 %v3069, %v3161
  %v3253 = vadd.f32 %v3070, %v3202
  %v3254 = vadd.f32 %v3071, %v3204
  %v3255 = vadd.f32 %v3072, %v3245
  %v3256 = vadd.f32 %v3073, %v3163
  %v3257 = vadd.f32 %v3074, %v3165
  %v3258 = vadd.f32 %v3075, %v3206
  %v3259 = vadd.f32 %v3076, %v3208
  %v3260 = vadd.f32 %v3077, %v3248
  %3262 = vset.pattern.permute.xlu0 0
  %3263 = vperm.xlu0 %3262, %v1648
  %v3264 = vpop.permute.xlu0 %3263
  %3267 = vset.pattern.permute.xlu0 0
  %3268 = vperm.xlu0 %3267, %v1649
  %v3269 = vpop.permute.xlu0 %3268
  %v3271 = vadd.f32 %v3251, %v3264
  %v3272 = vadd.f32 %v3252, %v3264
  %v3273 = vadd.f32 %v3253, %v3264
  %v3274 = vadd.f32 %v3254, %v3264
  %v3275 = vadd.f32 %v3255, %v3264
  %v3276 = vadd.f32 %v3256, %v3269
  %v3277 = vadd.f32 %v3257, %v3269
  %v3278 = vadd.f32 %v3258, %v3269
  %v3279 = vadd.f32 %v3259, %v3269
  %v3280 = vadd.f32 %v3260, %v3269
  %v3281 = vmax.f32 %v3271, 0.0
  %v3282 = vmax.f32 %v3272, 0.0
  %v3283 = vmax.f32 %v3273, 0.0
  %v3284 = vmax.f32 %v3274, 0.0
  %v3285 = vmax.f32 %v3275, 0.0
  %v3286 = vmax.f32 %v3276, 0.0
  %v3287 = vmax.f32 %v3277, 0.0
  %v3288 = vmax.f32 %v3278, 0.0
  %v3289 = vmax.f32 %v3279, 0.0
  %v3290 = vmax.f32 %v3280, 0.0
  %3293 = vrot.lane.b32.xlu0 %v3281, 109
  %v3294 = vpop.permute.xlu0 %3293
  %3295 = vrot.lane.b32.xlu0 %v3286, 109
  %v3296 = vpop.permute.xlu0 %3295
  %vm3299 = vcmask 130048
  %3300 = vst.msk [vmem:[%s6] sm:$0xff] %vm3299, %v3294
  %3301 = vst.msk [vmem:[%s6 + $0x10] sm:$0xff] %vm3299, %v3296
  %3302 = vrot.lane.b32.xlu0 %v3281, 107
  %v3303 = vpop.permute.xlu0 %3302
  %3304 = vrot.lane.b32.xlu0 %v3286, 107
  %v3305 = vpop.permute.xlu0 %3304
  %vm3308 = vcmask 261248
  %3309 = vst.msk [vmem:[%s6] sm:$0xff] %vm3308, %v3303
  %3310 = vst.msk [vmem:[%s6 + $0x10] sm:$0xff] %vm3308, %v3305
  %3311 = vrot.lane.b32.xlu0 %v3281, 105
  %v3312 = vpop.permute.xlu0 %3311
  %3313 = vrot.lane.b32.xlu0 %v3286, 105
  %v3314 = vpop.permute.xlu0 %3313
  %vm3317 = vcmask 392448
  %3318 = vst.msk [vmem:[%s6] sm:$0xff] %vm3317, %v3312
  %3319 = vst.msk [vmem:[%s6 + $0x10] sm:$0xff] %vm3317, %v3314
  %3320 = vrot.lane.b32.xlu0 %v3281, 103
  %v3321 = vpop.permute.xlu0 %3320
  %3322 = vrot.lane.b32.xlu0 %v3286, 103
  %v3323 = vpop.permute.xlu0 %3322
  %vm3326 = vcmask 523648
  %3327 = vst.msk [vmem:[%s6] sm:$0xff] %vm3326, %v3321
  %3328 = vst.msk [vmem:[%s6 + $0x10] sm:$0xff] %vm3326, %v3323
  %3329 = vrot.lane.b32.xlu0 %v3281, 101
  %v3330 = vpop.permute.xlu0 %3329
  %3331 = vrot.lane.b32.xlu0 %v3286, 101
  %v3332 = vpop.permute.xlu0 %3331
  %vm3335 = vcmask 654848
  %3336 = vst.msk [vmem:[%s6] sm:$0xff] %vm3335, %v3330
  %3337 = vst.msk [vmem:[%s6 + $0x10] sm:$0xff] %vm3335, %v3332
  %3338 = vrot.lane.b32.xlu0 %v3281, 99
  %v3339 = vpop.permute.xlu0 %3338
  %3340 = vrot.lane.b32.xlu0 %v3286, 99
  %v3341 = vpop.permute.xlu0 %3340
  %vm3344 = vcmask 786048
  %3345 = vst.msk [vmem:[%s6] sm:$0xff] %vm3344, %v3339
  %3346 = vst.msk [vmem:[%s6 + $0x10] sm:$0xff] %vm3344, %v3341
  %3349 = vrot.lane.b32.xlu0 %v3281, 97
  %v3350 = vpop.permute.xlu0 %3349
  %3351 = vrot.lane.b32.xlu0 %v3282, 97
  %v3352 = vpop.permute.xlu0 %3351
  %3353 = vrot.lane.b32.xlu0 %v3286, 97
  %v3354 = vpop.permute.xlu0 %3353
  %3355 = vrot.lane.b32.xlu0 %v3287, 97
  %v3356 = vpop.permute.xlu0 %3355
  %vm3357 = vcmask 793600
  %v3358 = vsel %vm3357, %v3350, %v3352
  %v3359 = vsel %vm3357, %v3354, %v3356
  %vm3362 = vcmask 917248
  %3363 = vst.msk [vmem:[%s6] sm:$0xff] %vm3362, %v3358
  %3364 = vst.msk [vmem:[%s6 + $0x10] sm:$0xff] %vm3362, %v3359
  %3365 = vrot.lane.b32.xlu0 %v3282, 95
  %v3366 = vpop.permute.xlu0 %3365
  %3367 = vrot.lane.b32.xlu0 %v3287, 95
  %v3368 = vpop.permute.xlu0 %3367
  %vm3371 = vcmask 1048448
  %3372 = vst.msk [vmem:[%s6] sm:$0xff] %vm3371, %v3366
  %3373 = vst.msk [vmem:[%s6 + $0x10] sm:$0xff] %vm3371, %v3368
  %3374 = vrot.lane.b32.xlu0 %v3282, 93
  %v3375 = vpop.permute.xlu0 %3374
  %3376 = vrot.lane.b32.xlu0 %v3287, 93
  %v3377 = vpop.permute.xlu0 %3376
  %3380 = vst.msk [vmem:[%s6 + $0x8] sm:$0xff] %vm3299, %v3375
  %3381 = vst.msk [vmem:[%s6 + $0x18] sm:$0xff] %vm3299, %v3377
  %3382 = vrot.lane.b32.xlu0 %v3282, 91
  %v3383 = vpop.permute.xlu0 %3382
  %3384 = vrot.lane.b32.xlu0 %v3287, 91
  %v3385 = vpop.permute.xlu0 %3384
  %3388 = vst.msk [vmem:[%s6 + $0x8] sm:$0xff] %vm3308, %v3383
  %3389 = vst.msk [vmem:[%s6 + $0x18] sm:$0xff] %vm3308, %v3385
  %3390 = vrot.lane.b32.xlu0 %v3282, 89
  %v3391 = vpop.permute.xlu0 %3390
  %3392 = vrot.lane.b32.xlu0 %v3287, 89
  %v3393 = vpop.permute.xlu0 %3392
  %3396 = vst.msk [vmem:[%s6 + $0x8] sm:$0xff] %vm3317, %v3391
  %3397 = vst.msk [vmem:[%s6 + $0x18] sm:$0xff] %vm3317, %v3393
  %3398 = vrot.lane.b32.xlu0 %v3282, 87
  %v3399 = vpop.permute.xlu0 %3398
  %3400 = vrot.lane.b32.xlu0 %v3287, 87
  %v3401 = vpop.permute.xlu0 %3400
  %3404 = vst.msk [vmem:[%s6 + $0x8] sm:$0xff] %vm3326, %v3399
  %3405 = vst.msk [vmem:[%s6 + $0x18] sm:$0xff] %vm3326, %v3401
  %3406 = vrot.lane.b32.xlu0 %v3282, 85
  %v3407 = vpop.permute.xlu0 %3406
  %3408 = vrot.lane.b32.xlu0 %v3287, 85
  %v3409 = vpop.permute.xlu0 %3408
  %3412 = vst.msk [vmem:[%s6 + $0x8] sm:$0xff] %vm3335, %v3407
  %3413 = vst.msk [vmem:[%s6 + $0x18] sm:$0xff] %vm3335, %v3409
  %3416 = vrot.lane.b32.xlu0 %v3282, 83
  %v3417 = vpop.permute.xlu0 %3416
  %3418 = vrot.lane.b32.xlu0 %v3283, 83
  %v3419 = vpop.permute.xlu0 %3418
  %3420 = vrot.lane.b32.xlu0 %v3287, 83
  %v3421 = vpop.permute.xlu0 %3420
  %3422 = vrot.lane.b32.xlu0 %v3288, 83
  %v3423 = vpop.permute.xlu0 %3422
  %vm3424 = vcmask 678912
  %v3425 = vsel %vm3424, %v3417, %v3419
  %v3426 = vsel %vm3424, %v3421, %v3423
  %3429 = vst.msk [vmem:[%s6 + $0x8] sm:$0xff] %vm3344, %v3425
  %3430 = vst.msk [vmem:[%s6 + $0x18] sm:$0xff] %vm3344, %v3426
  %3431 = vrot.lane.b32.xlu0 %v3283, 81
  %v3432 = vpop.permute.xlu0 %3431
  %3433 = vrot.lane.b32.xlu0 %v3288, 81
  %v3434 = vpop.permute.xlu0 %3433
  %3437 = vst.msk [vmem:[%s6 + $0x8] sm:$0xff] %vm3362, %v3432
  %3438 = vst.msk [vmem:[%s6 + $0x18] sm:$0xff] %vm3362, %v3434
  %3439 = vrot.lane.b32.xlu0 %v3283, 79
  %v3440 = vpop.permute.xlu0 %3439
  %3441 = vrot.lane.b32.xlu0 %v3288, 79
  %v3442 = vpop.permute.xlu0 %3441
  %3445 = vst.msk [vmem:[%s6 + $0x8] sm:$0xff] %vm3371, %v3440
  %3446 = vst.msk [vmem:[%s6 + $0x18] sm:$0xff] %vm3371, %v3442
  %3447 = vrot.lane.b32.xlu0 %v3283, 41
  %v3448 = vpop.permute.xlu0 %3447
  %3449 = vrot.lane.b32.xlu0 %v3288, 41
  %v3450 = vpop.permute.xlu0 %3449
  %s3453 = scalar_lea.vmem %s6, 32
  %3454 = vst.msk [vmem:[%s3453] sm:$0xff] %vm3299, %v3448
  %3455 = vst.msk [vmem:[%s3453 + $0x10] sm:$0xff] %vm3299, %v3450
  %3456 = vrot.lane.b32.xlu0 %v3283, 39
  %v3457 = vpop.permute.xlu0 %3456
  %3458 = vrot.lane.b32.xlu0 %v3288, 39
  %v3459 = vpop.permute.xlu0 %3458
  %3462 = vst.msk [vmem:[%s3453] sm:$0xff] %vm3308, %v3457
  %3463 = vst.msk [vmem:[%s3453 + $0x10] sm:$0xff] %vm3308, %v3459
  %3466 = vrot.lane.b32.xlu0 %v3283, 37
  %v3467 = vpop.permute.xlu0 %3466
  %3468 = vrot.lane.b32.xlu0 %v3284, 37
  %v3469 = vpop.permute.xlu0 %3468
  %3470 = vrot.lane.b32.xlu0 %v3288, 37
  %v3471 = vpop.permute.xlu0 %3470
  %3472 = vrot.lane.b32.xlu0 %v3289, 37
  %v3473 = vpop.permute.xlu0 %3472
  %vm3474 = vcmask 302080
  %v3475 = vsel %vm3474, %v3467, %v3469
  %v3476 = vsel %vm3474, %v3471, %v3473
  %3479 = vst.msk [vmem:[%s3453] sm:$0xff] %vm3317, %v3475
  %3480 = vst.msk [vmem:[%s3453 + $0x10] sm:$0xff] %vm3317, %v3476
  %3481 = vrot.lane.b32.xlu0 %v3284, 35
  %v3482 = vpop.permute.xlu0 %3481
  %3483 = vrot.lane.b32.xlu0 %v3289, 35
  %v3484 = vpop.permute.xlu0 %3483
  %3487 = vst.msk [vmem:[%s3453] sm:$0xff] %vm3326, %v3482
  %3488 = vst.msk [vmem:[%s3453 + $0x10] sm:$0xff] %vm3326, %v3484
  %3489 = vrot.lane.b32.xlu0 %v3284, 33
  %v3490 = vpop.permute.xlu0 %3489
  %3491 = vrot.lane.b32.xlu0 %v3289, 33
  %v3492 = vpop.permute.xlu0 %3491
  %3495 = vst.msk [vmem:[%s3453] sm:$0xff] %vm3335, %v3490
  %3496 = vst.msk [vmem:[%s3453 + $0x10] sm:$0xff] %vm3335, %v3492
  %3497 = vrot.lane.b32.xlu0 %v3284, 31
  %v3498 = vpop.permute.xlu0 %3497
  %3499 = vrot.lane.b32.xlu0 %v3289, 31
  %v3500 = vpop.permute.xlu0 %3499
  %3503 = vst.msk [vmem:[%s3453] sm:$0xff] %vm3344, %v3498
  %3504 = vst.msk [vmem:[%s3453 + $0x10] sm:$0xff] %vm3344, %v3500
  %3505 = vrot.lane.b32.xlu0 %v3284, 29
  %v3506 = vpop.permute.xlu0 %3505
  %3507 = vrot.lane.b32.xlu0 %v3289, 29
  %v3508 = vpop.permute.xlu0 %3507
  %3511 = vst.msk [vmem:[%s3453] sm:$0xff] %vm3362, %v3506
  %3512 = vst.msk [vmem:[%s3453 + $0x10] sm:$0xff] %vm3362, %v3508
  %3513 = vrot.lane.b32.xlu0 %v3284, 27
  %v3514 = vpop.permute.xlu0 %3513
  %3515 = vrot.lane.b32.xlu0 %v3289, 27
  %v3516 = vpop.permute.xlu0 %3515
  %3519 = vst.msk [vmem:[%s3453] sm:$0xff] %vm3371, %v3514
  %3520 = vst.msk [vmem:[%s3453 + $0x10] sm:$0xff] %vm3371, %v3516
  %3521 = vrot.lane.b32.xlu0 %v3284, 25
  %v3522 = vpop.permute.xlu0 %3521
  %3523 = vrot.lane.b32.xlu0 %v3289, 25
  %v3524 = vpop.permute.xlu0 %3523
  %3527 = vst.msk [vmem:[%s3453 + $0x8] sm:$0xff] %vm3299, %v3522
  %3528 = vst.msk [vmem:[%s3453 + $0x18] sm:$0xff] %vm3299, %v3524
  %3531 = vrot.lane.b32.xlu0 %v3284, 23
  %v3532 = vpop.permute.xlu0 %3531
  %3533 = vrot.lane.b32.xlu0 %v3285, 23
  %v3534 = vpop.permute.xlu0 %3533
  %3535 = vrot.lane.b32.xlu0 %v3289, 23
  %v3536 = vpop.permute.xlu0 %3535
  %3537 = vrot.lane.b32.xlu0 %v3290, 23
  %v3538 = vpop.permute.xlu0 %3537
  %vm3539 = vcmask 187392
  %v3540 = vsel %vm3539, %v3532, %v3534
  %v3541 = vsel %vm3539, %v3536, %v3538
  %3544 = vst.msk [vmem:[%s3453 + $0x8] sm:$0xff] %vm3308, %v3540
  %3545 = vst.msk [vmem:[%s3453 + $0x18] sm:$0xff] %vm3308, %v3541
  %3546 = vrot.lane.b32.xlu0 %v3285, 21
  %v3547 = vpop.permute.xlu0 %3546
  %3548 = vrot.lane.b32.xlu0 %v3290, 21
  %v3549 = vpop.permute.xlu0 %3548
  %3552 = vst.msk [vmem:[%s3453 + $0x8] sm:$0xff] %vm3317, %v3547
  %3553 = vst.msk [vmem:[%s3453 + $0x18] sm:$0xff] %vm3317, %v3549
  %3554 = vrot.lane.b32.xlu0 %v3285, 19
  %v3555 = vpop.permute.xlu0 %3554
  %3556 = vrot.lane.b32.xlu0 %v3290, 19
  %v3557 = vpop.permute.xlu0 %3556
  %3560 = vst.msk [vmem:[%s3453 + $0x8] sm:$0xff] %vm3326, %v3555
  %3561 = vst.msk [vmem:[%s3453 + $0x18] sm:$0xff] %vm3326, %v3557
  %3562 = vrot.lane.b32.xlu0 %v3285, 17
  %v3563 = vpop.permute.xlu0 %3562
  %3564 = vrot.lane.b32.xlu0 %v3290, 17
  %v3565 = vpop.permute.xlu0 %3564
  %3568 = vst.msk [vmem:[%s3453 + $0x8] sm:$0xff] %vm3335, %v3563
  %3569 = vst.msk [vmem:[%s3453 + $0x18] sm:$0xff] %vm3335, %v3565
  %3570 = vrot.lane.b32.xlu0 %v3285, 15
  %v3571 = vpop.permute.xlu0 %3570
  %3572 = vrot.lane.b32.xlu0 %v3290, 15
  %v3573 = vpop.permute.xlu0 %3572
  %3576 = vst.msk [vmem:[%s3453 + $0x8] sm:$0xff] %vm3344, %v3571
  %3577 = vst.msk [vmem:[%s3453 + $0x18] sm:$0xff] %vm3344, %v3573
  %3578 = vrot.lane.b32.xlu0 %v3285, 13
  %v3579 = vpop.permute.xlu0 %3578
  %3580 = vrot.lane.b32.xlu0 %v3290, 13
  %v3581 = vpop.permute.xlu0 %3580
  %3584 = vst.msk [vmem:[%s3453 + $0x8] sm:$0xff] %vm3362, %v3579
  %3585 = vst.msk [vmem:[%s3453 + $0x18] sm:$0xff] %vm3362, %v3581
  %3586 = vrot.lane.b32.xlu0 %v3285, 11
  %v3587 = vpop.permute.xlu0 %3586
  %3588 = vrot.lane.b32.xlu0 %v3290, 11
  %v3589 = vpop.permute.xlu0 %3588
  %3592 = vst.msk [vmem:[%s3453 + $0x8] sm:$0xff] %vm3371, %v3587
  %3593 = vst.msk [vmem:[%s3453 + $0x18] sm:$0xff] %vm3371, %v3589
  // Predicated region
  $region26: #{_lambda_.1} parent=0 // pred_check
    _
  $region27: #{_lambda_.1} parent=0 // pred_check_branch
    %3595 = sbr.rel (0) target = $region29
  $region28: #{_lambda_.1} parent=0 // pred_region
    _
  $region29: #{_lambda_.1} parent=0 // pred_fallthru
    _
  // Predicated region
  $region30: #{_lambda_.1} parent=0 // pred_check
    _
  $region31: #{_lambda_.1} parent=0 // pred_check_branch
    %3597 = sbr.rel (0) target = $region33
  $region32: #{_lambda_.1} parent=0 // pred_region
    _
  $region33: #{_lambda_.1} parent=0 // pred_fallthru
    _

</llo_original>
